<compile_context>
chip_gen: v5e
topology: v5e:2x2
jax: 0.10.0
libtpu: 0.0.40
codegen_flags: <defaults>
</compile_context>

<pallas_src>
from functools import partial

import jax
import jax.numpy as jnp
import numpy as np
from jax import lax
from jax.experimental import pallas as pl
from jax.experimental.pallas import tpu as pltpu

# 2-D dot_general dimension numbers: contract the leading dim of both operands
# (A^T @ B), used for the Q.K^T scores with [dk, S] operands.
_TN = (((0,), (0,)), ((), ()))


def _mobile_mqa_kernel(x_ref, wqkv_ref, bqkv_ref, wo_ref, bo_ref, o_ref,
                       *, num_heads, dk, dv):
    """One grid step = one image.  Working layout is [channels, tokens]."""
    x = x_ref[0]                                                  # [C, S] f32

    # ---- fused Q/K/V projection: ONE stacked matmul per image (f32) ---------
    qkv = jnp.dot(wqkv_ref[...], x,
                  preferred_element_type=jnp.float32) + bqkv_ref[...]
    nq = num_heads * dk
    qt_all = qkv[:nq]                                             # [heads*dk, S]
    kt_bf = qkv[nq:nq + dk].astype(jnp.bfloat16)                  # [dk, S]
    # Transpose V once per image -> per-head P@V is a canonical [S,S]@[S,dv].
    v_sd_bf = qkv[nq + dk:].T.astype(jnp.bfloat16)                # [S, dv]

    # ---- per-head attention (fully unrolled; K/V shared by all heads) -------
    o_heads = []
    for h in range(num_heads):
        qt_h = qt_all[h * dk:(h + 1) * dk].astype(jnp.bfloat16)   # [dk, S]
        s = lax.dot_general(qt_h, kt_bf, _TN,
                            preferred_element_type=jnp.float32)   # [S, S] f32
        s = s - jnp.max(s, axis=-1, keepdims=True)
        p = jnp.exp(s)
        inv_l = pl.reciprocal(jnp.sum(p, axis=-1, keepdims=True), approx=True)
        o_h = jnp.dot(p.astype(jnp.bfloat16), v_sd_bf,
                      preferred_element_type=jnp.float32) * inv_l  # [S, dv] f32
        o_heads.append(o_h)

    o_all = jnp.concatenate(o_heads, axis=1)                      # [S, heads*dv]

    # ---- single output projection (contraction K = heads*dv) + residual -----
    y_sc = jnp.dot(o_all, wo_ref[...],
                   preferred_element_type=jnp.float32)            # [S, C]
    y_cs = y_sc.T                                                 # [C, S]
    o_ref[0] = (x + y_cs + bo_ref[...]).astype(o_ref.dtype)


def mobile_mqa(x_nchw, params, *, num_heads):
    """x_nchw: [N, C, H, W] -> [N, C, H, W] (fused Mobile-MQA block)."""
    N, C, H, W = x_nchw.shape
    S = H * W
    wq, bq = params["wq"], params["bq"]          # [C, heads*dk], [heads*dk]
    wk, bk = params["wk"], params["bk"]          # [C, dk],       [dk]
    wv, bv = params["wv"], params["bv"]          # [C, dv],       [dv]
    wo, bo = params["wo"], params["bo"]          # [heads*dv, C], [C]
    dk, dv = wk.shape[1], wv.shape[1]
    assert wq.shape[1] == num_heads * dk and wo.shape[0] == num_heads * dv
    assert S % 128 == 0 and C % 8 == 0 and dk % 8 == 0 and dv % 8 == 0, \
        "demo assumes lane/sublane-aligned shapes"

    # Host-side packing (free under jit): stacked [Q; K; V] projection weight
    # with the 1/sqrt(dk) attention scale folded into the Q rows and Q bias.
    q_scale = dk ** -0.5
    wqkv = jnp.concatenate([wq.T * q_scale, wk.T, wv.T], axis=0)   # [P, C]
    bqkv = jnp.concatenate([bq * q_scale, bk, bv]).reshape(-1, 1)  # [P, 1]
    bo_c = bo.reshape(C, 1)                                        # [C, 1]
    P = num_heads * dk + dk + dv
    Dv = num_heads * dv

    x3 = x_nchw.reshape(N, C, S)                                   # NCHW == [N,C,S]

    out = pl.pallas_call(
        partial(_mobile_mqa_kernel, num_heads=num_heads, dk=dk, dv=dv),
        out_shape=jax.ShapeDtypeStruct((N, C, S), x_nchw.dtype),
        grid=(N,),
        in_specs=[
            pl.BlockSpec((1, C, S), lambda n: (n, 0, 0)),   # x (also residual)
            pl.BlockSpec((P, C), lambda n: (0, 0)),         # stacked Wq|Wk|Wv
            pl.BlockSpec((P, 1), lambda n: (0, 0)),         # stacked bq|bk|bv
            pl.BlockSpec((Dv, C), lambda n: (0, 0)),        # Wo
            pl.BlockSpec((C, 1), lambda n: (0, 0)),         # bo
        ],
        out_specs=pl.BlockSpec((1, C, S), lambda n: (n, 0, 0)),
        compiler_params=pltpu.CompilerParams(
            dimension_semantics=("parallel",),
        ),
    )(x3, wqkv, bqkv, wo, bo_c)
    return out.reshape(N, C, H, W)


# ----------------------------- pure-JAX reference ---------------------------

def _ref_mobile_mqa(x_nchw, params, *, num_heads):
    N, C, H, W = x_nchw.shape
    S = H * W
    dk = params["wk"].shape[1]
    dv = params["wv"].shape[1]
    t = jnp.transpose(x_nchw.reshape(N, C, S), (0, 2, 1))          # [N, S, C]
    q = (t @ params["wq"] + params["bq"]).reshape(N, S, num_heads, dk)
    k = t @ params["wk"] + params["bk"]                            # [N, S, dk]
    v = t @ params["wv"] + params["bv"]                            # [N, S, dv]
    s = jnp.einsum("nshd,ntd->nhst", q, k) * (dk ** -0.5)
    p = jax.nn.softmax(s, axis=-1)
    o = jnp.einsum("nhst,ntd->nshd", p, v).reshape(N, S, num_heads * dv)
    y = o @ params["wo"] + params["bo"]
    out = t + y                                                    # residual
    return jnp.transpose(out, (0, 2, 1)).reshape(N, C, H, W)


# ---------------------------------- main -------------------------------------

if __name__ == "__main__":
    key = jax.random.PRNGKey(0)
    N, C, H, W = 2, 32, 16, 16
    num_heads, dk, dv = 4, 32, 32
    Dq, Dv = num_heads * dk, num_heads * dv

    ks = jax.random.split(key, 9)
    x = jax.random.normal(ks[0], (N, C, H, W), jnp.float32)

    # 1x1-conv weights with BN scale already folded in; biases are folded BN shifts.
    params = {
        "wq": 0.2 * jax.random.normal(ks[1], (C, Dq), jnp.float32),
        "bq": 0.1 * jax.random.normal(ks[2], (Dq,), jnp.float32),
        "wk": 0.2 * jax.random.normal(ks[3], (C, dk), jnp.float32),
        "bk": 0.1 * jax.random.normal(ks[4], (dk,), jnp.float32),
        "wv": 0.2 * jax.random.normal(ks[5], (C, dv), jnp.float32),
        "bv": 0.1 * jax.random.normal(ks[6], (dv,), jnp.float32),
        "wo": 0.2 * jax.random.normal(ks[7], (Dv, C), jnp.float32),
        "bo": 0.1 * jax.random.normal(ks[8], (C,), jnp.float32),
    }

    fn = jax.jit(partial(mobile_mqa, num_heads=num_heads))
    out = jax.block_until_ready(fn(x, params))

    ref = jax.block_until_ready(_ref_mobile_mqa(x, params, num_heads=num_heads))
    # bf16 MXU operands on the per-head dots -> 1e-2 tolerance (f32 elsewhere).
    np.testing.assert_allclose(np.asarray(out), np.asarray(ref), rtol=1e-2, atol=1e-2)
    assert out.shape == (N, C, H, W) and out.dtype == jnp.float32

    print("KERNEL_OK")
</pallas_src>

<mosaic_0001>
module attributes {stable_mosaic.version = 11 : i64} {
  func.func @_mobile_mqa_kernel(%arg0: i32, %arg1: memref<1x32x256xf32, #tpu.memory_space<vmem>>, %arg2: memref<192x32xf32, #tpu.memory_space<vmem>>, %arg3: memref<192x1xf32, #tpu.memory_space<vmem>>, %arg4: memref<128x32xf32, #tpu.memory_space<vmem>>, %arg5: memref<32x1xf32, #tpu.memory_space<vmem>>, %arg6: memref<1x32x256xf32, #tpu.memory_space<vmem>>) attributes {dimension_semantics = [#tpu.dimension_semantics<parallel>], iteration_bounds = array<i64: 2>, scalar_prefetch = 0 : i64, scratch_operands = 0 : i64, tpu.core_type = #tpu.core_type<tc>, window_params = [{transform_indices = @transform_0, window_bounds = array<i64: 1, 32, 256>}, {pipeline_mode = #tpu.pipeline_mode<synchronous>, transform_indices = @transform_1, window_bounds = array<i64: 192, 32>}, {pipeline_mode = #tpu.pipeline_mode<synchronous>, transform_indices = @transform_2, window_bounds = array<i64: 192, 1>}, {pipeline_mode = #tpu.pipeline_mode<synchronous>, transform_indices = @transform_3, window_bounds = array<i64: 128, 32>}, {pipeline_mode = #tpu.pipeline_mode<synchronous>, transform_indices = @transform_4, window_bounds = array<i64: 32, 1>}, {transform_indices = @transform_5, window_bounds = array<i64: 1, 32, 256>}]} {
    %c0 = arith.constant 0 : index
    %c0_0 = arith.constant 0 : index
    %c0_1 = arith.constant 0 : index
    %0 = vector.load %arg1[%c0, %c0_0, %c0_1] : memref<1x32x256xf32, #tpu.memory_space<vmem>>, vector<1x32x256xf32>
    %1 = vector.shape_cast %0 : vector<1x32x256xf32> to vector<32x256xf32>
    %c0_2 = arith.constant 0 : index
    %c0_3 = arith.constant 0 : index
    %2 = vector.load %arg2[%c0_2, %c0_3] : memref<192x32xf32, #tpu.memory_space<vmem>>, vector<192x32xf32>
    %cst = arith.constant dense<0.000000e+00> : vector<192x256xf32>
    %3 = tpu.matmul %2, %1, %cst {dimension_numbers = #tpu.dot_dimension_numbers<[1], [0], [0], [1], [0, 0, 1, 1], [], []>} : vector<192x32xf32>, vector<32x256xf32>, vector<192x256xf32> -> vector<192x256xf32>
    %c0_4 = arith.constant 0 : index
    %c0_5 = arith.constant 0 : index
    %4 = vector.load %arg3[%c0_4, %c0_5] : memref<192x1xf32, #tpu.memory_space<vmem>>, vector<192x1xf32>
    %5 = vector.broadcast %4 : vector<192x1xf32> to vector<192x256xf32>
    %6 = arith.addf %3, %5 : vector<192x256xf32>
    %7 = vector.extract_strided_slice %6 {offsets = [0, 0], sizes = [128, 256], strides = [1, 1]} : vector<192x256xf32> to vector<128x256xf32>
    %8 = vector.extract_strided_slice %6 {offsets = [128, 0], sizes = [32, 256], strides = [1, 1]} : vector<192x256xf32> to vector<32x256xf32>
    %9 = arith.truncf %8 : vector<32x256xf32> to vector<32x256xbf16>
    %10 = vector.extract_strided_slice %6 {offsets = [160, 0], sizes = [32, 256], strides = [1, 1]} : vector<192x256xf32> to vector<32x256xf32>
    %11 = tpu.transpose %10, [1, 0] : vector<32x256xf32> -> vector<256x32xf32>
    %12 = arith.truncf %11 : vector<256x32xf32> to vector<256x32xbf16>
    %13 = vector.extract_strided_slice %7 {offsets = [0, 0], sizes = [32, 256], strides = [1, 1]} : vector<128x256xf32> to vector<32x256xf32>
    %14 = arith.truncf %13 : vector<32x256xf32> to vector<32x256xbf16>
    %cst_6 = arith.constant dense<0.000000e+00> : vector<256x256xf32>
    %15 = tpu.matmul %14, %9, %cst_6 {dimension_numbers = #tpu.dot_dimension_numbers<[0], [0], [1], [1], [0, 1, 1, 1], [], []>} : vector<32x256xbf16>, vector<32x256xbf16>, vector<256x256xf32> -> vector<256x256xf32>
    %cst_7 = arith.constant dense<0xFF800000> : vector<256xf32>
    %16 = vector.multi_reduction <maximumf>, %15, %cst_7 [1] : vector<256x256xf32> to vector<256xf32>
    %17 = vector.shape_cast %16 : vector<256xf32> to vector<256x1xf32>
    %18 = vector.broadcast %17 : vector<256x1xf32> to vector<256x256xf32>
    %19 = arith.subf %15, %18 : vector<256x256xf32>
    %20 = math.exp %19 : vector<256x256xf32>
    %cst_8 = arith.constant dense<0.000000e+00> : vector<256xf32>
    %21 = vector.multi_reduction <add>, %20, %cst_8 [1] : vector<256x256xf32> to vector<256xf32>
    %22 = vector.shape_cast %21 : vector<256xf32> to vector<256x1xf32>
    %23 = tpu.reciprocal %22 {approx = true} : vector<256x1xf32> -> vector<256x1xf32>
    %24 = arith.truncf %20 : vector<256x256xf32> to vector<256x256xbf16>
    %cst_9 = arith.constant dense<0.000000e+00> : vector<256x32xf32>
    %25 = tpu.matmul %24, %12, %cst_9 {dimension_numbers = #tpu.dot_dimension_numbers<[1], [0], [0], [1], [0, 0, 1, 1], [], []>} : vector<256x256xbf16>, vector<256x32xbf16>, vector<256x32xf32> -> vector<256x32xf32>
    %26 = vector.broadcast %23 : vector<256x1xf32> to vector<256x32xf32>
    %27 = arith.mulf %25, %26 : vector<256x32xf32>
    %28 = vector.extract_strided_slice %7 {offsets = [32, 0], sizes = [32, 256], strides = [1, 1]} : vector<128x256xf32> to vector<32x256xf32>
    %29 = arith.truncf %28 : vector<32x256xf32> to vector<32x256xbf16>
    %cst_10 = arith.constant dense<0.000000e+00> : vector<256x256xf32>
    %30 = tpu.matmul %29, %9, %cst_10 {dimension_numbers = #tpu.dot_dimension_numbers<[0], [0], [1], [1], [0, 1, 1, 1], [], []>} : vector<32x256xbf16>, vector<32x256xbf16>, vector<256x256xf32> -> vector<256x256xf32>
    %cst_11 = arith.constant dense<0xFF800000> : vector<256xf32>
    %31 = vector.multi_reduction <maximumf>, %30, %cst_11 [1] : vector<256x256xf32> to vector<256xf32>
    %32 = vector.shape_cast %31 : vector<256xf32> to vector<256x1xf32>
    %33 = vector.broadcast %32 : vector<256x1xf32> to vector<256x256xf32>
    %34 = arith.subf %30, %33 : vector<256x256xf32>
    %35 = math.exp %34 : vector<256x256xf32>
    %cst_12 = arith.constant dense<0.000000e+00> : vector<256xf32>
    %36 = vector.multi_reduction <add>, %35, %cst_12 [1] : vector<256x256xf32> to vector<256xf32>
    %37 = vector.shape_cast %36 : vector<256xf32> to vector<256x1xf32>
    %38 = tpu.reciprocal %37 {approx = true} : vector<256x1xf32> -> vector<256x1xf32>
    %39 = arith.truncf %35 : vector<256x256xf32> to vector<256x256xbf16>
    %cst_13 = arith.constant dense<0.000000e+00> : vector<256x32xf32>
    %40 = tpu.matmul %39, %12, %cst_13 {dimension_numbers = #tpu.dot_dimension_numbers<[1], [0], [0], [1], [0, 0, 1, 1], [], []>} : vector<256x256xbf16>, vector<256x32xbf16>, vector<256x32xf32> -> vector<256x32xf32>
    %41 = vector.broadcast %38 : vector<256x1xf32> to vector<256x32xf32>
    %42 = arith.mulf %40, %41 : vector<256x32xf32>
    %43 = vector.extract_strided_slice %7 {offsets = [64, 0], sizes = [32, 256], strides = [1, 1]} : vector<128x256xf32> to vector<32x256xf32>
    %44 = arith.truncf %43 : vector<32x256xf32> to vector<32x256xbf16>
    %cst_14 = arith.constant dense<0.000000e+00> : vector<256x256xf32>
    %45 = tpu.matmul %44, %9, %cst_14 {dimension_numbers = #tpu.dot_dimension_numbers<[0], [0], [1], [1], [0, 1, 1, 1], [], []>} : vector<32x256xbf16>, vector<32x256xbf16>, vector<256x256xf32> -> vector<256x256xf32>
    %cst_15 = arith.constant dense<0xFF800000> : vector<256xf32>
    %46 = vector.multi_reduction <maximumf>, %45, %cst_15 [1] : vector<256x256xf32> to vector<256xf32>
    %47 = vector.shape_cast %46 : vector<256xf32> to vector<256x1xf32>
    %48 = vector.broadcast %47 : vector<256x1xf32> to vector<256x256xf32>
    %49 = arith.subf %45, %48 : vector<256x256xf32>
    %50 = math.exp %49 : vector<256x256xf32>
    %cst_16 = arith.constant dense<0.000000e+00> : vector<256xf32>
    %51 = vector.multi_reduction <add>, %50, %cst_16 [1] : vector<256x256xf32> to vector<256xf32>
    %52 = vector.shape_cast %51 : vector<256xf32> to vector<256x1xf32>
    %53 = tpu.reciprocal %52 {approx = true} : vector<256x1xf32> -> vector<256x1xf32>
    %54 = arith.truncf %50 : vector<256x256xf32> to vector<256x256xbf16>
    %cst_17 = arith.constant dense<0.000000e+00> : vector<256x32xf32>
    %55 = tpu.matmul %54, %12, %cst_17 {dimension_numbers = #tpu.dot_dimension_numbers<[1], [0], [0], [1], [0, 0, 1, 1], [], []>} : vector<256x256xbf16>, vector<256x32xbf16>, vector<256x32xf32> -> vector<256x32xf32>
    %56 = vector.broadcast %53 : vector<256x1xf32> to vector<256x32xf32>
    %57 = arith.mulf %55, %56 : vector<256x32xf32>
    %58 = vector.extract_strided_slice %7 {offsets = [96, 0], sizes = [32, 256], strides = [1, 1]} : vector<128x256xf32> to vector<32x256xf32>
    %59 = arith.truncf %58 : vector<32x256xf32> to vector<32x256xbf16>
    %cst_18 = arith.constant dense<0.000000e+00> : vector<256x256xf32>
    %60 = tpu.matmul %59, %9, %cst_18 {dimension_numbers = #tpu.dot_dimension_numbers<[0], [0], [1], [1], [0, 1, 1, 1], [], []>} : vector<32x256xbf16>, vector<32x256xbf16>, vector<256x256xf32> -> vector<256x256xf32>
    %cst_19 = arith.constant dense<0xFF800000> : vector<256xf32>
    %61 = vector.multi_reduction <maximumf>, %60, %cst_19 [1] : vector<256x256xf32> to vector<256xf32>
    %62 = vector.shape_cast %61 : vector<256xf32> to vector<256x1xf32>
    %63 = vector.broadcast %62 : vector<256x1xf32> to vector<256x256xf32>
    %64 = arith.subf %60, %63 : vector<256x256xf32>
    %65 = math.exp %64 : vector<256x256xf32>
    %cst_20 = arith.constant dense<0.000000e+00> : vector<256xf32>
    %66 = vector.multi_reduction <add>, %65, %cst_20 [1] : vector<256x256xf32> to vector<256xf32>
    %67 = vector.shape_cast %66 : vector<256xf32> to vector<256x1xf32>
    %68 = tpu.reciprocal %67 {approx = true} : vector<256x1xf32> -> vector<256x1xf32>
    %69 = arith.truncf %65 : vector<256x256xf32> to vector<256x256xbf16>
    %cst_21 = arith.constant dense<0.000000e+00> : vector<256x32xf32>
    %70 = tpu.matmul %69, %12, %cst_21 {dimension_numbers = #tpu.dot_dimension_numbers<[1], [0], [0], [1], [0, 0, 1, 1], [], []>} : vector<256x256xbf16>, vector<256x32xbf16>, vector<256x32xf32> -> vector<256x32xf32>
    %71 = vector.broadcast %68 : vector<256x1xf32> to vector<256x32xf32>
    %72 = arith.mulf %70, %71 : vector<256x32xf32>
    %73 = tpu.concatenate %27, %42, %57, %72 in 1 : vector<256x32xf32>, vector<256x32xf32>, vector<256x32xf32>, vector<256x32xf32> -> vector<256x128xf32>
    %c0_22 = arith.constant 0 : index
    %c0_23 = arith.constant 0 : index
    %74 = vector.load %arg4[%c0_22, %c0_23] : memref<128x32xf32, #tpu.memory_space<vmem>>, vector<128x32xf32>
    %cst_24 = arith.constant dense<0.000000e+00> : vector<256x32xf32>
    %75 = tpu.matmul %73, %74, %cst_24 {dimension_numbers = #tpu.dot_dimension_numbers<[1], [0], [0], [1], [0, 0, 1, 1], [], []>} : vector<256x128xf32>, vector<128x32xf32>, vector<256x32xf32> -> vector<256x32xf32>
    %76 = tpu.transpose %75, [1, 0] : vector<256x32xf32> -> vector<32x256xf32>
    %77 = arith.addf %1, %76 : vector<32x256xf32>
    %c0_25 = arith.constant 0 : index
    %c0_26 = arith.constant 0 : index
    %78 = vector.load %arg5[%c0_25, %c0_26] : memref<32x1xf32, #tpu.memory_space<vmem>>, vector<32x1xf32>
    %79 = vector.broadcast %78 : vector<32x1xf32> to vector<32x256xf32>
    %80 = arith.addf %77, %79 : vector<32x256xf32>
    %c0_27 = arith.constant 0 : index
    %c0_28 = arith.constant 0 : index
    %c0_29 = arith.constant 0 : index
    %81 = vector.load %arg6[%c0_27, %c0_28, %c0_29] : memref<1x32x256xf32, #tpu.memory_space<vmem>>, vector<1x32x256xf32>
    %82 = vector.shape_cast %81 : vector<1x32x256xf32> to vector<32x256xf32>
    %83 = vector.shape_cast %80 : vector<32x256xf32> to vector<1x32x256xf32>
    tpu.vector_store %arg6[%c0_27, %c0_28, %c0_29], %83 {strides = array<i32>} : memref<1x32x256xf32, #tpu.memory_space<vmem>>, vector<1x32x256xf32>,
    return
  }
  func.func @transform_0(%arg0: i32) -> (i32, i32, i32) {
    %c0_i32 = arith.constant 0 : i32
    %c0_i32_0 = arith.constant 0 : i32
    %c0_i32_1 = arith.constant 0 : i32
    return %arg0, %c0_i32, %c0_i32_0 : i32, i32, i32
  }
  func.func @transform_1(%arg0: i32) -> (i32, i32) {
    %c0_i32 = arith.constant 0 : i32
    %c0_i32_0 = arith.constant 0 : i32
    %c0_i32_1 = arith.constant 0 : i32
    return %c0_i32, %c0_i32_0 : i32, i32
  }
  func.func @transform_2(%arg0: i32) -> (i32, i32) {
    %c0_i32 = arith.constant 0 : i32
    %c0_i32_0 = arith.constant 0 : i32
    %c0_i32_1 = arith.constant 0 : i32
    return %c0_i32, %c0_i32_0 : i32, i32
  }
  func.func @transform_3(%arg0: i32) -> (i32, i32) {
    %c0_i32 = arith.constant 0 : i32
    %c0_i32_0 = arith.constant 0 : i32
    %c0_i32_1 = arith.constant 0 : i32
    return %c0_i32, %c0_i32_0 : i32, i32
  }
  func.func @transform_4(%arg0: i32) -> (i32, i32) {
    %c0_i32 = arith.constant 0 : i32
    %c0_i32_0 = arith.constant 0 : i32
    %c0_i32_1 = arith.constant 0 : i32
    return %c0_i32, %c0_i32_0 : i32, i32
  }
  func.func @transform_5(%arg0: i32) -> (i32, i32, i32) {
    %c0_i32 = arith.constant 0 : i32
    %c0_i32_0 = arith.constant 0 : i32
    %c0_i32_1 = arith.constant 0 : i32
    return %arg0, %c0_i32, %c0_i32_0 : i32, i32, i32
  }
}

</mosaic_0001>

<llo_original>
// kernel: mobile_mqa.1
$region0: #{mobile_mqa.1}
  #allocation0 [shape = 'u32[]', space=smem, size = 0x4, offset = 0x4, fixed_abs, tag = 'smem constant byte address 0x4 - core index']
  #allocation1 [shape = 'u32[72,128]{1,0:T(1,128)}', space=vmem, size = 0x9000, scoped, tag = 'internal scratch']
  %s0 = inlined_call_operand.vmem [shape: f32[2,32,256], index: 0, kind: input, shape index: {}]
  %s1 = inlined_call_operand.vmem [shape: f32[192,32], index: 1, kind: input, shape index: {}]
  %s2 = inlined_call_operand.vmem [shape: f32[192,1], index: 2, kind: input, shape index: {}]
  %s3 = inlined_call_operand.vmem [shape: f32[128,32], index: 3, kind: input, shape index: {}]
  %s4 = inlined_call_operand.vmem [shape: f32[32,1], index: 4, kind: input, shape index: {}]
  %s5 = inlined_call_operand.vmem [shape: f32[2,32,256], index: 5, kind: output, shape index: {}]
  %s6 = sld [smem:[#allocation0]]
  $region53: #{mobile_mqa.1} parent=0
    _
  %s8 = ssub.s32 1, %s6
  %s9 = scalar_select 0, %s8, %s6
  loop: start=0, step=1, limit=4
  $region2: #{mobile_mqa.1} parent=0 // loop_pre_header
    _
  $region3: #{mobile_mqa.1} parent=0 // loop_header
    %s11 = sphi 0, %s15
    %p12 = scmp.ge.s32.totalorder %s11, 4
    %s21 = sphi 0, %s23
    %s24 = sphi 0, %s21
    %s25 = sphi 0, %s24
    %s41 = sphi 0, %s25
    %s45 = sphi 0, %s45
    %s47 = sphi 0, %s45
    %s48 = sphi 0, %s47
    %s62 = sphi 0, %s48
    %s66 = sphi 0, %s66
    %s68 = sphi 0, %s66
    %s69 = sphi 0, %s68
    %s83 = sphi 0, %s69
    %s87 = sphi 0, %s87
    %s89 = sphi 0, %s87
    %s90 = sphi 0, %s89
    %s104 = sphi 0, %s90
    %s108 = sphi 0, %s108
    %s110 = sphi 0, %s108
    %s111 = sphi 0, %s110
    %s125 = sphi 0, %s111
    %s131 = sphi 0, %s133
    %s134 = sphi 0, %s131
    %s135 = sphi 0, %s134
    %s151 = sphi 0, %s135
  $region4: #{mobile_mqa.1} parent=0 // loop_header_branch
    %14 = sbr.rel (%p12) target = $region8
  $region5: #{mobile_mqa.1} parent=0 // loop_body
    %s16 = ssub.s32 %s11, 1
    %s17 = ssub.s32 %s11, 2
    %s18 = sadd.s32 %s11, 1
    %s19 = ssub.s32 %s11, %s18
    %p20 = scmp.eq.s32.totalorder %s19, 0
    %s22 = sadd.s32 %s21, 1
    %s23 = scalar_select %p20, %s21, %s22
    %p26 = pneg %p20
    %p27 = scmp.eq.s32.totalorder %s11, 1
    %p28 = por %p26, %p27
    %p29 = scmp.ne.s32.totalorder %s21, %s24
    %p30 = scmp.eq.s32.totalorder %s11, 0
    %p31 = por %p29, %p30
    %p32 = scmp.ne.s32.totalorder %s21, %s24
    %p33 = scmp.eq.s32.totalorder %s16, 1
    %p34 = por %p32, %p33
    %p35 = scmp.ne.s32.totalorder %s24, %s25
    %p36 = scmp.eq.s32.totalorder %s16, 0
    %p37 = por %p35, %p36
    %p38 = scmp.ne.s32.totalorder %s24, %s25
    %p39 = scmp.eq.s32.totalorder %s17, 1
    %p40 = por %p38, %p39
    %p42 = scmp.ne.s32.totalorder %s25, %s41
    %p43 = scmp.eq.s32.totalorder %s17, 0
    %p44 = por %p42, %p43
    %s46 = sadd.s32 %s45, 1
    %p49 = scmp.eq.s32.totalorder %s11, 1
    %p50 = scmp.ne.s32.totalorder %s45, %s47
    %p51 = scmp.eq.s32.totalorder %s11, 0
    %p52 = por %p50, %p51
    %p53 = scmp.ne.s32.totalorder %s45, %s47
    %p54 = scmp.eq.s32.totalorder %s16, 1
    %p55 = por %p53, %p54
    %p56 = scmp.ne.s32.totalorder %s47, %s48
    %p57 = scmp.eq.s32.totalorder %s16, 0
    %p58 = por %p56, %p57
    %p59 = scmp.ne.s32.totalorder %s47, %s48
    %p60 = scmp.eq.s32.totalorder %s17, 1
    %p61 = por %p59, %p60
    %p63 = scmp.ne.s32.totalorder %s48, %s62
    %p64 = scmp.eq.s32.totalorder %s17, 0
    %p65 = por %p63, %p64
    %s67 = sadd.s32 %s66, 1
    %p70 = scmp.eq.s32.totalorder %s11, 1
    %p71 = scmp.ne.s32.totalorder %s66, %s68
    %p72 = scmp.eq.s32.totalorder %s11, 0
    %p73 = por %p71, %p72
    %p74 = scmp.ne.s32.totalorder %s66, %s68
    %p75 = scmp.eq.s32.totalorder %s16, 1
    %p76 = por %p74, %p75
    %p77 = scmp.ne.s32.totalorder %s68, %s69
    %p78 = scmp.eq.s32.totalorder %s16, 0
    %p79 = por %p77, %p78
    %p80 = scmp.ne.s32.totalorder %s68, %s69
    %p81 = scmp.eq.s32.totalorder %s17, 1
    %p82 = por %p80, %p81
    %p84 = scmp.ne.s32.totalorder %s69, %s83
    %p85 = scmp.eq.s32.totalorder %s17, 0
    %p86 = por %p84, %p85
    %s88 = sadd.s32 %s87, 1
    %p91 = scmp.eq.s32.totalorder %s11, 1
    %p92 = scmp.ne.s32.totalorder %s87, %s89
    %p93 = scmp.eq.s32.totalorder %s11, 0
    %p94 = por %p92, %p93
    %p95 = scmp.ne.s32.totalorder %s87, %s89
    %p96 = scmp.eq.s32.totalorder %s16, 1
    %p97 = por %p95, %p96
    %p98 = scmp.ne.s32.totalorder %s89, %s90
    %p99 = scmp.eq.s32.totalorder %s16, 0
    %p100 = por %p98, %p99
    %p101 = scmp.ne.s32.totalorder %s89, %s90
    %p102 = scmp.eq.s32.totalorder %s17, 1
    %p103 = por %p101, %p102
    %p105 = scmp.ne.s32.totalorder %s90, %s104
    %p106 = scmp.eq.s32.totalorder %s17, 0
    %p107 = por %p105, %p106
    %s109 = sadd.s32 %s108, 1
    %p112 = scmp.eq.s32.totalorder %s11, 1
    %p113 = scmp.ne.s32.totalorder %s108, %s110
    %p114 = scmp.eq.s32.totalorder %s11, 0
    %p115 = por %p113, %p114
    %p116 = scmp.ne.s32.totalorder %s108, %s110
    %p117 = scmp.eq.s32.totalorder %s16, 1
    %p118 = por %p116, %p117
    %p119 = scmp.ne.s32.totalorder %s110, %s111
    %p120 = scmp.eq.s32.totalorder %s16, 0
    %p121 = por %p119, %p120
    %p122 = scmp.ne.s32.totalorder %s110, %s111
    %p123 = scmp.eq.s32.totalorder %s17, 1
    %p124 = por %p122, %p123
    %p126 = scmp.ne.s32.totalorder %s111, %s125
    %p127 = scmp.eq.s32.totalorder %s17, 0
    %p128 = por %p126, %p127
    %s129 = ssub.s32 %s11, %s18
    %p130 = scmp.eq.s32.totalorder %s129, 0
    %s132 = sadd.s32 %s131, 1
    %s133 = scalar_select %p130, %s131, %s132
    %p136 = pneg %p130
    %p137 = scmp.eq.s32.totalorder %s11, 1
    %p138 = por %p136, %p137
    %p139 = scmp.ne.s32.totalorder %s131, %s134
    %p140 = scmp.eq.s32.totalorder %s11, 0
    %p141 = por %p139, %p140
    %p142 = scmp.ne.s32.totalorder %s131, %s134
    %p143 = scmp.eq.s32.totalorder %s16, 1
    %p144 = por %p142, %p143
    %p145 = scmp.ne.s32.totalorder %s134, %s135
    %p146 = scmp.eq.s32.totalorder %s16, 0
    %p147 = por %p145, %p146
    %p148 = scmp.ne.s32.totalorder %s134, %s135
    %p149 = scmp.eq.s32.totalorder %s17, 1
    %p150 = por %p148, %p149
    %p152 = scmp.ne.s32.totalorder %s135, %s151
    %p153 = scmp.eq.s32.totalorder %s17, 0
    %p154 = por %p152, %p153
    %p155 = scmp.le.s32.totalorder 1, %s11
    %p156 = scmp.lt.s32.totalorder %s11, 3
    %p157 = pnand %p155, %p156
    %p158 = pneg %p157
    // Predicated region
    $region9: #{mobile_mqa.1} parent=5 // pred_check
      _
    $region10: #{mobile_mqa.1} parent=5 // pred_check_branch
      %160 = sbr.rel (%p157) target = $region12
    $region11: #{mobile_mqa.1} parent=5 // pred_region
      %s161 = ssub.s32 %s11, 1
      // Predicated region
      $region13: #{mobile_mqa.1} parent=11 // pred_check
        %p162 = pneg %p58
      $region14: #{mobile_mqa.1} parent=11 // pred_check_branch
        %164 = sbr.rel (%p162) target = $region16
      $region15: #{mobile_mqa.1} parent=11 // pred_region
        _
      $region16: #{mobile_mqa.1} parent=11 // pred_fallthru
        _
      // Predicated region
      $region17: #{mobile_mqa.1} parent=11 // pred_check
        %p165 = pneg %p79
      $region18: #{mobile_mqa.1} parent=11 // pred_check_branch
        %167 = sbr.rel (%p165) target = $region20
      $region19: #{mobile_mqa.1} parent=11 // pred_region
        _
      $region20: #{mobile_mqa.1} parent=11 // pred_fallthru
        _
      // Predicated region
      $region21: #{mobile_mqa.1} parent=11 // pred_check
        %p168 = pneg %p100
      $region22: #{mobile_mqa.1} parent=11 // pred_check_branch
        %170 = sbr.rel (%p168) target = $region24
      $region23: #{mobile_mqa.1} parent=11 // pred_region
        _
      $region24: #{mobile_mqa.1} parent=11 // pred_fallthru
        _
      // Predicated region
      $region25: #{mobile_mqa.1} parent=11 // pred_check
        %p171 = pneg %p121
      $region26: #{mobile_mqa.1} parent=11 // pred_check_branch
        %173 = sbr.rel (%p171) target = $region28
      $region27: #{mobile_mqa.1} parent=11 // pred_region
        _
      $region28: #{mobile_mqa.1} parent=11 // pred_fallthru
        _
    $region12: #{mobile_mqa.1} parent=5 // pred_fallthru
      _
    %p174 = scmp.lt.s32.totalorder %s11, 2
    // Predicated region
    $region29: #{mobile_mqa.1} parent=5 // pred_check
      %p175 = pneg %p174
    $region30: #{mobile_mqa.1} parent=5 // pred_check_branch
      %177 = sbr.rel (%p175) target = $region32
    $region31: #{mobile_mqa.1} parent=5 // pred_region
      // Predicated region
      $region33: #{mobile_mqa.1} parent=31 // pred_check
        %p178 = pneg %p31
      $region34: #{mobile_mqa.1} parent=31 // pred_check_branch
        %180 = sbr.rel (%p178) target = $region36
      $region35: #{mobile_mqa.1} parent=31 // pred_region
        %p181 = scmp.lt.s32.totalorder %s11, 1
        %s182 = scalar_select %p181, %s11, 1
        %s183 = smul.addr %s182, 8
        %s184 = smul.addr %s183, 8
        %s185 = scalar_lea.vmem %s0, %s184
      $region36: #{mobile_mqa.1} parent=31 // pred_fallthru
        _
    $region32: #{mobile_mqa.1} parent=5 // pred_fallthru
      _
    %p186 = scmp.le.s32.totalorder 1, %s11
    %p187 = scmp.lt.s32.totalorder %s11, 3
    %p188 = pnand %p186, %p187
    %p189 = pneg %p188
    // Predicated region
    $region37: #{mobile_mqa.1} parent=5 // pred_check
      _
    $region38: #{mobile_mqa.1} parent=5 // pred_check_branch
      %191 = sbr.rel (%p188) target = $region40
    $region39: #{mobile_mqa.1} parent=5 // pred_region
      %s192 = ssub.s32 %s11, 1
      %p193 = scmp.lt.s32.totalorder %s16, 1
      %s194 = scalar_select %p193, %s16, 1
      %s195 = smul.addr %s194, 8
      %s196 = smul.addr %s195, 8
      %s197 = scalar_lea.vmem %s0, %s196
      %p198 = pneg %p37
      %p199 = pneg %p34
      %p200 = pneg %p58
      %p201 = pneg %p55
      %p202 = pneg %p79
      %p203 = pneg %p76
      %p204 = pneg %p100
      %p205 = pneg %p97
      %p206 = pneg %p121
      %p207 = pneg %p118
      %p208 = pneg %p147
      %p209 = pneg %p144
      %p210 = scmp.lt.s32.totalorder %s16, 1
      %s211 = scalar_select %p210, %s16, 1
      %s212 = smul.addr %s211, 8
      %s213 = smul.addr %s212, 8
      %s214 = scalar_lea.vmem %s5, %s213
      %p215 = scmp.lt.s32.totalorder %s16, 1
      %s216 = scalar_select %p215, %s16, 1
      %s217 = smul.addr %s216, 8
      %s218 = smul.addr %s217, 8
      %s219 = scalar_lea.vmem %s0, %s218
      %p220 = scmp.lt.s32.totalorder %s16, 1
      %s221 = scalar_select %p220, %s16, 1
      %s222 = smul.addr %s221, 8
      %s223 = smul.addr %s222, 8
      %s224 = scalar_lea.vmem %s5, %s223
      %v226 = vld [vmem:[%s219] sm:$0xff]
      %v227 = vld [vmem:[%s219 + $0x8] sm:$0xff]
      %v228 = vld [vmem:[%s219 + $0x10] sm:$0xff]
      %v229 = vld [vmem:[%s219 + $0x18] sm:$0xff]
      %v230 = vld [vmem:[%s219 + $0x20] sm:$0xff]
      %v231 = vld [vmem:[%s219 + $0x28] sm:$0xff]
      %v232 = vld [vmem:[%s219 + $0x30] sm:$0xff]
      %v233 = vld [vmem:[%s219 + $0x38] sm:$0xff]
      %v234 = vld [vmem:[%s1] sm:$0xff]
      %v235 = vld [vmem:[%s1 + $0x8] sm:$0xff]
      %v236 = vld [vmem:[%s1 + $0x10] sm:$0xff]
      %v237 = vld [vmem:[%s1 + $0x18] sm:$0xff]
      %v238 = vld [vmem:[%s1 + $0x20] sm:$0xff]
      %v239 = vld [vmem:[%s1 + $0x28] sm:$0xff]
      %v240 = vld [vmem:[%s1 + $0x30] sm:$0xff]
      %v241 = vld [vmem:[%s1 + $0x38] sm:$0xff]
      %v242 = vld [vmem:[%s1 + $0x40] sm:$0xff]
      %v243 = vld [vmem:[%s1 + $0x48] sm:$0xff]
      %v244 = vld [vmem:[%s1 + $0x50] sm:$0xff]
      %v245 = vld [vmem:[%s1 + $0x58] sm:$0xff]
      %v246 = vld [vmem:[%s1 + $0x60] sm:$0xff]
      %v247 = vld [vmem:[%s1 + $0x68] sm:$0xff]
      %v248 = vld [vmem:[%s1 + $0x70] sm:$0xff]
      %v249 = vld [vmem:[%s1 + $0x78] sm:$0xff]
      %v250 = vld [vmem:[%s1 + $0x80] sm:$0xff]
      %v251 = vld [vmem:[%s1 + $0x88] sm:$0xff]
      %v252 = vld [vmem:[%s1 + $0x90] sm:$0xff]
      %v253 = vld [vmem:[%s1 + $0x98] sm:$0xff]
      %v254 = vld [vmem:[%s1 + $0xa0] sm:$0xff]
      %v255 = vld [vmem:[%s1 + $0xa8] sm:$0xff]
      %v256 = vld [vmem:[%s1 + $0xb0] sm:$0xff]
      %v257 = vld [vmem:[%s1 + $0xb8] sm:$0xff]
      %v258 = vld [vmem:[%s2] sm:$0xff]
      %v259 = vld [vmem:[%s2 + $0x8] sm:$0xff]
      %v260 = vld [vmem:[%s2 + $0x10] sm:$0xff]
      %v261 = vld [vmem:[%s2 + $0x18] sm:$0xff]
      %v262 = vld [vmem:[%s2 + $0x20] sm:$0xff]
      %v263 = vld [vmem:[%s2 + $0x28] sm:$0xff]
      %v264 = vld [vmem:[%s2 + $0x30] sm:$0xff]
      %v265 = vld [vmem:[%s2 + $0x38] sm:$0xff]
      %v266 = vld [vmem:[%s2 + $0x40] sm:$0xff]
      %v267 = vld [vmem:[%s2 + $0x48] sm:$0xff]
      %v268 = vld [vmem:[%s2 + $0x50] sm:$0xff]
      %v269 = vld [vmem:[%s2 + $0x58] sm:$0xff]
      %v270 = vld [vmem:[%s2 + $0x60] sm:$0xff]
      %v271 = vld [vmem:[%s2 + $0x68] sm:$0xff]
      %v272 = vld [vmem:[%s2 + $0x70] sm:$0xff]
      %v273 = vld [vmem:[%s2 + $0x78] sm:$0xff]
      %v274 = vld [vmem:[%s2 + $0x80] sm:$0xff]
      %v275 = vld [vmem:[%s2 + $0x88] sm:$0xff]
      %v276 = vld [vmem:[%s2 + $0x90] sm:$0xff]
      %v277 = vld [vmem:[%s2 + $0x98] sm:$0xff]
      %v278 = vld [vmem:[%s2 + $0xa0] sm:$0xff]
      %v279 = vld [vmem:[%s2 + $0xa8] sm:$0xff]
      %v280 = vld [vmem:[%s2 + $0xb0] sm:$0xff]
      %v281 = vld [vmem:[%s2 + $0xb8] sm:$0xff]
      %283 = vset.pattern.permute.xlu0 0
      %284 = vperm.xlu0 %283, %v258
      %v285 = vpop.permute.xlu0 %284
      %288 = vset.pattern.permute.xlu0 0
      %289 = vperm.xlu0 %288, %v259
      %v290 = vpop.permute.xlu0 %289
      %293 = vset.pattern.permute.xlu0 0
      %294 = vperm.xlu0 %293, %v260
      %v295 = vpop.permute.xlu0 %294
      %298 = vset.pattern.permute.xlu0 0
      %299 = vperm.xlu0 %298, %v261
      %v300 = vpop.permute.xlu0 %299
      %303 = vset.pattern.permute.xlu0 0
      %304 = vperm.xlu0 %303, %v262
      %v305 = vpop.permute.xlu0 %304
      %308 = vset.pattern.permute.xlu0 0
      %309 = vperm.xlu0 %308, %v263
      %v310 = vpop.permute.xlu0 %309
      %313 = vset.pattern.permute.xlu0 0
      %314 = vperm.xlu0 %313, %v264
      %v315 = vpop.permute.xlu0 %314
      %318 = vset.pattern.permute.xlu0 0
      %319 = vperm.xlu0 %318, %v265
      %v320 = vpop.permute.xlu0 %319
      %323 = vset.pattern.permute.xlu0 0
      %324 = vperm.xlu0 %323, %v266
      %v325 = vpop.permute.xlu0 %324
      %328 = vset.pattern.permute.xlu0 0
      %329 = vperm.xlu0 %328, %v267
      %v330 = vpop.permute.xlu0 %329
      %333 = vset.pattern.permute.xlu0 0
      %334 = vperm.xlu0 %333, %v268
      %v335 = vpop.permute.xlu0 %334
      %338 = vset.pattern.permute.xlu0 0
      %339 = vperm.xlu0 %338, %v269
      %v340 = vpop.permute.xlu0 %339
      %343 = vset.pattern.permute.xlu0 0
      %344 = vperm.xlu0 %343, %v270
      %v345 = vpop.permute.xlu0 %344
      %348 = vset.pattern.permute.xlu0 0
      %349 = vperm.xlu0 %348, %v271
      %v350 = vpop.permute.xlu0 %349
      %353 = vset.pattern.permute.xlu0 0
      %354 = vperm.xlu0 %353, %v272
      %v355 = vpop.permute.xlu0 %354
      %358 = vset.pattern.permute.xlu0 0
      %359 = vperm.xlu0 %358, %v273
      %v360 = vpop.permute.xlu0 %359
      %363 = vset.pattern.permute.xlu0 0
      %364 = vperm.xlu0 %363, %v274
      %v365 = vpop.permute.xlu0 %364
      %368 = vset.pattern.permute.xlu0 0
      %369 = vperm.xlu0 %368, %v275
      %v370 = vpop.permute.xlu0 %369
      %373 = vset.pattern.permute.xlu0 0
      %374 = vperm.xlu0 %373, %v276
      %v375 = vpop.permute.xlu0 %374
      %378 = vset.pattern.permute.xlu0 0
      %379 = vperm.xlu0 %378, %v277
      %v380 = vpop.permute.xlu0 %379
      %383 = vset.pattern.permute.xlu0 0
      %384 = vperm.xlu0 %383, %v278
      %v385 = vpop.permute.xlu0 %384
      %388 = vset.pattern.permute.xlu0 0
      %389 = vperm.xlu0 %388, %v279
      %v390 = vpop.permute.xlu0 %389
      %393 = vset.pattern.permute.xlu0 0
      %394 = vperm.xlu0 %393, %v280
      %v395 = vpop.permute.xlu0 %394
      %398 = vset.pattern.permute.xlu0 0
      %399 = vperm.xlu0 %398, %v281
      %v400 = vpop.permute.xlu0 %399
      %vm402 = vcmask 261120
      %v404 = vsel %vm402, %v234, 0
      %v407 = vsel %vm402, %v235, 0
      %v410 = vsel %vm402, %v236, 0
      %v413 = vsel %vm402, %v237, 0
      %v416 = vsel %vm402, %v238, 0
      %v419 = vsel %vm402, %v239, 0
      %v422 = vsel %vm402, %v240, 0
      %v425 = vsel %vm402, %v241, 0
      %v428 = vsel %vm402, %v242, 0
      %v431 = vsel %vm402, %v243, 0
      %v434 = vsel %vm402, %v244, 0
      %v437 = vsel %vm402, %v245, 0
      %v440 = vsel %vm402, %v246, 0
      %v443 = vsel %vm402, %v247, 0
      %v446 = vsel %vm402, %v248, 0
      %v449 = vsel %vm402, %v249, 0
      %v452 = vsel %vm402, %v250, 0
      %v455 = vsel %vm402, %v251, 0
      %v458 = vsel %vm402, %v252, 0
      %v461 = vsel %vm402, %v253, 0
      %v464 = vsel %vm402, %v254, 0
      %v467 = vsel %vm402, %v255, 0
      %v470 = vsel %vm402, %v256, 0
      %v473 = vsel %vm402, %v257, 0
      %475 = vmatpush.msra.mxu0 0.0
      %476 = vmatpush.msra.mxu0 0.0
      %477 = vmatpush.msra.mxu0 0.0
      %478 = vmatpush.msra.mxu0 0.0
      %479 = vmatpush.msra.mxu0 0.0
      %480 = vmatpush.msra.mxu0 0.0
      %481 = vmatpush.msra.mxu0 0.0
      %482 = vmatpush.msra.mxu0 0.0
      %483 = vmatpush.msra.mxu0 0.0
      %484 = vmatpush.msra.mxu0 0.0
      %485 = vmatpush.msra.mxu0 0.0
      %486 = vmatpush.msra.mxu0 0.0
      %487 = vmatpush.msra.mxu0 %v232
      %488 = vmatpush.msra.mxu0 %v230
      %489 = vmatpush.msra.mxu0 %v228
      %490 = vmatpush.msra.mxu0 %v226
      %491 = vmatmul.f32.gmra.mxu0 %v404
      %v492 = vpop.f32.mrf.mxu0
      %v493 = vadd.f32 %v285, %v492
      %494 = vmatmul.f32.gmra.mxu0 %v407
      %v495 = vpop.f32.mrf.mxu0
      %v496 = vadd.f32 %v290, %v495
      %497 = vmatmul.f32.gmra.mxu0 %v410
      %v498 = vpop.f32.mrf.mxu0
      %v499 = vadd.f32 %v295, %v498
      %500 = vmatmul.f32.gmra.mxu0 %v413
      %v501 = vpop.f32.mrf.mxu0
      %v502 = vadd.f32 %v300, %v501
      %503 = vmatmul.f32.gmra.mxu0 %v416
      %v504 = vpop.f32.mrf.mxu0
      %v505 = vadd.f32 %v305, %v504
      %506 = vmatmul.f32.gmra.mxu0 %v419
      %v507 = vpop.f32.mrf.mxu0
      %v508 = vadd.f32 %v310, %v507
      %509 = vmatmul.f32.gmra.mxu0 %v422
      %v510 = vpop.f32.mrf.mxu0
      %v511 = vadd.f32 %v315, %v510
      %512 = vmatmul.f32.gmra.mxu0 %v425
      %v513 = vpop.f32.mrf.mxu0
      %v514 = vadd.f32 %v320, %v513
      %515 = vmatmul.f32.gmra.mxu0 %v428
      %v516 = vpop.f32.mrf.mxu0
      %v517 = vadd.f32 %v325, %v516
      %518 = vmatmul.f32.gmra.mxu0 %v431
      %v519 = vpop.f32.mrf.mxu0
      %v520 = vadd.f32 %v330, %v519
      %521 = vmatmul.f32.gmra.mxu0 %v434
      %v522 = vpop.f32.mrf.mxu0
      %v523 = vadd.f32 %v335, %v522
      %524 = vmatmul.f32.gmra.mxu0 %v437
      %v525 = vpop.f32.mrf.mxu0
      %v526 = vadd.f32 %v340, %v525
      %527 = vmatmul.f32.gmra.mxu0 %v440
      %v528 = vpop.f32.mrf.mxu0
      %v529 = vadd.f32 %v345, %v528
      %530 = vmatmul.f32.gmra.mxu0 %v443
      %v531 = vpop.f32.mrf.mxu0
      %v532 = vadd.f32 %v350, %v531
      %533 = vmatmul.f32.gmra.mxu0 %v446
      %v534 = vpop.f32.mrf.mxu0
      %v535 = vadd.f32 %v355, %v534
      %536 = vmatmul.f32.gmra.mxu0 %v449
      %v537 = vpop.f32.mrf.mxu0
      %v538 = vadd.f32 %v360, %v537
      %539 = vmatmul.f32.gmra.mxu0 %v452
      %v540 = vpop.f32.mrf.mxu0
      %v541 = vadd.f32 %v365, %v540
      %542 = vmatmul.f32.gmra.mxu0 %v455
      %v543 = vpop.f32.mrf.mxu0
      %v544 = vadd.f32 %v370, %v543
      %545 = vmatmul.f32.gmra.mxu0 %v458
      %v546 = vpop.f32.mrf.mxu0
      %v547 = vadd.f32 %v375, %v546
      %548 = vmatmul.f32.gmra.mxu0 %v461
      %v549 = vpop.f32.mrf.mxu0
      %v550 = vadd.f32 %v380, %v549
      %551 = vmatmul.f32.gmra.mxu0 %v464
      %v552 = vpop.f32.mrf.mxu0
      %v553 = vadd.f32 %v385, %v552
      %554 = vmatmul.f32.gmra.mxu0 %v467
      %v555 = vpop.f32.mrf.mxu0
      %v556 = vadd.f32 %v390, %v555
      %557 = vmatmul.f32.gmra.mxu0 %v470
      %v558 = vpop.f32.mrf.mxu0
      %v559 = vadd.f32 %v395, %v558
      %560 = vmatmul.f32.gmra.mxu0 %v473
      %v561 = vpop.f32.mrf.mxu0
      %v562 = vadd.f32 %v400, %v561
      %563 = vdwg.mxu0
      %564 = vmatpush.msra.mxu0 0.0
      %565 = vmatpush.msra.mxu0 0.0
      %566 = vmatpush.msra.mxu0 0.0
      %567 = vmatpush.msra.mxu0 0.0
      %568 = vmatpush.msra.mxu0 0.0
      %569 = vmatpush.msra.mxu0 0.0
      %570 = vmatpush.msra.mxu0 0.0
      %571 = vmatpush.msra.mxu0 0.0
      %572 = vmatpush.msra.mxu0 0.0
      %573 = vmatpush.msra.mxu0 0.0
      %574 = vmatpush.msra.mxu0 0.0
      %575 = vmatpush.msra.mxu0 0.0
      %576 = vmatpush.msra.mxu0 %v233
      %577 = vmatpush.msra.mxu0 %v231
      %578 = vmatpush.msra.mxu0 %v229
      %579 = vmatpush.msra.mxu0 %v227
      %580 = vmatmul.f32.gmra.mxu0 %v404
      %v581 = vpop.f32.mrf.mxu0
      %v582 = vadd.f32 %v285, %v581
      %583 = vmatmul.f32.gmra.mxu0 %v407
      %v584 = vpop.f32.mrf.mxu0
      %v585 = vadd.f32 %v290, %v584
      %586 = vmatmul.f32.gmra.mxu0 %v410
      %v587 = vpop.f32.mrf.mxu0
      %v588 = vadd.f32 %v295, %v587
      %589 = vmatmul.f32.gmra.mxu0 %v413
      %v590 = vpop.f32.mrf.mxu0
      %v591 = vadd.f32 %v300, %v590
      %592 = vmatmul.f32.gmra.mxu0 %v416
      %v593 = vpop.f32.mrf.mxu0
      %v594 = vadd.f32 %v305, %v593
      %595 = vmatmul.f32.gmra.mxu0 %v419
      %v596 = vpop.f32.mrf.mxu0
      %v597 = vadd.f32 %v310, %v596
      %598 = vmatmul.f32.gmra.mxu0 %v422
      %v599 = vpop.f32.mrf.mxu0
      %v600 = vadd.f32 %v315, %v599
      %601 = vmatmul.f32.gmra.mxu0 %v425
      %v602 = vpop.f32.mrf.mxu0
      %v603 = vadd.f32 %v320, %v602
      %604 = vmatmul.f32.gmra.mxu0 %v428
      %v605 = vpop.f32.mrf.mxu0
      %v606 = vadd.f32 %v325, %v605
      %607 = vmatmul.f32.gmra.mxu0 %v431
      %v608 = vpop.f32.mrf.mxu0
      %v609 = vadd.f32 %v330, %v608
      %610 = vmatmul.f32.gmra.mxu0 %v434
      %v611 = vpop.f32.mrf.mxu0
      %v612 = vadd.f32 %v335, %v611
      %613 = vmatmul.f32.gmra.mxu0 %v437
      %v614 = vpop.f32.mrf.mxu0
      %v615 = vadd.f32 %v340, %v614
      %616 = vmatmul.f32.gmra.mxu0 %v440
      %v617 = vpop.f32.mrf.mxu0
      %v618 = vadd.f32 %v345, %v617
      %619 = vmatmul.f32.gmra.mxu0 %v443
      %v620 = vpop.f32.mrf.mxu0
      %v621 = vadd.f32 %v350, %v620
      %622 = vmatmul.f32.gmra.mxu0 %v446
      %v623 = vpop.f32.mrf.mxu0
      %v624 = vadd.f32 %v355, %v623
      %625 = vmatmul.f32.gmra.mxu0 %v449
      %v626 = vpop.f32.mrf.mxu0
      %v627 = vadd.f32 %v360, %v626
      %628 = vmatmul.f32.gmra.mxu0 %v452
      %v629 = vpop.f32.mrf.mxu0
      %v630 = vadd.f32 %v365, %v629
      %631 = vmatmul.f32.gmra.mxu0 %v455
      %v632 = vpop.f32.mrf.mxu0
      %v633 = vadd.f32 %v370, %v632
      %634 = vmatmul.f32.gmra.mxu0 %v458
      %v635 = vpop.f32.mrf.mxu0
      %v636 = vadd.f32 %v375, %v635
      %637 = vmatmul.f32.gmra.mxu0 %v461
      %v638 = vpop.f32.mrf.mxu0
      %v639 = vadd.f32 %v380, %v638
      %640 = vmatmul.f32.gmra.mxu0 %v464
      %v641 = vpop.f32.mrf.mxu0
      %v642 = vadd.f32 %v385, %v641
      %643 = vmatmul.f32.gmra.mxu0 %v467
      %v644 = vpop.f32.mrf.mxu0
      %v645 = vadd.f32 %v390, %v644
      %646 = vmatmul.f32.gmra.mxu0 %v470
      %v647 = vpop.f32.mrf.mxu0
      %v648 = vadd.f32 %v395, %v647
      %649 = vmatmul.f32.gmra.mxu0 %v473
      %v650 = vpop.f32.mrf.mxu0
      %v651 = vadd.f32 %v400, %v650
      %652 = vdwg.mxu0
      %v653 = vpack.c.bf16 %v544, %v541
      %v654 = vpack.c.bf16 %v633, %v630
      %v655 = vpack.c.bf16 %v550, %v547
      %v656 = vpack.c.bf16 %v639, %v636
      %657 = vxpose.xlu0.b32.start [1/16] %v553, 128
      %658 = vxpose.xlu0.b32.cont [2/16] %v556, 128
      %659 = vxpose.xlu0.b32.cont [3/16] %v559, 128
      %660 = vxpose.xlu0.b32.cont [4/16] %v562, 128
      %661 = vxpose.xlu0.b32.cont [5/16] 0.0, 128
      %662 = vxpose.xlu0.b32.cont [6/16] 0.0, 128
      %663 = vxpose.xlu0.b32.cont [7/16] 0.0, 128
      %664 = vxpose.xlu0.b32.cont [8/16] 0.0, 128
      %665 = vxpose.xlu0.b32.cont [9/16] 0.0, 128
      %666 = vxpose.xlu0.b32.cont [10/16] 0.0, 128
      %667 = vxpose.xlu0.b32.cont [11/16] 0.0, 128
      %668 = vxpose.xlu0.b32.cont [12/16] 0.0, 128
      %669 = vxpose.xlu0.b32.cont [13/16] 0.0, 128
      %670 = vxpose.xlu0.b32.cont [14/16] 0.0, 128
      %671 = vxpose.xlu0.b32.cont [15/16] 0.0, 128
      %672 = vxpose.xlu0.b32.end [16/16] 0.0, 128
      %v673 = vpop.trf.xlu0
      %v674 = vpop.trf.xlu0
      %v675 = vpop.trf.xlu0
      %v676 = vpop.trf.xlu0
      %v677 = vpop.trf.xlu0
      %v678 = vpop.trf.xlu0
      %v679 = vpop.trf.xlu0
      %v680 = vpop.trf.xlu0
      %v681 = vpop.trf.xlu0
      %v682 = vpop.trf.xlu0
      %v683 = vpop.trf.xlu0
      %v684 = vpop.trf.xlu0
      %v685 = vpop.trf.xlu0
      %v686 = vpop.trf.xlu0
      %v687 = vpop.trf.xlu0
      %v688 = vpop.trf.xlu0
      %689 = vxpose.xlu0.b32.start [1/16] %v642, 128
      %690 = vxpose.xlu0.b32.cont [2/16] %v645, 128
      %691 = vxpose.xlu0.b32.cont [3/16] %v648, 128
      %692 = vxpose.xlu0.b32.cont [4/16] %v651, 128
      %693 = vxpose.xlu0.b32.cont [5/16] 0.0, 128
      %694 = vxpose.xlu0.b32.cont [6/16] 0.0, 128
      %695 = vxpose.xlu0.b32.cont [7/16] 0.0, 128
      %696 = vxpose.xlu0.b32.cont [8/16] 0.0, 128
      %697 = vxpose.xlu0.b32.cont [9/16] 0.0, 128
      %698 = vxpose.xlu0.b32.cont [10/16] 0.0, 128
      %699 = vxpose.xlu0.b32.cont [11/16] 0.0, 128
      %700 = vxpose.xlu0.b32.cont [12/16] 0.0, 128
      %701 = vxpose.xlu0.b32.cont [13/16] 0.0, 128
      %702 = vxpose.xlu0.b32.cont [14/16] 0.0, 128
      %703 = vxpose.xlu0.b32.cont [15/16] 0.0, 128
      %704 = vxpose.xlu0.b32.end [16/16] 0.0, 128
      %v705 = vpop.trf.xlu0
      %v706 = vpop.trf.xlu0
      %v707 = vpop.trf.xlu0
      %v708 = vpop.trf.xlu0
      %v709 = vpop.trf.xlu0
      %v710 = vpop.trf.xlu0
      %v711 = vpop.trf.xlu0
      %v712 = vpop.trf.xlu0
      %v713 = vpop.trf.xlu0
      %v714 = vpop.trf.xlu0
      %v715 = vpop.trf.xlu0
      %v716 = vpop.trf.xlu0
      %v717 = vpop.trf.xlu0
      %v718 = vpop.trf.xlu0
      %v719 = vpop.trf.xlu0
      %v720 = vpop.trf.xlu0
      %v721 = vpack.c.bf16 %v674, %v673
      %v722 = vpack.c.bf16 %v676, %v675
      %v723 = vpack.c.bf16 %v678, %v677
      %v724 = vpack.c.bf16 %v680, %v679
      %v725 = vpack.c.bf16 %v682, %v681
      %v726 = vpack.c.bf16 %v684, %v683
      %v727 = vpack.c.bf16 %v686, %v685
      %v728 = vpack.c.bf16 %v688, %v687
      %v729 = vpack.c.bf16 %v706, %v705
      %v730 = vpack.c.bf16 %v708, %v707
      %v731 = vpack.c.bf16 %v710, %v709
      %v732 = vpack.c.bf16 %v712, %v711
      %v733 = vpack.c.bf16 %v714, %v713
      %v734 = vpack.c.bf16 %v716, %v715
      %v735 = vpack.c.bf16 %v718, %v717
      %v736 = vpack.c.bf16 %v720, %v719
      %v737 = vpack.c.bf16 %v496, %v493
      %v738 = vpack.c.bf16 %v585, %v582
      %v739 = vpack.c.bf16 %v502, %v499
      %v740 = vpack.c.bf16 %v591, %v588
      %741 = vxpose.binary.xlu0.c.b16.start [1/16] %v738, %v737, 128
      %742 = vxpose.binary.xlu0.c.b16.cont [2/16] %v740, %v739, 128
      %743 = vxpose.binary.xlu0.c.b16.cont [3/16] 0, 0, 128
      %744 = vxpose.binary.xlu0.c.b16.cont [4/16] 0, 0, 128
      %745 = vxpose.binary.xlu0.c.b16.cont [5/16] 0, 0, 128
      %746 = vxpose.binary.xlu0.c.b16.cont [6/16] 0, 0, 128
      %747 = vxpose.binary.xlu0.c.b16.cont [7/16] 0, 0, 128
      %748 = vxpose.binary.xlu0.c.b16.end [8/16] 0, 0, 128
      %v749 = vpop.trf.xlu0
      %v750 = vpop.trf.xlu0
      %v751 = vpop.trf.xlu0
      %v752 = vpop.trf.xlu0
      %v753 = vpop.trf.xlu0
      %v754 = vpop.trf.xlu0
      %v755 = vpop.trf.xlu0
      %v756 = vpop.trf.xlu0
      %v757 = vpop.trf.xlu0
      %v758 = vpop.trf.xlu0
      %v759 = vpop.trf.xlu0
      %v760 = vpop.trf.xlu0
      %v761 = vpop.trf.xlu0
      %v762 = vpop.trf.xlu0
      %v763 = vpop.trf.xlu0
      %v764 = vpop.trf.xlu0
      %v766 = vsel %vm402, %v749, 0
      %v769 = vsel %vm402, %v751, 0
      %v772 = vsel %vm402, %v753, 0
      %v775 = vsel %vm402, %v755, 0
      %v778 = vsel %vm402, %v757, 0
      %v781 = vsel %vm402, %v759, 0
      %v784 = vsel %vm402, %v761, 0
      %v787 = vsel %vm402, %v763, 0
      %v790 = vsel %vm402, %v750, 0
      %v793 = vsel %vm402, %v752, 0
      %v796 = vsel %vm402, %v754, 0
      %v799 = vsel %vm402, %v756, 0
      %v802 = vsel %vm402, %v758, 0
      %v805 = vsel %vm402, %v760, 0
      %v808 = vsel %vm402, %v762, 0
      %v811 = vsel %vm402, %v764, 0
      %813 = vmatpush.bf16.msra.mxu0 0
      %814 = vmatpush.bf16.msra.mxu0 0
      %815 = vmatpush.bf16.msra.mxu0 0
      %816 = vmatpush.bf16.msra.mxu0 0
      %817 = vmatpush.bf16.msra.mxu0 0
      %818 = vmatpush.bf16.msra.mxu0 0
      %819 = vmatpush.bf16.msra.mxu0 %v655
      %820 = vmatpush.bf16.msra.mxu0 %v653
      %821 = vmatmul.bf16.gmra.mxu0 %v766
      %v822 = vpop.f32.mrf.mxu0
      %v823 = vadd.f32 0.0, %v822
      %v824 = vpop.f32.mrf.mxu0
      %v825 = vadd.f32 0.0, %v824
      %826 = vmatmul.bf16.gmra.mxu0 %v769
      %v827 = vpop.f32.mrf.mxu0
      %v828 = vadd.f32 0.0, %v827
      %v829 = vpop.f32.mrf.mxu0
      %v830 = vadd.f32 0.0, %v829
      %831 = vmatmul.bf16.gmra.mxu0 %v772
      %v832 = vpop.f32.mrf.mxu0
      %v833 = vadd.f32 0.0, %v832
      %v834 = vpop.f32.mrf.mxu0
      %v835 = vadd.f32 0.0, %v834
      %836 = vmatmul.bf16.gmra.mxu0 %v775
      %v837 = vpop.f32.mrf.mxu0
      %v838 = vadd.f32 0.0, %v837
      %v839 = vpop.f32.mrf.mxu0
      %v840 = vadd.f32 0.0, %v839
      %841 = vmatmul.bf16.gmra.mxu0 %v778
      %v842 = vpop.f32.mrf.mxu0
      %v843 = vadd.f32 0.0, %v842
      %v844 = vpop.f32.mrf.mxu0
      %v845 = vadd.f32 0.0, %v844
      %846 = vmatmul.bf16.gmra.mxu0 %v781
      %v847 = vpop.f32.mrf.mxu0
      %v848 = vadd.f32 0.0, %v847
      %v849 = vpop.f32.mrf.mxu0
      %v850 = vadd.f32 0.0, %v849
      %851 = vmatmul.bf16.gmra.mxu0 %v784
      %v852 = vpop.f32.mrf.mxu0
      %v853 = vadd.f32 0.0, %v852
      %v854 = vpop.f32.mrf.mxu0
      %v855 = vadd.f32 0.0, %v854
      %856 = vmatmul.bf16.gmra.mxu0 %v787
      %v857 = vpop.f32.mrf.mxu0
      %v858 = vadd.f32 0.0, %v857
      %v859 = vpop.f32.mrf.mxu0
      %v860 = vadd.f32 0.0, %v859
      %861 = vmatmul.bf16.gmra.mxu0 %v790
      %v862 = vpop.f32.mrf.mxu0
      %v863 = vadd.f32 0.0, %v862
      %v864 = vpop.f32.mrf.mxu0
      %v865 = vadd.f32 0.0, %v864
      %866 = vmatmul.bf16.gmra.mxu0 %v793
      %v867 = vpop.f32.mrf.mxu0
      %v868 = vadd.f32 0.0, %v867
      %v869 = vpop.f32.mrf.mxu0
      %v870 = vadd.f32 0.0, %v869
      %871 = vmatmul.bf16.gmra.mxu0 %v796
      %v872 = vpop.f32.mrf.mxu0
      %v873 = vadd.f32 0.0, %v872
      %v874 = vpop.f32.mrf.mxu0
      %v875 = vadd.f32 0.0, %v874
      %876 = vmatmul.bf16.gmra.mxu0 %v799
      %v877 = vpop.f32.mrf.mxu0
      %v878 = vadd.f32 0.0, %v877
      %v879 = vpop.f32.mrf.mxu0
      %v880 = vadd.f32 0.0, %v879
      %881 = vmatmul.bf16.gmra.mxu0 %v802
      %v882 = vpop.f32.mrf.mxu0
      %v883 = vadd.f32 0.0, %v882
      %v884 = vpop.f32.mrf.mxu0
      %v885 = vadd.f32 0.0, %v884
      %886 = vmatmul.bf16.gmra.mxu0 %v805
      %v887 = vpop.f32.mrf.mxu0
      %v888 = vadd.f32 0.0, %v887
      %v889 = vpop.f32.mrf.mxu0
      %v890 = vadd.f32 0.0, %v889
      %891 = vmatmul.bf16.gmra.mxu0 %v808
      %v892 = vpop.f32.mrf.mxu0
      %v893 = vadd.f32 0.0, %v892
      %v894 = vpop.f32.mrf.mxu0
      %v895 = vadd.f32 0.0, %v894
      %896 = vmatmul.bf16.gmra.mxu0 %v811
      %v897 = vpop.f32.mrf.mxu0
      %v898 = vadd.f32 0.0, %v897
      %v899 = vpop.f32.mrf.mxu0
      %v900 = vadd.f32 0.0, %v899
      %901 = vdwg.mxu0
      %902 = vmatpush.bf16.msra.mxu0 0
      %903 = vmatpush.bf16.msra.mxu0 0
      %904 = vmatpush.bf16.msra.mxu0 0
      %905 = vmatpush.bf16.msra.mxu0 0
      %906 = vmatpush.bf16.msra.mxu0 0
      %907 = vmatpush.bf16.msra.mxu0 0
      %908 = vmatpush.bf16.msra.mxu0 %v656
      %909 = vmatpush.bf16.msra.mxu0 %v654
      %910 = vmatmul.bf16.gmra.mxu0 %v766
      %v911 = vpop.f32.mrf.mxu0
      %v912 = vadd.f32 0.0, %v911
      %v913 = vpop.f32.mrf.mxu0
      %v914 = vadd.f32 0.0, %v913
      %915 = vmatmul.bf16.gmra.mxu0 %v769
      %v916 = vpop.f32.mrf.mxu0
      %v917 = vadd.f32 0.0, %v916
      %v918 = vpop.f32.mrf.mxu0
      %v919 = vadd.f32 0.0, %v918
      %920 = vmatmul.bf16.gmra.mxu0 %v772
      %v921 = vpop.f32.mrf.mxu0
      %v922 = vadd.f32 0.0, %v921
      %v923 = vpop.f32.mrf.mxu0
      %v924 = vadd.f32 0.0, %v923
      %925 = vmatmul.bf16.gmra.mxu0 %v775
      %v926 = vpop.f32.mrf.mxu0
      %v927 = vadd.f32 0.0, %v926
      %v928 = vpop.f32.mrf.mxu0
      %v929 = vadd.f32 0.0, %v928
      %930 = vmatmul.bf16.gmra.mxu0 %v778
      %v931 = vpop.f32.mrf.mxu0
      %v932 = vadd.f32 0.0, %v931
      %v933 = vpop.f32.mrf.mxu0
      %v934 = vadd.f32 0.0, %v933
      %935 = vmatmul.bf16.gmra.mxu0 %v781
      %v936 = vpop.f32.mrf.mxu0
      %v937 = vadd.f32 0.0, %v936
      %v938 = vpop.f32.mrf.mxu0
      %v939 = vadd.f32 0.0, %v938
      %940 = vmatmul.bf16.gmra.mxu0 %v784
      %v941 = vpop.f32.mrf.mxu0
      %v942 = vadd.f32 0.0, %v941
      %v943 = vpop.f32.mrf.mxu0
      %v944 = vadd.f32 0.0, %v943
      %945 = vmatmul.bf16.gmra.mxu0 %v787
      %v946 = vpop.f32.mrf.mxu0
      %v947 = vadd.f32 0.0, %v946
      %v948 = vpop.f32.mrf.mxu0
      %v949 = vadd.f32 0.0, %v948
      %950 = vmatmul.bf16.gmra.mxu0 %v790
      %v951 = vpop.f32.mrf.mxu0
      %v952 = vadd.f32 0.0, %v951
      %v953 = vpop.f32.mrf.mxu0
      %v954 = vadd.f32 0.0, %v953
      %955 = vmatmul.bf16.gmra.mxu0 %v793
      %v956 = vpop.f32.mrf.mxu0
      %v957 = vadd.f32 0.0, %v956
      %v958 = vpop.f32.mrf.mxu0
      %v959 = vadd.f32 0.0, %v958
      %960 = vmatmul.bf16.gmra.mxu0 %v796
      %v961 = vpop.f32.mrf.mxu0
      %v962 = vadd.f32 0.0, %v961
      %v963 = vpop.f32.mrf.mxu0
      %v964 = vadd.f32 0.0, %v963
      %965 = vmatmul.bf16.gmra.mxu0 %v799
      %v966 = vpop.f32.mrf.mxu0
      %v967 = vadd.f32 0.0, %v966
      %v968 = vpop.f32.mrf.mxu0
      %v969 = vadd.f32 0.0, %v968
      %970 = vmatmul.bf16.gmra.mxu0 %v802
      %v971 = vpop.f32.mrf.mxu0
      %v972 = vadd.f32 0.0, %v971
      %v973 = vpop.f32.mrf.mxu0
      %v974 = vadd.f32 0.0, %v973
      %975 = vmatmul.bf16.gmra.mxu0 %v805
      %v976 = vpop.f32.mrf.mxu0
      %v977 = vadd.f32 0.0, %v976
      %v978 = vpop.f32.mrf.mxu0
      %v979 = vadd.f32 0.0, %v978
      %980 = vmatmul.bf16.gmra.mxu0 %v808
      %v981 = vpop.f32.mrf.mxu0
      %v982 = vadd.f32 0.0, %v981
      %v983 = vpop.f32.mrf.mxu0
      %v984 = vadd.f32 0.0, %v983
      %985 = vmatmul.bf16.gmra.mxu0 %v811
      %v986 = vpop.f32.mrf.mxu0
      %v987 = vadd.f32 0.0, %v986
      %v988 = vpop.f32.mrf.mxu0
      %v989 = vadd.f32 0.0, %v988
      %990 = vdwg.mxu0
      %v991 = vmax.f32 %v823, %v912
      %992 = vmax.xlane.f32.xlu0 %v991
      %v993 = vpop.xlane.xlu0 %992
      %v994 = vmax.f32 %v825, %v914
      %995 = vmax.xlane.f32.xlu0 %v994
      %v996 = vpop.xlane.xlu0 %995
      %v997 = vmax.f32 %v828, %v917
      %998 = vmax.xlane.f32.xlu0 %v997
      %v999 = vpop.xlane.xlu0 %998
      %v1000 = vmax.f32 %v830, %v919
      %1001 = vmax.xlane.f32.xlu0 %v1000
      %v1002 = vpop.xlane.xlu0 %1001
      %v1003 = vmax.f32 %v833, %v922
      %1004 = vmax.xlane.f32.xlu0 %v1003
      %v1005 = vpop.xlane.xlu0 %1004
      %v1006 = vmax.f32 %v835, %v924
      %1007 = vmax.xlane.f32.xlu0 %v1006
      %v1008 = vpop.xlane.xlu0 %1007
      %v1009 = vmax.f32 %v838, %v927
      %1010 = vmax.xlane.f32.xlu0 %v1009
      %v1011 = vpop.xlane.xlu0 %1010
      %v1012 = vmax.f32 %v840, %v929
      %1013 = vmax.xlane.f32.xlu0 %v1012
      %v1014 = vpop.xlane.xlu0 %1013
      %v1015 = vmax.f32 %v843, %v932
      %1016 = vmax.xlane.f32.xlu0 %v1015
      %v1017 = vpop.xlane.xlu0 %1016
      %v1018 = vmax.f32 %v845, %v934
      %1019 = vmax.xlane.f32.xlu0 %v1018
      %v1020 = vpop.xlane.xlu0 %1019
      %v1021 = vmax.f32 %v848, %v937
      %1022 = vmax.xlane.f32.xlu0 %v1021
      %v1023 = vpop.xlane.xlu0 %1022
      %v1024 = vmax.f32 %v850, %v939
      %1025 = vmax.xlane.f32.xlu0 %v1024
      %v1026 = vpop.xlane.xlu0 %1025
      %v1027 = vmax.f32 %v853, %v942
      %1028 = vmax.xlane.f32.xlu0 %v1027
      %v1029 = vpop.xlane.xlu0 %1028
      %v1030 = vmax.f32 %v855, %v944
      %1031 = vmax.xlane.f32.xlu0 %v1030
      %v1032 = vpop.xlane.xlu0 %1031
      %v1033 = vmax.f32 %v858, %v947
      %1034 = vmax.xlane.f32.xlu0 %v1033
      %v1035 = vpop.xlane.xlu0 %1034
      %v1036 = vmax.f32 %v860, %v949
      %1037 = vmax.xlane.f32.xlu0 %v1036
      %v1038 = vpop.xlane.xlu0 %1037
      %v1039 = vmax.f32 %v863, %v952
      %1040 = vmax.xlane.f32.xlu0 %v1039
      %v1041 = vpop.xlane.xlu0 %1040
      %v1042 = vmax.f32 %v865, %v954
      %1043 = vmax.xlane.f32.xlu0 %v1042
      %v1044 = vpop.xlane.xlu0 %1043
      %v1045 = vmax.f32 %v868, %v957
      %1046 = vmax.xlane.f32.xlu0 %v1045
      %v1047 = vpop.xlane.xlu0 %1046
      %v1048 = vmax.f32 %v870, %v959
      %1049 = vmax.xlane.f32.xlu0 %v1048
      %v1050 = vpop.xlane.xlu0 %1049
      %v1051 = vmax.f32 %v873, %v962
      %1052 = vmax.xlane.f32.xlu0 %v1051
      %v1053 = vpop.xlane.xlu0 %1052
      %v1054 = vmax.f32 %v875, %v964
      %1055 = vmax.xlane.f32.xlu0 %v1054
      %v1056 = vpop.xlane.xlu0 %1055
      %v1057 = vmax.f32 %v878, %v967
      %1058 = vmax.xlane.f32.xlu0 %v1057
      %v1059 = vpop.xlane.xlu0 %1058
      %v1060 = vmax.f32 %v880, %v969
      %1061 = vmax.xlane.f32.xlu0 %v1060
      %v1062 = vpop.xlane.xlu0 %1061
      %v1063 = vmax.f32 %v883, %v972
      %1064 = vmax.xlane.f32.xlu0 %v1063
      %v1065 = vpop.xlane.xlu0 %1064
      %v1066 = vmax.f32 %v885, %v974
      %1067 = vmax.xlane.f32.xlu0 %v1066
      %v1068 = vpop.xlane.xlu0 %1067
      %v1069 = vmax.f32 %v888, %v977
      %1070 = vmax.xlane.f32.xlu0 %v1069
      %v1071 = vpop.xlane.xlu0 %1070
      %v1072 = vmax.f32 %v890, %v979
      %1073 = vmax.xlane.f32.xlu0 %v1072
      %v1074 = vpop.xlane.xlu0 %1073
      %v1075 = vmax.f32 %v893, %v982
      %1076 = vmax.xlane.f32.xlu0 %v1075
      %v1077 = vpop.xlane.xlu0 %1076
      %v1078 = vmax.f32 %v895, %v984
      %1079 = vmax.xlane.f32.xlu0 %v1078
      %v1080 = vpop.xlane.xlu0 %1079
      %v1081 = vmax.f32 %v898, %v987
      %1082 = vmax.xlane.f32.xlu0 %v1081
      %v1083 = vpop.xlane.xlu0 %1082
      %v1084 = vmax.f32 %v900, %v989
      %1085 = vmax.xlane.f32.xlu0 %v1084
      %v1086 = vpop.xlane.xlu0 %1085
      %v1087 = vsub.f32 %v823, %v993
      %v1088 = vsub.f32 %v912, %v993
      %v1089 = vsub.f32 %v825, %v996
      %v1090 = vsub.f32 %v914, %v996
      %v1091 = vsub.f32 %v828, %v999
      %v1092 = vsub.f32 %v917, %v999
      %v1093 = vsub.f32 %v830, %v1002
      %v1094 = vsub.f32 %v919, %v1002
      %v1095 = vsub.f32 %v833, %v1005
      %v1096 = vsub.f32 %v922, %v1005
      %v1097 = vsub.f32 %v835, %v1008
      %v1098 = vsub.f32 %v924, %v1008
      %v1099 = vsub.f32 %v838, %v1011
      %v1100 = vsub.f32 %v927, %v1011
      %v1101 = vsub.f32 %v840, %v1014
      %v1102 = vsub.f32 %v929, %v1014
      %v1103 = vsub.f32 %v843, %v1017
      %v1104 = vsub.f32 %v932, %v1017
      %v1105 = vsub.f32 %v845, %v1020
      %v1106 = vsub.f32 %v934, %v1020
      %v1107 = vsub.f32 %v848, %v1023
      %v1108 = vsub.f32 %v937, %v1023
      %v1109 = vsub.f32 %v850, %v1026
      %v1110 = vsub.f32 %v939, %v1026
      %v1111 = vsub.f32 %v853, %v1029
      %v1112 = vsub.f32 %v942, %v1029
      %v1113 = vsub.f32 %v855, %v1032
      %v1114 = vsub.f32 %v944, %v1032
      %v1115 = vsub.f32 %v858, %v1035
      %v1116 = vsub.f32 %v947, %v1035
      %v1117 = vsub.f32 %v860, %v1038
      %v1118 = vsub.f32 %v949, %v1038
      %v1119 = vsub.f32 %v863, %v1041
      %v1120 = vsub.f32 %v952, %v1041
      %v1121 = vsub.f32 %v865, %v1044
      %v1122 = vsub.f32 %v954, %v1044
      %v1123 = vsub.f32 %v868, %v1047
      %v1124 = vsub.f32 %v957, %v1047
      %v1125 = vsub.f32 %v870, %v1050
      %v1126 = vsub.f32 %v959, %v1050
      %v1127 = vsub.f32 %v873, %v1053
      %v1128 = vsub.f32 %v962, %v1053
      %v1129 = vsub.f32 %v875, %v1056
      %v1130 = vsub.f32 %v964, %v1056
      %v1131 = vsub.f32 %v878, %v1059
      %v1132 = vsub.f32 %v967, %v1059
      %v1133 = vsub.f32 %v880, %v1062
      %v1134 = vsub.f32 %v969, %v1062
      %v1135 = vsub.f32 %v883, %v1065
      %v1136 = vsub.f32 %v972, %v1065
      %v1137 = vsub.f32 %v885, %v1068
      %v1138 = vsub.f32 %v974, %v1068
      %v1139 = vsub.f32 %v888, %v1071
      %v1140 = vsub.f32 %v977, %v1071
      %v1141 = vsub.f32 %v890, %v1074
      %v1142 = vsub.f32 %v979, %v1074
      %v1143 = vsub.f32 %v893, %v1077
      %v1144 = vsub.f32 %v982, %v1077
      %v1145 = vsub.f32 %v895, %v1080
      %v1146 = vsub.f32 %v984, %v1080
      %v1147 = vsub.f32 %v898, %v1083
      %v1148 = vsub.f32 %v987, %v1083
      %v1149 = vsub.f32 %v900, %v1086
      %v1150 = vsub.f32 %v989, %v1086
      %v1151 = vmul.f32 %v1087, 1.442695
      %v1152 = vpow.pop %v1151
      %v1153 = vmul.f32 %v1088, 1.442695
      %v1154 = vpow.pop %v1153
      %v1155 = vmul.f32 %v1089, 1.442695
      %v1156 = vpow.pop %v1155
      %v1157 = vmul.f32 %v1090, 1.442695
      %v1158 = vpow.pop %v1157
      %v1159 = vmul.f32 %v1091, 1.442695
      %v1160 = vpow.pop %v1159
      %v1161 = vmul.f32 %v1092, 1.442695
      %v1162 = vpow.pop %v1161
      %v1163 = vmul.f32 %v1093, 1.442695
      %v1164 = vpow.pop %v1163
      %v1165 = vmul.f32 %v1094, 1.442695
      %v1166 = vpow.pop %v1165
      %v1167 = vmul.f32 %v1095, 1.442695
      %v1168 = vpow.pop %v1167
      %v1169 = vmul.f32 %v1096, 1.442695
      %v1170 = vpow.pop %v1169
      %v1171 = vmul.f32 %v1097, 1.442695
      %v1172 = vpow.pop %v1171
      %v1173 = vmul.f32 %v1098, 1.442695
      %v1174 = vpow.pop %v1173
      %v1175 = vmul.f32 %v1099, 1.442695
      %v1176 = vpow.pop %v1175
      %v1177 = vmul.f32 %v1100, 1.442695
      %v1178 = vpow.pop %v1177
      %v1179 = vmul.f32 %v1101, 1.442695
      %v1180 = vpow.pop %v1179
      %v1181 = vmul.f32 %v1102, 1.442695
      %v1182 = vpow.pop %v1181
      %v1183 = vmul.f32 %v1103, 1.442695
      %v1184 = vpow.pop %v1183
      %v1185 = vmul.f32 %v1104, 1.442695
      %v1186 = vpow.pop %v1185
      %v1187 = vmul.f32 %v1105, 1.442695
      %v1188 = vpow.pop %v1187
      %v1189 = vmul.f32 %v1106, 1.442695
      %v1190 = vpow.pop %v1189
      %v1191 = vmul.f32 %v1107, 1.442695
      %v1192 = vpow.pop %v1191
      %v1193 = vmul.f32 %v1108, 1.442695
      %v1194 = vpow.pop %v1193
      %v1195 = vmul.f32 %v1109, 1.442695
      %v1196 = vpow.pop %v1195
      %v1197 = vmul.f32 %v1110, 1.442695
      %v1198 = vpow.pop %v1197
      %v1199 = vmul.f32 %v1111, 1.442695
      %v1200 = vpow.pop %v1199
      %v1201 = vmul.f32 %v1112, 1.442695
      %v1202 = vpow.pop %v1201
      %v1203 = vmul.f32 %v1113, 1.442695
      %v1204 = vpow.pop %v1203
      %v1205 = vmul.f32 %v1114, 1.442695
      %v1206 = vpow.pop %v1205
      %v1207 = vmul.f32 %v1115, 1.442695
      %v1208 = vpow.pop %v1207
      %v1209 = vmul.f32 %v1116, 1.442695
      %v1210 = vpow.pop %v1209
      %v1211 = vmul.f32 %v1117, 1.442695
      %v1212 = vpow.pop %v1211
      %v1213 = vmul.f32 %v1118, 1.442695
      %v1214 = vpow.pop %v1213
      %v1215 = vmul.f32 %v1119, 1.442695
      %v1216 = vpow.pop %v1215
      %v1217 = vmul.f32 %v1120, 1.442695
      %v1218 = vpow.pop %v1217
      %v1219 = vmul.f32 %v1121, 1.442695
      %v1220 = vpow.pop %v1219
      %v1221 = vmul.f32 %v1122, 1.442695
      %v1222 = vpow.pop %v1221
      %v1223 = vmul.f32 %v1123, 1.442695
      %v1224 = vpow.pop %v1223
      %v1225 = vmul.f32 %v1124, 1.442695
      %v1226 = vpow.pop %v1225
      %v1227 = vmul.f32 %v1125, 1.442695
      %v1228 = vpow.pop %v1227
      %v1229 = vmul.f32 %v1126, 1.442695
      %v1230 = vpow.pop %v1229
      %v1231 = vmul.f32 %v1127, 1.442695
      %v1232 = vpow.pop %v1231
      %v1233 = vmul.f32 %v1128, 1.442695
      %v1234 = vpow.pop %v1233
      %v1235 = vmul.f32 %v1129, 1.442695
      %v1236 = vpow.pop %v1235
      %v1237 = vmul.f32 %v1130, 1.442695
      %v1238 = vpow.pop %v1237
      %v1239 = vmul.f32 %v1131, 1.442695
      %v1240 = vpow.pop %v1239
      %v1241 = vmul.f32 %v1132, 1.442695
      %v1242 = vpow.pop %v1241
      %v1243 = vmul.f32 %v1133, 1.442695
      %v1244 = vpow.pop %v1243
      %v1245 = vmul.f32 %v1134, 1.442695
      %v1246 = vpow.pop %v1245
      %v1247 = vmul.f32 %v1135, 1.442695
      %v1248 = vpow.pop %v1247
      %v1249 = vmul.f32 %v1136, 1.442695
      %v1250 = vpow.pop %v1249
      %v1251 = vmul.f32 %v1137, 1.442695
      %v1252 = vpow.pop %v1251
      %v1253 = vmul.f32 %v1138, 1.442695
      %v1254 = vpow.pop %v1253
      %v1255 = vmul.f32 %v1139, 1.442695
      %v1256 = vpow.pop %v1255
      %v1257 = vmul.f32 %v1140, 1.442695
      %v1258 = vpow.pop %v1257
      %v1259 = vmul.f32 %v1141, 1.442695
      %v1260 = vpow.pop %v1259
      %v1261 = vmul.f32 %v1142, 1.442695
      %v1262 = vpow.pop %v1261
      %v1263 = vmul.f32 %v1143, 1.442695
      %v1264 = vpow.pop %v1263
      %v1265 = vmul.f32 %v1144, 1.442695
      %v1266 = vpow.pop %v1265
      %v1267 = vmul.f32 %v1145, 1.442695
      %v1268 = vpow.pop %v1267
      %v1269 = vmul.f32 %v1146, 1.442695
      %v1270 = vpow.pop %v1269
      %v1271 = vmul.f32 %v1147, 1.442695
      %v1272 = vpow.pop %v1271
      %v1273 = vmul.f32 %v1148, 1.442695
      %v1274 = vpow.pop %v1273
      %v1275 = vmul.f32 %v1149, 1.442695
      %v1276 = vpow.pop %v1275
      %v1277 = vmul.f32 %v1150, 1.442695
      %v1278 = vpow.pop %v1277
      %v1279 = vadd.f32 %v1152, %v1154
      %1280 = vadd.xlane.f32.xlu0 %v1279
      %v1281 = vpop.xlane.xlu0 %1280
      %v1282 = vadd.f32 %v1156, %v1158
      %1283 = vadd.xlane.f32.xlu0 %v1282
      %v1284 = vpop.xlane.xlu0 %1283
      %v1285 = vadd.f32 %v1160, %v1162
      %1286 = vadd.xlane.f32.xlu0 %v1285
      %v1287 = vpop.xlane.xlu0 %1286
      %v1288 = vadd.f32 %v1164, %v1166
      %1289 = vadd.xlane.f32.xlu0 %v1288
      %v1290 = vpop.xlane.xlu0 %1289
      %v1291 = vadd.f32 %v1168, %v1170
      %1292 = vadd.xlane.f32.xlu0 %v1291
      %v1293 = vpop.xlane.xlu0 %1292
      %v1294 = vadd.f32 %v1172, %v1174
      %1295 = vadd.xlane.f32.xlu0 %v1294
      %v1296 = vpop.xlane.xlu0 %1295
      %v1297 = vadd.f32 %v1176, %v1178
      %1298 = vadd.xlane.f32.xlu0 %v1297
      %v1299 = vpop.xlane.xlu0 %1298
      %v1300 = vadd.f32 %v1180, %v1182
      %1301 = vadd.xlane.f32.xlu0 %v1300
      %v1302 = vpop.xlane.xlu0 %1301
      %v1303 = vadd.f32 %v1184, %v1186
      %1304 = vadd.xlane.f32.xlu0 %v1303
      %v1305 = vpop.xlane.xlu0 %1304
      %v1306 = vadd.f32 %v1188, %v1190
      %1307 = vadd.xlane.f32.xlu0 %v1306
      %v1308 = vpop.xlane.xlu0 %1307
      %v1309 = vadd.f32 %v1192, %v1194
      %1310 = vadd.xlane.f32.xlu0 %v1309
      %v1311 = vpop.xlane.xlu0 %1310
      %v1312 = vadd.f32 %v1196, %v1198
      %1313 = vadd.xlane.f32.xlu0 %v1312
      %v1314 = vpop.xlane.xlu0 %1313
      %v1315 = vadd.f32 %v1200, %v1202
      %1316 = vadd.xlane.f32.xlu0 %v1315
      %v1317 = vpop.xlane.xlu0 %1316
      %v1318 = vadd.f32 %v1204, %v1206
      %1319 = vadd.xlane.f32.xlu0 %v1318
      %v1320 = vpop.xlane.xlu0 %1319
      %v1321 = vadd.f32 %v1208, %v1210
      %1322 = vadd.xlane.f32.xlu0 %v1321
      %v1323 = vpop.xlane.xlu0 %1322
      %v1324 = vadd.f32 %v1212, %v1214
      %1325 = vadd.xlane.f32.xlu0 %v1324
      %v1326 = vpop.xlane.xlu0 %1325
      %v1327 = vadd.f32 %v1216, %v1218
      %1328 = vadd.xlane.f32.xlu0 %v1327
      %v1329 = vpop.xlane.xlu0 %1328
      %v1330 = vadd.f32 %v1220, %v1222
      %1331 = vadd.xlane.f32.xlu0 %v1330
      %v1332 = vpop.xlane.xlu0 %1331
      %v1333 = vadd.f32 %v1224, %v1226
      %1334 = vadd.xlane.f32.xlu0 %v1333
      %v1335 = vpop.xlane.xlu0 %1334
      %v1336 = vadd.f32 %v1228, %v1230
      %1337 = vadd.xlane.f32.xlu0 %v1336
      %v1338 = vpop.xlane.xlu0 %1337
      %v1339 = vadd.f32 %v1232, %v1234
      %1340 = vadd.xlane.f32.xlu0 %v1339
      %v1341 = vpop.xlane.xlu0 %1340
      %v1342 = vadd.f32 %v1236, %v1238
      %1343 = vadd.xlane.f32.xlu0 %v1342
      %v1344 = vpop.xlane.xlu0 %1343
      %v1345 = vadd.f32 %v1240, %v1242
      %1346 = vadd.xlane.f32.xlu0 %v1345
      %v1347 = vpop.xlane.xlu0 %1346
      %v1348 = vadd.f32 %v1244, %v1246
      %1349 = vadd.xlane.f32.xlu0 %v1348
      %v1350 = vpop.xlane.xlu0 %1349
      %v1351 = vadd.f32 %v1248, %v1250
      %1352 = vadd.xlane.f32.xlu0 %v1351
      %v1353 = vpop.xlane.xlu0 %1352
      %v1354 = vadd.f32 %v1252, %v1254
      %1355 = vadd.xlane.f32.xlu0 %v1354
      %v1356 = vpop.xlane.xlu0 %1355
      %v1357 = vadd.f32 %v1256, %v1258
      %1358 = vadd.xlane.f32.xlu0 %v1357
      %v1359 = vpop.xlane.xlu0 %1358
      %v1360 = vadd.f32 %v1260, %v1262
      %1361 = vadd.xlane.f32.xlu0 %v1360
      %v1362 = vpop.xlane.xlu0 %1361
      %v1363 = vadd.f32 %v1264, %v1266
      %1364 = vadd.xlane.f32.xlu0 %v1363
      %v1365 = vpop.xlane.xlu0 %1364
      %v1366 = vadd.f32 %v1268, %v1270
      %1367 = vadd.xlane.f32.xlu0 %v1366
      %v1368 = vpop.xlane.xlu0 %1367
      %v1369 = vadd.f32 %v1272, %v1274
      %1370 = vadd.xlane.f32.xlu0 %v1369
      %v1371 = vpop.xlane.xlu0 %1370
      %v1372 = vadd.f32 %v1276, %v1278
      %1373 = vadd.xlane.f32.xlu0 %v1372
      %v1374 = vpop.xlane.xlu0 %1373
      %v1375 = vrcp.pop %v1281
      %v1376 = vrcp.pop %v1284
      %v1377 = vrcp.pop %v1287
      %v1378 = vrcp.pop %v1290
      %v1379 = vrcp.pop %v1293
      %v1380 = vrcp.pop %v1296
      %v1381 = vrcp.pop %v1299
      %v1382 = vrcp.pop %v1302
      %v1383 = vrcp.pop %v1305
      %v1384 = vrcp.pop %v1308
      %v1385 = vrcp.pop %v1311
      %v1386 = vrcp.pop %v1314
      %v1387 = vrcp.pop %v1317
      %v1388 = vrcp.pop %v1320
      %v1389 = vrcp.pop %v1323
      %v1390 = vrcp.pop %v1326
      %v1391 = vrcp.pop %v1329
      %v1392 = vrcp.pop %v1332
      %v1393 = vrcp.pop %v1335
      %v1394 = vrcp.pop %v1338
      %v1395 = vrcp.pop %v1341
      %v1396 = vrcp.pop %v1344
      %v1397 = vrcp.pop %v1347
      %v1398 = vrcp.pop %v1350
      %v1399 = vrcp.pop %v1353
      %v1400 = vrcp.pop %v1356
      %v1401 = vrcp.pop %v1359
      %v1402 = vrcp.pop %v1362
      %v1403 = vrcp.pop %v1365
      %v1404 = vrcp.pop %v1368
      %v1405 = vrcp.pop %v1371
      %v1406 = vrcp.pop %v1374
      %v1407 = vpack.c.bf16 %v1156, %v1152
      %v1408 = vpack.c.bf16 %v1158, %v1154
      %v1409 = vpack.c.bf16 %v1164, %v1160
      %v1410 = vpack.c.bf16 %v1166, %v1162
      %v1411 = vpack.c.bf16 %v1172, %v1168
      %v1412 = vpack.c.bf16 %v1174, %v1170
      %v1413 = vpack.c.bf16 %v1180, %v1176
      %v1414 = vpack.c.bf16 %v1182, %v1178
      %v1415 = vpack.c.bf16 %v1188, %v1184
      %v1416 = vpack.c.bf16 %v1190, %v1186
      %v1417 = vpack.c.bf16 %v1196, %v1192
      %v1418 = vpack.c.bf16 %v1198, %v1194
      %v1419 = vpack.c.bf16 %v1204, %v1200
      %v1420 = vpack.c.bf16 %v1206, %v1202
      %v1421 = vpack.c.bf16 %v1212, %v1208
      %v1422 = vpack.c.bf16 %v1214, %v1210
      %v1423 = vpack.c.bf16 %v1220, %v1216
      %v1424 = vpack.c.bf16 %v1222, %v1218
      %v1425 = vpack.c.bf16 %v1228, %v1224
      %v1426 = vpack.c.bf16 %v1230, %v1226
      %v1427 = vpack.c.bf16 %v1236, %v1232
      %v1428 = vpack.c.bf16 %v1238, %v1234
      %v1429 = vpack.c.bf16 %v1244, %v1240
      %v1430 = vpack.c.bf16 %v1246, %v1242
      %v1431 = vpack.c.bf16 %v1252, %v1248
      %v1432 = vpack.c.bf16 %v1254, %v1250
      %v1433 = vpack.c.bf16 %v1260, %v1256
      %v1434 = vpack.c.bf16 %v1262, %v1258
      %v1435 = vpack.c.bf16 %v1268, %v1264
      %v1436 = vpack.c.bf16 %v1270, %v1266
      %v1437 = vpack.c.bf16 %v1276, %v1272
      %v1438 = vpack.c.bf16 %v1278, %v1274
      %1439 = vmatpush.bf16.msra.mxu0 %v728
      %1440 = vmatpush.bf16.msra.mxu0 %v727
      %1441 = vmatpush.bf16.msra.mxu0 %v726
      %1442 = vmatpush.bf16.msra.mxu0 %v725
      %1443 = vmatpush.bf16.msra.mxu0 %v724
      %1444 = vmatpush.bf16.msra.mxu0 %v723
      %1445 = vmatpush.bf16.msra.mxu0 %v722
      %1446 = vmatpush.bf16.msra.mxu0 %v721
      %1447 = vmatmul.bf16.gmra.mxu0 %v1407
      %v1448 = vpop.f32.mrf.mxu0
      %v1449 = vadd.f32 0.0, %v1448
      %v1450 = vpop.f32.mrf.mxu0
      %v1451 = vadd.f32 0.0, %v1450
      %1452 = vmatmul.bf16.gmra.mxu0 %v1409
      %v1453 = vpop.f32.mrf.mxu0
      %v1454 = vadd.f32 0.0, %v1453
      %v1455 = vpop.f32.mrf.mxu0
      %v1456 = vadd.f32 0.0, %v1455
      %1457 = vmatmul.bf16.gmra.mxu0 %v1411
      %v1458 = vpop.f32.mrf.mxu0
      %v1459 = vadd.f32 0.0, %v1458
      %v1460 = vpop.f32.mrf.mxu0
      %v1461 = vadd.f32 0.0, %v1460
      %1462 = vmatmul.bf16.gmra.mxu0 %v1413
      %v1463 = vpop.f32.mrf.mxu0
      %v1464 = vadd.f32 0.0, %v1463
      %v1465 = vpop.f32.mrf.mxu0
      %v1466 = vadd.f32 0.0, %v1465
      %1467 = vmatmul.bf16.gmra.mxu0 %v1415
      %v1468 = vpop.f32.mrf.mxu0
      %v1469 = vadd.f32 0.0, %v1468
      %v1470 = vpop.f32.mrf.mxu0
      %v1471 = vadd.f32 0.0, %v1470
      %1472 = vmatmul.bf16.gmra.mxu0 %v1417
      %v1473 = vpop.f32.mrf.mxu0
      %v1474 = vadd.f32 0.0, %v1473
      %v1475 = vpop.f32.mrf.mxu0
      %v1476 = vadd.f32 0.0, %v1475
      %1477 = vmatmul.bf16.gmra.mxu0 %v1419
      %v1478 = vpop.f32.mrf.mxu0
      %v1479 = vadd.f32 0.0, %v1478
      %v1480 = vpop.f32.mrf.mxu0
      %v1481 = vadd.f32 0.0, %v1480
      %1482 = vmatmul.bf16.gmra.mxu0 %v1421
      %v1483 = vpop.f32.mrf.mxu0
      %v1484 = vadd.f32 0.0, %v1483
      %v1485 = vpop.f32.mrf.mxu0
      %v1486 = vadd.f32 0.0, %v1485
      %1487 = vmatmul.bf16.gmra.mxu0 %v1423
      %v1488 = vpop.f32.mrf.mxu0
      %v1489 = vadd.f32 0.0, %v1488
      %v1490 = vpop.f32.mrf.mxu0
      %v1491 = vadd.f32 0.0, %v1490
      %1492 = vmatmul.bf16.gmra.mxu0 %v1425
      %v1493 = vpop.f32.mrf.mxu0
      %v1494 = vadd.f32 0.0, %v1493
      %v1495 = vpop.f32.mrf.mxu0
      %v1496 = vadd.f32 0.0, %v1495
      %1497 = vmatmul.bf16.gmra.mxu0 %v1427
      %v1498 = vpop.f32.mrf.mxu0
      %v1499 = vadd.f32 0.0, %v1498
      %v1500 = vpop.f32.mrf.mxu0
      %v1501 = vadd.f32 0.0, %v1500
      %1502 = vmatmul.bf16.gmra.mxu0 %v1429
      %v1503 = vpop.f32.mrf.mxu0
      %v1504 = vadd.f32 0.0, %v1503
      %v1505 = vpop.f32.mrf.mxu0
      %v1506 = vadd.f32 0.0, %v1505
      %1507 = vmatmul.bf16.gmra.mxu0 %v1431
      %v1508 = vpop.f32.mrf.mxu0
      %v1509 = vadd.f32 0.0, %v1508
      %v1510 = vpop.f32.mrf.mxu0
      %v1511 = vadd.f32 0.0, %v1510
      %1512 = vmatmul.bf16.gmra.mxu0 %v1433
      %v1513 = vpop.f32.mrf.mxu0
      %v1514 = vadd.f32 0.0, %v1513
      %v1515 = vpop.f32.mrf.mxu0
      %v1516 = vadd.f32 0.0, %v1515
      %1517 = vmatmul.bf16.gmra.mxu0 %v1435
      %v1518 = vpop.f32.mrf.mxu0
      %v1519 = vadd.f32 0.0, %v1518
      %v1520 = vpop.f32.mrf.mxu0
      %v1521 = vadd.f32 0.0, %v1520
      %1522 = vmatmul.bf16.gmra.mxu0 %v1437
      %v1523 = vpop.f32.mrf.mxu0
      %v1524 = vadd.f32 0.0, %v1523
      %v1525 = vpop.f32.mrf.mxu0
      %v1526 = vadd.f32 0.0, %v1525
      %1527 = vdwg.mxu0
      %1528 = vmatpush.bf16.msra.mxu0 %v736
      %1529 = vmatpush.bf16.msra.mxu0 %v735
      %1530 = vmatpush.bf16.msra.mxu0 %v734
      %1531 = vmatpush.bf16.msra.mxu0 %v733
      %1532 = vmatpush.bf16.msra.mxu0 %v732
      %1533 = vmatpush.bf16.msra.mxu0 %v731
      %1534 = vmatpush.bf16.msra.mxu0 %v730
      %1535 = vmatpush.bf16.msra.mxu0 %v729
      %1536 = vmatmul.bf16.gmra.mxu0 %v1408
      %v1537 = vpop.f32.mrf.mxu0
      %v1538 = vadd.f32 %v1449, %v1537
      %v1539 = vpop.f32.mrf.mxu0
      %v1540 = vadd.f32 %v1451, %v1539
      %1541 = vmatmul.bf16.gmra.mxu0 %v1410
      %v1542 = vpop.f32.mrf.mxu0
      %v1543 = vadd.f32 %v1454, %v1542
      %v1544 = vpop.f32.mrf.mxu0
      %v1545 = vadd.f32 %v1456, %v1544
      %1546 = vmatmul.bf16.gmra.mxu0 %v1412
      %v1547 = vpop.f32.mrf.mxu0
      %v1548 = vadd.f32 %v1459, %v1547
      %v1549 = vpop.f32.mrf.mxu0
      %v1550 = vadd.f32 %v1461, %v1549
      %1551 = vmatmul.bf16.gmra.mxu0 %v1414
      %v1552 = vpop.f32.mrf.mxu0
      %v1553 = vadd.f32 %v1464, %v1552
      %v1554 = vpop.f32.mrf.mxu0
      %v1555 = vadd.f32 %v1466, %v1554
      %1556 = vmatmul.bf16.gmra.mxu0 %v1416
      %v1557 = vpop.f32.mrf.mxu0
      %v1558 = vadd.f32 %v1469, %v1557
      %v1559 = vpop.f32.mrf.mxu0
      %v1560 = vadd.f32 %v1471, %v1559
      %1561 = vmatmul.bf16.gmra.mxu0 %v1418
      %v1562 = vpop.f32.mrf.mxu0
      %v1563 = vadd.f32 %v1474, %v1562
      %v1564 = vpop.f32.mrf.mxu0
      %v1565 = vadd.f32 %v1476, %v1564
      %1566 = vmatmul.bf16.gmra.mxu0 %v1420
      %v1567 = vpop.f32.mrf.mxu0
      %v1568 = vadd.f32 %v1479, %v1567
      %v1569 = vpop.f32.mrf.mxu0
      %v1570 = vadd.f32 %v1481, %v1569
      %1571 = vmatmul.bf16.gmra.mxu0 %v1422
      %v1572 = vpop.f32.mrf.mxu0
      %v1573 = vadd.f32 %v1484, %v1572
      %v1574 = vpop.f32.mrf.mxu0
      %v1575 = vadd.f32 %v1486, %v1574
      %1576 = vmatmul.bf16.gmra.mxu0 %v1424
      %v1577 = vpop.f32.mrf.mxu0
      %v1578 = vadd.f32 %v1489, %v1577
      %v1579 = vpop.f32.mrf.mxu0
      %v1580 = vadd.f32 %v1491, %v1579
      %1581 = vmatmul.bf16.gmra.mxu0 %v1426
      %v1582 = vpop.f32.mrf.mxu0
      %v1583 = vadd.f32 %v1494, %v1582
      %v1584 = vpop.f32.mrf.mxu0
      %v1585 = vadd.f32 %v1496, %v1584
      %1586 = vmatmul.bf16.gmra.mxu0 %v1428
      %v1587 = vpop.f32.mrf.mxu0
      %v1588 = vadd.f32 %v1499, %v1587
      %v1589 = vpop.f32.mrf.mxu0
      %v1590 = vadd.f32 %v1501, %v1589
      %1591 = vmatmul.bf16.gmra.mxu0 %v1430
      %v1592 = vpop.f32.mrf.mxu0
      %v1593 = vadd.f32 %v1504, %v1592
      %v1594 = vpop.f32.mrf.mxu0
      %v1595 = vadd.f32 %v1506, %v1594
      %1596 = vmatmul.bf16.gmra.mxu0 %v1432
      %v1597 = vpop.f32.mrf.mxu0
      %v1598 = vadd.f32 %v1509, %v1597
      %v1599 = vpop.f32.mrf.mxu0
      %v1600 = vadd.f32 %v1511, %v1599
      %1601 = vmatmul.bf16.gmra.mxu0 %v1434
      %v1602 = vpop.f32.mrf.mxu0
      %v1603 = vadd.f32 %v1514, %v1602
      %v1604 = vpop.f32.mrf.mxu0
      %v1605 = vadd.f32 %v1516, %v1604
      %1606 = vmatmul.bf16.gmra.mxu0 %v1436
      %v1607 = vpop.f32.mrf.mxu0
      %v1608 = vadd.f32 %v1519, %v1607
      %v1609 = vpop.f32.mrf.mxu0
      %v1610 = vadd.f32 %v1521, %v1609
      %1611 = vmatmul.bf16.gmra.mxu0 %v1438
      %v1612 = vpop.f32.mrf.mxu0
      %v1613 = vadd.f32 %v1524, %v1612
      %v1614 = vpop.f32.mrf.mxu0
      %v1615 = vadd.f32 %v1526, %v1614
      %1616 = vdwg.mxu0
      %v1617 = vmul.f32 %v1538, %v1375
      %v1618 = vmul.f32 %v1540, %v1376
      %v1619 = vmul.f32 %v1543, %v1377
      %v1620 = vmul.f32 %v1545, %v1378
      %v1621 = vmul.f32 %v1548, %v1379
      %v1622 = vmul.f32 %v1550, %v1380
      %v1623 = vmul.f32 %v1553, %v1381
      %v1624 = vmul.f32 %v1555, %v1382
      %v1625 = vmul.f32 %v1558, %v1383
      %v1626 = vmul.f32 %v1560, %v1384
      %v1627 = vmul.f32 %v1563, %v1385
      %v1628 = vmul.f32 %v1565, %v1386
      %v1629 = vmul.f32 %v1568, %v1387
      %v1630 = vmul.f32 %v1570, %v1388
      %v1631 = vmul.f32 %v1573, %v1389
      %v1632 = vmul.f32 %v1575, %v1390
      %v1633 = vmul.f32 %v1578, %v1391
      %v1634 = vmul.f32 %v1580, %v1392
      %v1635 = vmul.f32 %v1583, %v1393
      %v1636 = vmul.f32 %v1585, %v1394
      %v1637 = vmul.f32 %v1588, %v1395
      %v1638 = vmul.f32 %v1590, %v1396
      %v1639 = vmul.f32 %v1593, %v1397
      %v1640 = vmul.f32 %v1595, %v1398
      %v1641 = vmul.f32 %v1598, %v1399
      %v1642 = vmul.f32 %v1600, %v1400
      %v1643 = vmul.f32 %v1603, %v1401
      %v1644 = vmul.f32 %v1605, %v1402
      %v1645 = vmul.f32 %v1608, %v1403
      %v1646 = vmul.f32 %v1610, %v1404
      %v1647 = vmul.f32 %v1613, %v1405
      %v1648 = vmul.f32 %v1615, %v1406
      %v1649 = vpack.c.bf16 %v508, %v505
      %v1650 = vpack.c.bf16 %v597, %v594
      %v1651 = vpack.c.bf16 %v514, %v511
      %v1652 = vpack.c.bf16 %v603, %v600
      %1653 = vxpose.binary.xlu0.c.b16.start [1/16] %v1650, %v1649, 128
      %1654 = vxpose.binary.xlu0.c.b16.cont [2/16] %v1652, %v1651, 128
      %1655 = vxpose.binary.xlu0.c.b16.cont [3/16] 0, 0, 128
      %1656 = vxpose.binary.xlu0.c.b16.cont [4/16] 0, 0, 128
      %1657 = vxpose.binary.xlu0.c.b16.cont [5/16] 0, 0, 128
      %1658 = vxpose.binary.xlu0.c.b16.cont [6/16] 0, 0, 128
      %1659 = vxpose.binary.xlu0.c.b16.cont [7/16] 0, 0, 128
      %1660 = vxpose.binary.xlu0.c.b16.end [8/16] 0, 0, 128
      %v1661 = vpop.trf.xlu0
      %v1662 = vpop.trf.xlu0
      %v1663 = vpop.trf.xlu0
      %v1664 = vpop.trf.xlu0
      %v1665 = vpop.trf.xlu0
      %v1666 = vpop.trf.xlu0
      %v1667 = vpop.trf.xlu0
      %v1668 = vpop.trf.xlu0
      %v1669 = vpop.trf.xlu0
      %v1670 = vpop.trf.xlu0
      %v1671 = vpop.trf.xlu0
      %v1672 = vpop.trf.xlu0
      %v1673 = vpop.trf.xlu0
      %v1674 = vpop.trf.xlu0
      %v1675 = vpop.trf.xlu0
      %v1676 = vpop.trf.xlu0
      %v1678 = vsel %vm402, %v1661, 0
      %v1681 = vsel %vm402, %v1663, 0
      %v1684 = vsel %vm402, %v1665, 0
      %v1687 = vsel %vm402, %v1667, 0
      %v1690 = vsel %vm402, %v1669, 0
      %v1693 = vsel %vm402, %v1671, 0
      %v1696 = vsel %vm402, %v1673, 0
      %v1699 = vsel %vm402, %v1675, 0
      %v1702 = vsel %vm402, %v1662, 0
      %v1705 = vsel %vm402, %v1664, 0
      %v1708 = vsel %vm402, %v1666, 0
      %v1711 = vsel %vm402, %v1668, 0
      %v1714 = vsel %vm402, %v1670, 0
      %v1717 = vsel %vm402, %v1672, 0
      %v1720 = vsel %vm402, %v1674, 0
      %v1723 = vsel %vm402, %v1676, 0
      %1725 = vmatpush.bf16.msra.mxu0 0
      %1726 = vmatpush.bf16.msra.mxu0 0
      %1727 = vmatpush.bf16.msra.mxu0 0
      %1728 = vmatpush.bf16.msra.mxu0 0
      %1729 = vmatpush.bf16.msra.mxu0 0
      %1730 = vmatpush.bf16.msra.mxu0 0
      %1731 = vmatpush.bf16.msra.mxu0 %v655
      %1732 = vmatpush.bf16.msra.mxu0 %v653
      %1733 = vmatmul.bf16.gmra.mxu0 %v1678
      %v1734 = vpop.f32.mrf.mxu0
      %v1735 = vadd.f32 0.0, %v1734
      %v1736 = vpop.f32.mrf.mxu0
      %v1737 = vadd.f32 0.0, %v1736
      %1738 = vmatmul.bf16.gmra.mxu0 %v1681
      %v1739 = vpop.f32.mrf.mxu0
      %v1740 = vadd.f32 0.0, %v1739
      %v1741 = vpop.f32.mrf.mxu0
      %v1742 = vadd.f32 0.0, %v1741
      %1743 = vmatmul.bf16.gmra.mxu0 %v1684
      %v1744 = vpop.f32.mrf.mxu0
      %v1745 = vadd.f32 0.0, %v1744
      %v1746 = vpop.f32.mrf.mxu0
      %v1747 = vadd.f32 0.0, %v1746
      %1748 = vmatmul.bf16.gmra.mxu0 %v1687
      %v1749 = vpop.f32.mrf.mxu0
      %v1750 = vadd.f32 0.0, %v1749
      %v1751 = vpop.f32.mrf.mxu0
      %v1752 = vadd.f32 0.0, %v1751
      %1753 = vmatmul.bf16.gmra.mxu0 %v1690
      %v1754 = vpop.f32.mrf.mxu0
      %v1755 = vadd.f32 0.0, %v1754
      %v1756 = vpop.f32.mrf.mxu0
      %v1757 = vadd.f32 0.0, %v1756
      %1758 = vmatmul.bf16.gmra.mxu0 %v1693
      %v1759 = vpop.f32.mrf.mxu0
      %v1760 = vadd.f32 0.0, %v1759
      %v1761 = vpop.f32.mrf.mxu0
      %v1762 = vadd.f32 0.0, %v1761
      %1763 = vmatmul.bf16.gmra.mxu0 %v1696
      %v1764 = vpop.f32.mrf.mxu0
      %v1765 = vadd.f32 0.0, %v1764
      %v1766 = vpop.f32.mrf.mxu0
      %v1767 = vadd.f32 0.0, %v1766
      %1768 = vmatmul.bf16.gmra.mxu0 %v1699
      %v1769 = vpop.f32.mrf.mxu0
      %v1770 = vadd.f32 0.0, %v1769
      %v1771 = vpop.f32.mrf.mxu0
      %v1772 = vadd.f32 0.0, %v1771
      %1773 = vmatmul.bf16.gmra.mxu0 %v1702
      %v1774 = vpop.f32.mrf.mxu0
      %v1775 = vadd.f32 0.0, %v1774
      %v1776 = vpop.f32.mrf.mxu0
      %v1777 = vadd.f32 0.0, %v1776
      %1778 = vmatmul.bf16.gmra.mxu0 %v1705
      %v1779 = vpop.f32.mrf.mxu0
      %v1780 = vadd.f32 0.0, %v1779
      %v1781 = vpop.f32.mrf.mxu0
      %v1782 = vadd.f32 0.0, %v1781
      %1783 = vmatmul.bf16.gmra.mxu0 %v1708
      %v1784 = vpop.f32.mrf.mxu0
      %v1785 = vadd.f32 0.0, %v1784
      %v1786 = vpop.f32.mrf.mxu0
      %v1787 = vadd.f32 0.0, %v1786
      %1788 = vmatmul.bf16.gmra.mxu0 %v1711
      %v1789 = vpop.f32.mrf.mxu0
      %v1790 = vadd.f32 0.0, %v1789
      %v1791 = vpop.f32.mrf.mxu0
      %v1792 = vadd.f32 0.0, %v1791
      %1793 = vmatmul.bf16.gmra.mxu0 %v1714
      %v1794 = vpop.f32.mrf.mxu0
      %v1795 = vadd.f32 0.0, %v1794
      %v1796 = vpop.f32.mrf.mxu0
      %v1797 = vadd.f32 0.0, %v1796
      %1798 = vmatmul.bf16.gmra.mxu0 %v1717
      %v1799 = vpop.f32.mrf.mxu0
      %v1800 = vadd.f32 0.0, %v1799
      %v1801 = vpop.f32.mrf.mxu0
      %v1802 = vadd.f32 0.0, %v1801
      %1803 = vmatmul.bf16.gmra.mxu0 %v1720
      %v1804 = vpop.f32.mrf.mxu0
      %v1805 = vadd.f32 0.0, %v1804
      %v1806 = vpop.f32.mrf.mxu0
      %v1807 = vadd.f32 0.0, %v1806
      %1808 = vmatmul.bf16.gmra.mxu0 %v1723
      %v1809 = vpop.f32.mrf.mxu0
      %v1810 = vadd.f32 0.0, %v1809
      %v1811 = vpop.f32.mrf.mxu0
      %v1812 = vadd.f32 0.0, %v1811
      %1813 = vdwg.mxu0
      %1814 = vmatpush.bf16.msra.mxu0 0
      %1815 = vmatpush.bf16.msra.mxu0 0
      %1816 = vmatpush.bf16.msra.mxu0 0
      %1817 = vmatpush.bf16.msra.mxu0 0
      %1818 = vmatpush.bf16.msra.mxu0 0
      %1819 = vmatpush.bf16.msra.mxu0 0
      %1820 = vmatpush.bf16.msra.mxu0 %v656
      %1821 = vmatpush.bf16.msra.mxu0 %v654
      %1822 = vmatmul.bf16.gmra.mxu0 %v1678
      %v1823 = vpop.f32.mrf.mxu0
      %v1824 = vadd.f32 0.0, %v1823
      %v1825 = vpop.f32.mrf.mxu0
      %v1826 = vadd.f32 0.0, %v1825
      %1827 = vmatmul.bf16.gmra.mxu0 %v1681
      %v1828 = vpop.f32.mrf.mxu0
      %v1829 = vadd.f32 0.0, %v1828
      %v1830 = vpop.f32.mrf.mxu0
      %v1831 = vadd.f32 0.0, %v1830
      %1832 = vmatmul.bf16.gmra.mxu0 %v1684
      %v1833 = vpop.f32.mrf.mxu0
      %v1834 = vadd.f32 0.0, %v1833
      %v1835 = vpop.f32.mrf.mxu0
      %v1836 = vadd.f32 0.0, %v1835
      %1837 = vmatmul.bf16.gmra.mxu0 %v1687
      %v1838 = vpop.f32.mrf.mxu0
      %v1839 = vadd.f32 0.0, %v1838
      %v1840 = vpop.f32.mrf.mxu0
      %v1841 = vadd.f32 0.0, %v1840
      %1842 = vmatmul.bf16.gmra.mxu0 %v1690
      %v1843 = vpop.f32.mrf.mxu0
      %v1844 = vadd.f32 0.0, %v1843
      %v1845 = vpop.f32.mrf.mxu0
      %v1846 = vadd.f32 0.0, %v1845
      %1847 = vmatmul.bf16.gmra.mxu0 %v1693
      %v1848 = vpop.f32.mrf.mxu0
      %v1849 = vadd.f32 0.0, %v1848
      %v1850 = vpop.f32.mrf.mxu0
      %v1851 = vadd.f32 0.0, %v1850
      %1852 = vmatmul.bf16.gmra.mxu0 %v1696
      %v1853 = vpop.f32.mrf.mxu0
      %v1854 = vadd.f32 0.0, %v1853
      %v1855 = vpop.f32.mrf.mxu0
      %v1856 = vadd.f32 0.0, %v1855
      %1857 = vmatmul.bf16.gmra.mxu0 %v1699
      %v1858 = vpop.f32.mrf.mxu0
      %v1859 = vadd.f32 0.0, %v1858
      %v1860 = vpop.f32.mrf.mxu0
      %v1861 = vadd.f32 0.0, %v1860
      %1862 = vmatmul.bf16.gmra.mxu0 %v1702
      %v1863 = vpop.f32.mrf.mxu0
      %v1864 = vadd.f32 0.0, %v1863
      %v1865 = vpop.f32.mrf.mxu0
      %v1866 = vadd.f32 0.0, %v1865
      %1867 = vmatmul.bf16.gmra.mxu0 %v1705
      %v1868 = vpop.f32.mrf.mxu0
      %v1869 = vadd.f32 0.0, %v1868
      %v1870 = vpop.f32.mrf.mxu0
      %v1871 = vadd.f32 0.0, %v1870
      %1872 = vmatmul.bf16.gmra.mxu0 %v1708
      %v1873 = vpop.f32.mrf.mxu0
      %v1874 = vadd.f32 0.0, %v1873
      %v1875 = vpop.f32.mrf.mxu0
      %v1876 = vadd.f32 0.0, %v1875
      %1877 = vmatmul.bf16.gmra.mxu0 %v1711
      %v1878 = vpop.f32.mrf.mxu0
      %v1879 = vadd.f32 0.0, %v1878
      %v1880 = vpop.f32.mrf.mxu0
      %v1881 = vadd.f32 0.0, %v1880
      %1882 = vmatmul.bf16.gmra.mxu0 %v1714
      %v1883 = vpop.f32.mrf.mxu0
      %v1884 = vadd.f32 0.0, %v1883
      %v1885 = vpop.f32.mrf.mxu0
      %v1886 = vadd.f32 0.0, %v1885
      %1887 = vmatmul.bf16.gmra.mxu0 %v1717
      %v1888 = vpop.f32.mrf.mxu0
      %v1889 = vadd.f32 0.0, %v1888
      %v1890 = vpop.f32.mrf.mxu0
      %v1891 = vadd.f32 0.0, %v1890
      %1892 = vmatmul.bf16.gmra.mxu0 %v1720
      %v1893 = vpop.f32.mrf.mxu0
      %v1894 = vadd.f32 0.0, %v1893
      %v1895 = vpop.f32.mrf.mxu0
      %v1896 = vadd.f32 0.0, %v1895
      %1897 = vmatmul.bf16.gmra.mxu0 %v1723
      %v1898 = vpop.f32.mrf.mxu0
      %v1899 = vadd.f32 0.0, %v1898
      %v1900 = vpop.f32.mrf.mxu0
      %v1901 = vadd.f32 0.0, %v1900
      %1902 = vdwg.mxu0
      %v1903 = vmax.f32 %v1735, %v1824
      %1904 = vmax.xlane.f32.xlu0 %v1903
      %v1905 = vpop.xlane.xlu0 %1904
      %v1906 = vmax.f32 %v1737, %v1826
      %1907 = vmax.xlane.f32.xlu0 %v1906
      %v1908 = vpop.xlane.xlu0 %1907
      %v1909 = vmax.f32 %v1740, %v1829
      %1910 = vmax.xlane.f32.xlu0 %v1909
      %v1911 = vpop.xlane.xlu0 %1910
      %v1912 = vmax.f32 %v1742, %v1831
      %1913 = vmax.xlane.f32.xlu0 %v1912
      %v1914 = vpop.xlane.xlu0 %1913
      %v1915 = vmax.f32 %v1745, %v1834
      %1916 = vmax.xlane.f32.xlu0 %v1915
      %v1917 = vpop.xlane.xlu0 %1916
      %v1918 = vmax.f32 %v1747, %v1836
      %1919 = vmax.xlane.f32.xlu0 %v1918
      %v1920 = vpop.xlane.xlu0 %1919
      %v1921 = vmax.f32 %v1750, %v1839
      %1922 = vmax.xlane.f32.xlu0 %v1921
      %v1923 = vpop.xlane.xlu0 %1922
      %v1924 = vmax.f32 %v1752, %v1841
      %1925 = vmax.xlane.f32.xlu0 %v1924
      %v1926 = vpop.xlane.xlu0 %1925
      %v1927 = vmax.f32 %v1755, %v1844
      %1928 = vmax.xlane.f32.xlu0 %v1927
      %v1929 = vpop.xlane.xlu0 %1928
      %v1930 = vmax.f32 %v1757, %v1846
      %1931 = vmax.xlane.f32.xlu0 %v1930
      %v1932 = vpop.xlane.xlu0 %1931
      %v1933 = vmax.f32 %v1760, %v1849
      %1934 = vmax.xlane.f32.xlu0 %v1933
      %v1935 = vpop.xlane.xlu0 %1934
      %v1936 = vmax.f32 %v1762, %v1851
      %1937 = vmax.xlane.f32.xlu0 %v1936
      %v1938 = vpop.xlane.xlu0 %1937
      %v1939 = vmax.f32 %v1765, %v1854
      %1940 = vmax.xlane.f32.xlu0 %v1939
      %v1941 = vpop.xlane.xlu0 %1940
      %v1942 = vmax.f32 %v1767, %v1856
      %1943 = vmax.xlane.f32.xlu0 %v1942
      %v1944 = vpop.xlane.xlu0 %1943
      %v1945 = vmax.f32 %v1770, %v1859
      %1946 = vmax.xlane.f32.xlu0 %v1945
      %v1947 = vpop.xlane.xlu0 %1946
      %v1948 = vmax.f32 %v1772, %v1861
      %1949 = vmax.xlane.f32.xlu0 %v1948
      %v1950 = vpop.xlane.xlu0 %1949
      %v1951 = vmax.f32 %v1775, %v1864
      %1952 = vmax.xlane.f32.xlu0 %v1951
      %v1953 = vpop.xlane.xlu0 %1952
      %v1954 = vmax.f32 %v1777, %v1866
      %1955 = vmax.xlane.f32.xlu0 %v1954
      %v1956 = vpop.xlane.xlu0 %1955
      %v1957 = vmax.f32 %v1780, %v1869
      %1958 = vmax.xlane.f32.xlu0 %v1957
      %v1959 = vpop.xlane.xlu0 %1958
      %v1960 = vmax.f32 %v1782, %v1871
      %1961 = vmax.xlane.f32.xlu0 %v1960
      %v1962 = vpop.xlane.xlu0 %1961
      %v1963 = vmax.f32 %v1785, %v1874
      %1964 = vmax.xlane.f32.xlu0 %v1963
      %v1965 = vpop.xlane.xlu0 %1964
      %v1966 = vmax.f32 %v1787, %v1876
      %1967 = vmax.xlane.f32.xlu0 %v1966
      %v1968 = vpop.xlane.xlu0 %1967
      %v1969 = vmax.f32 %v1790, %v1879
      %1970 = vmax.xlane.f32.xlu0 %v1969
      %v1971 = vpop.xlane.xlu0 %1970
      %v1972 = vmax.f32 %v1792, %v1881
      %1973 = vmax.xlane.f32.xlu0 %v1972
      %v1974 = vpop.xlane.xlu0 %1973
      %v1975 = vmax.f32 %v1795, %v1884
      %1976 = vmax.xlane.f32.xlu0 %v1975
      %v1977 = vpop.xlane.xlu0 %1976
      %v1978 = vmax.f32 %v1797, %v1886
      %1979 = vmax.xlane.f32.xlu0 %v1978
      %v1980 = vpop.xlane.xlu0 %1979
      %v1981 = vmax.f32 %v1800, %v1889
      %1982 = vmax.xlane.f32.xlu0 %v1981
      %v1983 = vpop.xlane.xlu0 %1982
      %v1984 = vmax.f32 %v1802, %v1891
      %1985 = vmax.xlane.f32.xlu0 %v1984
      %v1986 = vpop.xlane.xlu0 %1985
      %v1987 = vmax.f32 %v1805, %v1894
      %1988 = vmax.xlane.f32.xlu0 %v1987
      %v1989 = vpop.xlane.xlu0 %1988
      %v1990 = vmax.f32 %v1807, %v1896
      %1991 = vmax.xlane.f32.xlu0 %v1990
      %v1992 = vpop.xlane.xlu0 %1991
      %v1993 = vmax.f32 %v1810, %v1899
      %1994 = vmax.xlane.f32.xlu0 %v1993
      %v1995 = vpop.xlane.xlu0 %1994
      %v1996 = vmax.f32 %v1812, %v1901
      %1997 = vmax.xlane.f32.xlu0 %v1996
      %v1998 = vpop.xlane.xlu0 %1997
      %v1999 = vsub.f32 %v1735, %v1905
      %v2000 = vsub.f32 %v1824, %v1905
      %v2001 = vsub.f32 %v1737, %v1908
      %v2002 = vsub.f32 %v1826, %v1908
      %v2003 = vsub.f32 %v1740, %v1911
      %v2004 = vsub.f32 %v1829, %v1911
      %v2005 = vsub.f32 %v1742, %v1914
      %v2006 = vsub.f32 %v1831, %v1914
      %v2007 = vsub.f32 %v1745, %v1917
      %v2008 = vsub.f32 %v1834, %v1917
      %v2009 = vsub.f32 %v1747, %v1920
      %v2010 = vsub.f32 %v1836, %v1920
      %v2011 = vsub.f32 %v1750, %v1923
      %v2012 = vsub.f32 %v1839, %v1923
      %v2013 = vsub.f32 %v1752, %v1926
      %v2014 = vsub.f32 %v1841, %v1926
      %v2015 = vsub.f32 %v1755, %v1929
      %v2016 = vsub.f32 %v1844, %v1929
      %v2017 = vsub.f32 %v1757, %v1932
      %v2018 = vsub.f32 %v1846, %v1932
      %v2019 = vsub.f32 %v1760, %v1935
      %v2020 = vsub.f32 %v1849, %v1935
      %v2021 = vsub.f32 %v1762, %v1938
      %v2022 = vsub.f32 %v1851, %v1938
      %v2023 = vsub.f32 %v1765, %v1941
      %v2024 = vsub.f32 %v1854, %v1941
      %v2025 = vsub.f32 %v1767, %v1944
      %v2026 = vsub.f32 %v1856, %v1944
      %v2027 = vsub.f32 %v1770, %v1947
      %v2028 = vsub.f32 %v1859, %v1947
      %v2029 = vsub.f32 %v1772, %v1950
      %v2030 = vsub.f32 %v1861, %v1950
      %v2031 = vsub.f32 %v1775, %v1953
      %v2032 = vsub.f32 %v1864, %v1953
      %v2033 = vsub.f32 %v1777, %v1956
      %v2034 = vsub.f32 %v1866, %v1956
      %v2035 = vsub.f32 %v1780, %v1959
      %v2036 = vsub.f32 %v1869, %v1959
      %v2037 = vsub.f32 %v1782, %v1962
      %v2038 = vsub.f32 %v1871, %v1962
      %v2039 = vsub.f32 %v1785, %v1965
      %v2040 = vsub.f32 %v1874, %v1965
      %v2041 = vsub.f32 %v1787, %v1968
      %v2042 = vsub.f32 %v1876, %v1968
      %v2043 = vsub.f32 %v1790, %v1971
      %v2044 = vsub.f32 %v1879, %v1971
      %v2045 = vsub.f32 %v1792, %v1974
      %v2046 = vsub.f32 %v1881, %v1974
      %v2047 = vsub.f32 %v1795, %v1977
      %v2048 = vsub.f32 %v1884, %v1977
      %v2049 = vsub.f32 %v1797, %v1980
      %v2050 = vsub.f32 %v1886, %v1980
      %v2051 = vsub.f32 %v1800, %v1983
      %v2052 = vsub.f32 %v1889, %v1983
      %v2053 = vsub.f32 %v1802, %v1986
      %v2054 = vsub.f32 %v1891, %v1986
      %v2055 = vsub.f32 %v1805, %v1989
      %v2056 = vsub.f32 %v1894, %v1989
      %v2057 = vsub.f32 %v1807, %v1992
      %v2058 = vsub.f32 %v1896, %v1992
      %v2059 = vsub.f32 %v1810, %v1995
      %v2060 = vsub.f32 %v1899, %v1995
      %v2061 = vsub.f32 %v1812, %v1998
      %v2062 = vsub.f32 %v1901, %v1998
      %v2063 = vmul.f32 %v1999, 1.442695
      %v2064 = vpow.pop %v2063
      %v2065 = vmul.f32 %v2000, 1.442695
      %v2066 = vpow.pop %v2065
      %v2067 = vmul.f32 %v2001, 1.442695
      %v2068 = vpow.pop %v2067
      %v2069 = vmul.f32 %v2002, 1.442695
      %v2070 = vpow.pop %v2069
      %v2071 = vmul.f32 %v2003, 1.442695
      %v2072 = vpow.pop %v2071
      %v2073 = vmul.f32 %v2004, 1.442695
      %v2074 = vpow.pop %v2073
      %v2075 = vmul.f32 %v2005, 1.442695
      %v2076 = vpow.pop %v2075
      %v2077 = vmul.f32 %v2006, 1.442695
      %v2078 = vpow.pop %v2077
      %v2079 = vmul.f32 %v2007, 1.442695
      %v2080 = vpow.pop %v2079
      %v2081 = vmul.f32 %v2008, 1.442695
      %v2082 = vpow.pop %v2081
      %v2083 = vmul.f32 %v2009, 1.442695
      %v2084 = vpow.pop %v2083
      %v2085 = vmul.f32 %v2010, 1.442695
      %v2086 = vpow.pop %v2085
      %v2087 = vmul.f32 %v2011, 1.442695
      %v2088 = vpow.pop %v2087
      %v2089 = vmul.f32 %v2012, 1.442695
      %v2090 = vpow.pop %v2089
      %v2091 = vmul.f32 %v2013, 1.442695
      %v2092 = vpow.pop %v2091
      %v2093 = vmul.f32 %v2014, 1.442695
      %v2094 = vpow.pop %v2093
      %v2095 = vmul.f32 %v2015, 1.442695
      %v2096 = vpow.pop %v2095
      %v2097 = vmul.f32 %v2016, 1.442695
      %v2098 = vpow.pop %v2097
      %v2099 = vmul.f32 %v2017, 1.442695
      %v2100 = vpow.pop %v2099
      %v2101 = vmul.f32 %v2018, 1.442695
      %v2102 = vpow.pop %v2101
      %v2103 = vmul.f32 %v2019, 1.442695
      %v2104 = vpow.pop %v2103
      %v2105 = vmul.f32 %v2020, 1.442695
      %v2106 = vpow.pop %v2105
      %v2107 = vmul.f32 %v2021, 1.442695
      %v2108 = vpow.pop %v2107
      %v2109 = vmul.f32 %v2022, 1.442695
      %v2110 = vpow.pop %v2109
      %v2111 = vmul.f32 %v2023, 1.442695
      %v2112 = vpow.pop %v2111
      %v2113 = vmul.f32 %v2024, 1.442695
      %v2114 = vpow.pop %v2113
      %v2115 = vmul.f32 %v2025, 1.442695
      %v2116 = vpow.pop %v2115
      %v2117 = vmul.f32 %v2026, 1.442695
      %v2118 = vpow.pop %v2117
      %v2119 = vmul.f32 %v2027, 1.442695
      %v2120 = vpow.pop %v2119
      %v2121 = vmul.f32 %v2028, 1.442695
      %v2122 = vpow.pop %v2121
      %v2123 = vmul.f32 %v2029, 1.442695
      %v2124 = vpow.pop %v2123
      %v2125 = vmul.f32 %v2030, 1.442695
      %v2126 = vpow.pop %v2125
      %v2127 = vmul.f32 %v2031, 1.442695
      %v2128 = vpow.pop %v2127
      %v2129 = vmul.f32 %v2032, 1.442695
      %v2130 = vpow.pop %v2129
      %v2131 = vmul.f32 %v2033, 1.442695
      %v2132 = vpow.pop %v2131
      %v2133 = vmul.f32 %v2034, 1.442695
      %v2134 = vpow.pop %v2133
      %v2135 = vmul.f32 %v2035, 1.442695
      %v2136 = vpow.pop %v2135
      %v2137 = vmul.f32 %v2036, 1.442695
      %v2138 = vpow.pop %v2137
      %v2139 = vmul.f32 %v2037, 1.442695
      %v2140 = vpow.pop %v2139
      %v2141 = vmul.f32 %v2038, 1.442695
      %v2142 = vpow.pop %v2141
      %v2143 = vmul.f32 %v2039, 1.442695
      %v2144 = vpow.pop %v2143
      %v2145 = vmul.f32 %v2040, 1.442695
      %v2146 = vpow.pop %v2145
      %v2147 = vmul.f32 %v2041, 1.442695
      %v2148 = vpow.pop %v2147
      %v2149 = vmul.f32 %v2042, 1.442695
      %v2150 = vpow.pop %v2149
      %v2151 = vmul.f32 %v2043, 1.442695
      %v2152 = vpow.pop %v2151
      %v2153 = vmul.f32 %v2044, 1.442695
      %v2154 = vpow.pop %v2153
      %v2155 = vmul.f32 %v2045, 1.442695
      %v2156 = vpow.pop %v2155
      %v2157 = vmul.f32 %v2046, 1.442695
      %v2158 = vpow.pop %v2157
      %v2159 = vmul.f32 %v2047, 1.442695
      %v2160 = vpow.pop %v2159
      %v2161 = vmul.f32 %v2048, 1.442695
      %v2162 = vpow.pop %v2161
      %v2163 = vmul.f32 %v2049, 1.442695
      %v2164 = vpow.pop %v2163
      %v2165 = vmul.f32 %v2050, 1.442695
      %v2166 = vpow.pop %v2165
      %v2167 = vmul.f32 %v2051, 1.442695
      %v2168 = vpow.pop %v2167
      %v2169 = vmul.f32 %v2052, 1.442695
      %v2170 = vpow.pop %v2169
      %v2171 = vmul.f32 %v2053, 1.442695
      %v2172 = vpow.pop %v2171
      %v2173 = vmul.f32 %v2054, 1.442695
      %v2174 = vpow.pop %v2173
      %v2175 = vmul.f32 %v2055, 1.442695
      %v2176 = vpow.pop %v2175
      %v2177 = vmul.f32 %v2056, 1.442695
      %v2178 = vpow.pop %v2177
      %v2179 = vmul.f32 %v2057, 1.442695
      %v2180 = vpow.pop %v2179
      %v2181 = vmul.f32 %v2058, 1.442695
      %v2182 = vpow.pop %v2181
      %v2183 = vmul.f32 %v2059, 1.442695
      %v2184 = vpow.pop %v2183
      %v2185 = vmul.f32 %v2060, 1.442695
      %v2186 = vpow.pop %v2185
      %v2187 = vmul.f32 %v2061, 1.442695
      %v2188 = vpow.pop %v2187
      %v2189 = vmul.f32 %v2062, 1.442695
      %v2190 = vpow.pop %v2189
      %v2191 = vadd.f32 %v2064, %v2066
      %2192 = vadd.xlane.f32.xlu0 %v2191
      %v2193 = vpop.xlane.xlu0 %2192
      %v2194 = vadd.f32 %v2068, %v2070
      %2195 = vadd.xlane.f32.xlu0 %v2194
      %v2196 = vpop.xlane.xlu0 %2195
      %v2197 = vadd.f32 %v2072, %v2074
      %2198 = vadd.xlane.f32.xlu0 %v2197
      %v2199 = vpop.xlane.xlu0 %2198
      %v2200 = vadd.f32 %v2076, %v2078
      %2201 = vadd.xlane.f32.xlu0 %v2200
      %v2202 = vpop.xlane.xlu0 %2201
      %v2203 = vadd.f32 %v2080, %v2082
      %2204 = vadd.xlane.f32.xlu0 %v2203
      %v2205 = vpop.xlane.xlu0 %2204
      %v2206 = vadd.f32 %v2084, %v2086
      %2207 = vadd.xlane.f32.xlu0 %v2206
      %v2208 = vpop.xlane.xlu0 %2207
      %v2209 = vadd.f32 %v2088, %v2090
      %2210 = vadd.xlane.f32.xlu0 %v2209
      %v2211 = vpop.xlane.xlu0 %2210
      %v2212 = vadd.f32 %v2092, %v2094
      %2213 = vadd.xlane.f32.xlu0 %v2212
      %v2214 = vpop.xlane.xlu0 %2213
      %v2215 = vadd.f32 %v2096, %v2098
      %2216 = vadd.xlane.f32.xlu0 %v2215
      %v2217 = vpop.xlane.xlu0 %2216
      %v2218 = vadd.f32 %v2100, %v2102
      %2219 = vadd.xlane.f32.xlu0 %v2218
      %v2220 = vpop.xlane.xlu0 %2219
      %v2221 = vadd.f32 %v2104, %v2106
      %2222 = vadd.xlane.f32.xlu0 %v2221
      %v2223 = vpop.xlane.xlu0 %2222
      %v2224 = vadd.f32 %v2108, %v2110
      %2225 = vadd.xlane.f32.xlu0 %v2224
      %v2226 = vpop.xlane.xlu0 %2225
      %v2227 = vadd.f32 %v2112, %v2114
      %2228 = vadd.xlane.f32.xlu0 %v2227
      %v2229 = vpop.xlane.xlu0 %2228
      %v2230 = vadd.f32 %v2116, %v2118
      %2231 = vadd.xlane.f32.xlu0 %v2230
      %v2232 = vpop.xlane.xlu0 %2231
      %v2233 = vadd.f32 %v2120, %v2122
      %2234 = vadd.xlane.f32.xlu0 %v2233
      %v2235 = vpop.xlane.xlu0 %2234
      %v2236 = vadd.f32 %v2124, %v2126
      %2237 = vadd.xlane.f32.xlu0 %v2236
      %v2238 = vpop.xlane.xlu0 %2237
      %v2239 = vadd.f32 %v2128, %v2130
      %2240 = vadd.xlane.f32.xlu0 %v2239
      %v2241 = vpop.xlane.xlu0 %2240
      %v2242 = vadd.f32 %v2132, %v2134
      %2243 = vadd.xlane.f32.xlu0 %v2242
      %v2244 = vpop.xlane.xlu0 %2243
      %v2245 = vadd.f32 %v2136, %v2138
      %2246 = vadd.xlane.f32.xlu0 %v2245
      %v2247 = vpop.xlane.xlu0 %2246
      %v2248 = vadd.f32 %v2140, %v2142
      %2249 = vadd.xlane.f32.xlu0 %v2248
      %v2250 = vpop.xlane.xlu0 %2249
      %v2251 = vadd.f32 %v2144, %v2146
      %2252 = vadd.xlane.f32.xlu0 %v2251
      %v2253 = vpop.xlane.xlu0 %2252
      %v2254 = vadd.f32 %v2148, %v2150
      %2255 = vadd.xlane.f32.xlu0 %v2254
      %v2256 = vpop.xlane.xlu0 %2255
      %v2257 = vadd.f32 %v2152, %v2154
      %2258 = vadd.xlane.f32.xlu0 %v2257
      %v2259 = vpop.xlane.xlu0 %2258
      %v2260 = vadd.f32 %v2156, %v2158
      %2261 = vadd.xlane.f32.xlu0 %v2260
      %v2262 = vpop.xlane.xlu0 %2261
      %v2263 = vadd.f32 %v2160, %v2162
      %2264 = vadd.xlane.f32.xlu0 %v2263
      %v2265 = vpop.xlane.xlu0 %2264
      %v2266 = vadd.f32 %v2164, %v2166
      %2267 = vadd.xlane.f32.xlu0 %v2266
      %v2268 = vpop.xlane.xlu0 %2267
      %v2269 = vadd.f32 %v2168, %v2170
      %2270 = vadd.xlane.f32.xlu0 %v2269
      %v2271 = vpop.xlane.xlu0 %2270
      %v2272 = vadd.f32 %v2172, %v2174
      %2273 = vadd.xlane.f32.xlu0 %v2272
      %v2274 = vpop.xlane.xlu0 %2273
      %v2275 = vadd.f32 %v2176, %v2178
      %2276 = vadd.xlane.f32.xlu0 %v2275
      %v2277 = vpop.xlane.xlu0 %2276
      %v2278 = vadd.f32 %v2180, %v2182
      %2279 = vadd.xlane.f32.xlu0 %v2278
      %v2280 = vpop.xlane.xlu0 %2279
      %v2281 = vadd.f32 %v2184, %v2186
      %2282 = vadd.xlane.f32.xlu0 %v2281
      %v2283 = vpop.xlane.xlu0 %2282
      %v2284 = vadd.f32 %v2188, %v2190
      %2285 = vadd.xlane.f32.xlu0 %v2284
      %v2286 = vpop.xlane.xlu0 %2285
      %v2287 = vrcp.pop %v2193
      %v2288 = vrcp.pop %v2196
      %v2289 = vrcp.pop %v2199
      %v2290 = vrcp.pop %v2202
      %v2291 = vrcp.pop %v2205
      %v2292 = vrcp.pop %v2208
      %v2293 = vrcp.pop %v2211
      %v2294 = vrcp.pop %v2214
      %v2295 = vrcp.pop %v2217
      %v2296 = vrcp.pop %v2220
      %v2297 = vrcp.pop %v2223
      %v2298 = vrcp.pop %v2226
      %v2299 = vrcp.pop %v2229
      %v2300 = vrcp.pop %v2232
      %v2301 = vrcp.pop %v2235
      %v2302 = vrcp.pop %v2238
      %v2303 = vrcp.pop %v2241
      %v2304 = vrcp.pop %v2244
      %v2305 = vrcp.pop %v2247
      %v2306 = vrcp.pop %v2250
      %v2307 = vrcp.pop %v2253
      %v2308 = vrcp.pop %v2256
      %v2309 = vrcp.pop %v2259
      %v2310 = vrcp.pop %v2262
      %v2311 = vrcp.pop %v2265
      %v2312 = vrcp.pop %v2268
      %v2313 = vrcp.pop %v2271
      %v2314 = vrcp.pop %v2274
      %v2315 = vrcp.pop %v2277
      %v2316 = vrcp.pop %v2280
      %v2317 = vrcp.pop %v2283
      %v2318 = vrcp.pop %v2286
      %v2319 = vpack.c.bf16 %v2068, %v2064
      %v2320 = vpack.c.bf16 %v2070, %v2066
      %v2321 = vpack.c.bf16 %v2076, %v2072
      %v2322 = vpack.c.bf16 %v2078, %v2074
      %v2323 = vpack.c.bf16 %v2084, %v2080
      %v2324 = vpack.c.bf16 %v2086, %v2082
      %v2325 = vpack.c.bf16 %v2092, %v2088
      %v2326 = vpack.c.bf16 %v2094, %v2090
      %v2327 = vpack.c.bf16 %v2100, %v2096
      %v2328 = vpack.c.bf16 %v2102, %v2098
      %v2329 = vpack.c.bf16 %v2108, %v2104
      %v2330 = vpack.c.bf16 %v2110, %v2106
      %v2331 = vpack.c.bf16 %v2116, %v2112
      %v2332 = vpack.c.bf16 %v2118, %v2114
      %v2333 = vpack.c.bf16 %v2124, %v2120
      %v2334 = vpack.c.bf16 %v2126, %v2122
      %v2335 = vpack.c.bf16 %v2132, %v2128
      %v2336 = vpack.c.bf16 %v2134, %v2130
      %v2337 = vpack.c.bf16 %v2140, %v2136
      %v2338 = vpack.c.bf16 %v2142, %v2138
      %v2339 = vpack.c.bf16 %v2148, %v2144
      %v2340 = vpack.c.bf16 %v2150, %v2146
      %v2341 = vpack.c.bf16 %v2156, %v2152
      %v2342 = vpack.c.bf16 %v2158, %v2154
      %v2343 = vpack.c.bf16 %v2164, %v2160
      %v2344 = vpack.c.bf16 %v2166, %v2162
      %v2345 = vpack.c.bf16 %v2172, %v2168
      %v2346 = vpack.c.bf16 %v2174, %v2170
      %v2347 = vpack.c.bf16 %v2180, %v2176
      %v2348 = vpack.c.bf16 %v2182, %v2178
      %v2349 = vpack.c.bf16 %v2188, %v2184
      %v2350 = vpack.c.bf16 %v2190, %v2186
      %2351 = vmatpush.bf16.msra.mxu0 %v728
      %2352 = vmatpush.bf16.msra.mxu0 %v727
      %2353 = vmatpush.bf16.msra.mxu0 %v726
      %2354 = vmatpush.bf16.msra.mxu0 %v725
      %2355 = vmatpush.bf16.msra.mxu0 %v724
      %2356 = vmatpush.bf16.msra.mxu0 %v723
      %2357 = vmatpush.bf16.msra.mxu0 %v722
      %2358 = vmatpush.bf16.msra.mxu0 %v721
      %2359 = vmatmul.bf16.gmra.mxu0 %v2319
      %v2360 = vpop.f32.mrf.mxu0
      %v2361 = vadd.f32 0.0, %v2360
      %v2362 = vpop.f32.mrf.mxu0
      %v2363 = vadd.f32 0.0, %v2362
      %2364 = vmatmul.bf16.gmra.mxu0 %v2321
      %v2365 = vpop.f32.mrf.mxu0
      %v2366 = vadd.f32 0.0, %v2365
      %v2367 = vpop.f32.mrf.mxu0
      %v2368 = vadd.f32 0.0, %v2367
      %2369 = vmatmul.bf16.gmra.mxu0 %v2323
      %v2370 = vpop.f32.mrf.mxu0
      %v2371 = vadd.f32 0.0, %v2370
      %v2372 = vpop.f32.mrf.mxu0
      %v2373 = vadd.f32 0.0, %v2372
      %2374 = vmatmul.bf16.gmra.mxu0 %v2325
      %v2375 = vpop.f32.mrf.mxu0
      %v2376 = vadd.f32 0.0, %v2375
      %v2377 = vpop.f32.mrf.mxu0
      %v2378 = vadd.f32 0.0, %v2377
      %2379 = vmatmul.bf16.gmra.mxu0 %v2327
      %v2380 = vpop.f32.mrf.mxu0
      %v2381 = vadd.f32 0.0, %v2380
      %v2382 = vpop.f32.mrf.mxu0
      %v2383 = vadd.f32 0.0, %v2382
      %2384 = vmatmul.bf16.gmra.mxu0 %v2329
      %v2385 = vpop.f32.mrf.mxu0
      %v2386 = vadd.f32 0.0, %v2385
      %v2387 = vpop.f32.mrf.mxu0
      %v2388 = vadd.f32 0.0, %v2387
      %2389 = vmatmul.bf16.gmra.mxu0 %v2331
      %v2390 = vpop.f32.mrf.mxu0
      %v2391 = vadd.f32 0.0, %v2390
      %v2392 = vpop.f32.mrf.mxu0
      %v2393 = vadd.f32 0.0, %v2392
      %2394 = vmatmul.bf16.gmra.mxu0 %v2333
      %v2395 = vpop.f32.mrf.mxu0
      %v2396 = vadd.f32 0.0, %v2395
      %v2397 = vpop.f32.mrf.mxu0
      %v2398 = vadd.f32 0.0, %v2397
      %2399 = vmatmul.bf16.gmra.mxu0 %v2335
      %v2400 = vpop.f32.mrf.mxu0
      %v2401 = vadd.f32 0.0, %v2400
      %v2402 = vpop.f32.mrf.mxu0
      %v2403 = vadd.f32 0.0, %v2402
      %2404 = vmatmul.bf16.gmra.mxu0 %v2337
      %v2405 = vpop.f32.mrf.mxu0
      %v2406 = vadd.f32 0.0, %v2405
      %v2407 = vpop.f32.mrf.mxu0
      %v2408 = vadd.f32 0.0, %v2407
      %2409 = vmatmul.bf16.gmra.mxu0 %v2339
      %v2410 = vpop.f32.mrf.mxu0
      %v2411 = vadd.f32 0.0, %v2410
      %v2412 = vpop.f32.mrf.mxu0
      %v2413 = vadd.f32 0.0, %v2412
      %2414 = vmatmul.bf16.gmra.mxu0 %v2341
      %v2415 = vpop.f32.mrf.mxu0
      %v2416 = vadd.f32 0.0, %v2415
      %v2417 = vpop.f32.mrf.mxu0
      %v2418 = vadd.f32 0.0, %v2417
      %2419 = vmatmul.bf16.gmra.mxu0 %v2343
      %v2420 = vpop.f32.mrf.mxu0
      %v2421 = vadd.f32 0.0, %v2420
      %v2422 = vpop.f32.mrf.mxu0
      %v2423 = vadd.f32 0.0, %v2422
      %2424 = vmatmul.bf16.gmra.mxu0 %v2345
      %v2425 = vpop.f32.mrf.mxu0
      %v2426 = vadd.f32 0.0, %v2425
      %v2427 = vpop.f32.mrf.mxu0
      %v2428 = vadd.f32 0.0, %v2427
      %2429 = vmatmul.bf16.gmra.mxu0 %v2347
      %v2430 = vpop.f32.mrf.mxu0
      %v2431 = vadd.f32 0.0, %v2430
      %v2432 = vpop.f32.mrf.mxu0
      %v2433 = vadd.f32 0.0, %v2432
      %2434 = vmatmul.bf16.gmra.mxu0 %v2349
      %v2435 = vpop.f32.mrf.mxu0
      %v2436 = vadd.f32 0.0, %v2435
      %v2437 = vpop.f32.mrf.mxu0
      %v2438 = vadd.f32 0.0, %v2437
      %2439 = vdwg.mxu0
      %2440 = vmatpush.bf16.msra.mxu0 %v736
      %2441 = vmatpush.bf16.msra.mxu0 %v735
      %2442 = vmatpush.bf16.msra.mxu0 %v734
      %2443 = vmatpush.bf16.msra.mxu0 %v733
      %2444 = vmatpush.bf16.msra.mxu0 %v732
      %2445 = vmatpush.bf16.msra.mxu0 %v731
      %2446 = vmatpush.bf16.msra.mxu0 %v730
      %2447 = vmatpush.bf16.msra.mxu0 %v729
      %2448 = vmatmul.bf16.gmra.mxu0 %v2320
      %v2449 = vpop.f32.mrf.mxu0
      %v2450 = vadd.f32 %v2361, %v2449
      %v2451 = vpop.f32.mrf.mxu0
      %v2452 = vadd.f32 %v2363, %v2451
      %2453 = vmatmul.bf16.gmra.mxu0 %v2322
      %v2454 = vpop.f32.mrf.mxu0
      %v2455 = vadd.f32 %v2366, %v2454
      %v2456 = vpop.f32.mrf.mxu0
      %v2457 = vadd.f32 %v2368, %v2456
      %2458 = vmatmul.bf16.gmra.mxu0 %v2324
      %v2459 = vpop.f32.mrf.mxu0
      %v2460 = vadd.f32 %v2371, %v2459
      %v2461 = vpop.f32.mrf.mxu0
      %v2462 = vadd.f32 %v2373, %v2461
      %2463 = vmatmul.bf16.gmra.mxu0 %v2326
      %v2464 = vpop.f32.mrf.mxu0
      %v2465 = vadd.f32 %v2376, %v2464
      %v2466 = vpop.f32.mrf.mxu0
      %v2467 = vadd.f32 %v2378, %v2466
      %2468 = vmatmul.bf16.gmra.mxu0 %v2328
      %v2469 = vpop.f32.mrf.mxu0
      %v2470 = vadd.f32 %v2381, %v2469
      %v2471 = vpop.f32.mrf.mxu0
      %v2472 = vadd.f32 %v2383, %v2471
      %2473 = vmatmul.bf16.gmra.mxu0 %v2330
      %v2474 = vpop.f32.mrf.mxu0
      %v2475 = vadd.f32 %v2386, %v2474
      %v2476 = vpop.f32.mrf.mxu0
      %v2477 = vadd.f32 %v2388, %v2476
      %2478 = vmatmul.bf16.gmra.mxu0 %v2332
      %v2479 = vpop.f32.mrf.mxu0
      %v2480 = vadd.f32 %v2391, %v2479
      %v2481 = vpop.f32.mrf.mxu0
      %v2482 = vadd.f32 %v2393, %v2481
      %2483 = vmatmul.bf16.gmra.mxu0 %v2334
      %v2484 = vpop.f32.mrf.mxu0
      %v2485 = vadd.f32 %v2396, %v2484
      %v2486 = vpop.f32.mrf.mxu0
      %v2487 = vadd.f32 %v2398, %v2486
      %2488 = vmatmul.bf16.gmra.mxu0 %v2336
      %v2489 = vpop.f32.mrf.mxu0
      %v2490 = vadd.f32 %v2401, %v2489
      %v2491 = vpop.f32.mrf.mxu0
      %v2492 = vadd.f32 %v2403, %v2491
      %2493 = vmatmul.bf16.gmra.mxu0 %v2338
      %v2494 = vpop.f32.mrf.mxu0
      %v2495 = vadd.f32 %v2406, %v2494
      %v2496 = vpop.f32.mrf.mxu0
      %v2497 = vadd.f32 %v2408, %v2496
      %2498 = vmatmul.bf16.gmra.mxu0 %v2340
      %v2499 = vpop.f32.mrf.mxu0
      %v2500 = vadd.f32 %v2411, %v2499
      %v2501 = vpop.f32.mrf.mxu0
      %v2502 = vadd.f32 %v2413, %v2501
      %2503 = vmatmul.bf16.gmra.mxu0 %v2342
      %v2504 = vpop.f32.mrf.mxu0
      %v2505 = vadd.f32 %v2416, %v2504
      %v2506 = vpop.f32.mrf.mxu0
      %v2507 = vadd.f32 %v2418, %v2506
      %2508 = vmatmul.bf16.gmra.mxu0 %v2344
      %v2509 = vpop.f32.mrf.mxu0
      %v2510 = vadd.f32 %v2421, %v2509
      %v2511 = vpop.f32.mrf.mxu0
      %v2512 = vadd.f32 %v2423, %v2511
      %2513 = vmatmul.bf16.gmra.mxu0 %v2346
      %v2514 = vpop.f32.mrf.mxu0
      %v2515 = vadd.f32 %v2426, %v2514
      %v2516 = vpop.f32.mrf.mxu0
      %v2517 = vadd.f32 %v2428, %v2516
      %2518 = vmatmul.bf16.gmra.mxu0 %v2348
      %v2519 = vpop.f32.mrf.mxu0
      %v2520 = vadd.f32 %v2431, %v2519
      %v2521 = vpop.f32.mrf.mxu0
      %v2522 = vadd.f32 %v2433, %v2521
      %2523 = vmatmul.bf16.gmra.mxu0 %v2350
      %v2524 = vpop.f32.mrf.mxu0
      %v2525 = vadd.f32 %v2436, %v2524
      %v2526 = vpop.f32.mrf.mxu0
      %v2527 = vadd.f32 %v2438, %v2526
      %2528 = vdwg.mxu0
      %v2529 = vmul.f32 %v2450, %v2287
      %v2530 = vmul.f32 %v2452, %v2288
      %v2531 = vmul.f32 %v2455, %v2289
      %v2532 = vmul.f32 %v2457, %v2290
      %v2533 = vmul.f32 %v2460, %v2291
      %v2534 = vmul.f32 %v2462, %v2292
      %v2535 = vmul.f32 %v2465, %v2293
      %v2536 = vmul.f32 %v2467, %v2294
      %v2537 = vmul.f32 %v2470, %v2295
      %v2538 = vmul.f32 %v2472, %v2296
      %v2539 = vmul.f32 %v2475, %v2297
      %v2540 = vmul.f32 %v2477, %v2298
      %v2541 = vmul.f32 %v2480, %v2299
      %v2542 = vmul.f32 %v2482, %v2300
      %v2543 = vmul.f32 %v2485, %v2301
      %v2544 = vmul.f32 %v2487, %v2302
      %v2545 = vmul.f32 %v2490, %v2303
      %v2546 = vmul.f32 %v2492, %v2304
      %v2547 = vmul.f32 %v2495, %v2305
      %v2548 = vmul.f32 %v2497, %v2306
      %v2549 = vmul.f32 %v2500, %v2307
      %v2550 = vmul.f32 %v2502, %v2308
      %v2551 = vmul.f32 %v2505, %v2309
      %v2552 = vmul.f32 %v2507, %v2310
      %v2553 = vmul.f32 %v2510, %v2311
      %v2554 = vmul.f32 %v2512, %v2312
      %v2555 = vmul.f32 %v2515, %v2313
      %v2556 = vmul.f32 %v2517, %v2314
      %v2557 = vmul.f32 %v2520, %v2315
      %v2558 = vmul.f32 %v2522, %v2316
      %v2559 = vmul.f32 %v2525, %v2317
      %v2560 = vmul.f32 %v2527, %v2318
      %v2561 = vpack.c.bf16 %v520, %v517
      %v2562 = vpack.c.bf16 %v609, %v606
      %v2563 = vpack.c.bf16 %v526, %v523
      %v2564 = vpack.c.bf16 %v615, %v612
      %2565 = vxpose.binary.xlu0.c.b16.start [1/16] %v2562, %v2561, 128
      %2566 = vxpose.binary.xlu0.c.b16.cont [2/16] %v2564, %v2563, 128
      %2567 = vxpose.binary.xlu0.c.b16.cont [3/16] 0, 0, 128
      %2568 = vxpose.binary.xlu0.c.b16.cont [4/16] 0, 0, 128
      %2569 = vxpose.binary.xlu0.c.b16.cont [5/16] 0, 0, 128
      %2570 = vxpose.binary.xlu0.c.b16.cont [6/16] 0, 0, 128
      %2571 = vxpose.binary.xlu0.c.b16.cont [7/16] 0, 0, 128
      %2572 = vxpose.binary.xlu0.c.b16.end [8/16] 0, 0, 128
      %v2573 = vpop.trf.xlu0
      %v2574 = vpop.trf.xlu0
      %v2575 = vpop.trf.xlu0
      %v2576 = vpop.trf.xlu0
      %v2577 = vpop.trf.xlu0
      %v2578 = vpop.trf.xlu0
      %v2579 = vpop.trf.xlu0
      %v2580 = vpop.trf.xlu0
      %v2581 = vpop.trf.xlu0
      %v2582 = vpop.trf.xlu0
      %v2583 = vpop.trf.xlu0
      %v2584 = vpop.trf.xlu0
      %v2585 = vpop.trf.xlu0
      %v2586 = vpop.trf.xlu0
      %v2587 = vpop.trf.xlu0
      %v2588 = vpop.trf.xlu0
      %v2590 = vsel %vm402, %v2573, 0
      %v2593 = vsel %vm402, %v2575, 0
      %v2596 = vsel %vm402, %v2577, 0
      %v2599 = vsel %vm402, %v2579, 0
      %v2602 = vsel %vm402, %v2581, 0
      %v2605 = vsel %vm402, %v2583, 0
      %v2608 = vsel %vm402, %v2585, 0
      %v2611 = vsel %vm402, %v2587, 0
      %v2614 = vsel %vm402, %v2574, 0
      %v2617 = vsel %vm402, %v2576, 0
      %v2620 = vsel %vm402, %v2578, 0
      %v2623 = vsel %vm402, %v2580, 0
      %v2626 = vsel %vm402, %v2582, 0
      %v2629 = vsel %vm402, %v2584, 0
      %v2632 = vsel %vm402, %v2586, 0
      %v2635 = vsel %vm402, %v2588, 0
      %2637 = vmatpush.bf16.msra.mxu0 0
      %2638 = vmatpush.bf16.msra.mxu0 0
      %2639 = vmatpush.bf16.msra.mxu0 0
      %2640 = vmatpush.bf16.msra.mxu0 0
      %2641 = vmatpush.bf16.msra.mxu0 0
      %2642 = vmatpush.bf16.msra.mxu0 0
      %2643 = vmatpush.bf16.msra.mxu0 %v655
      %2644 = vmatpush.bf16.msra.mxu0 %v653
      %2645 = vmatmul.bf16.gmra.mxu0 %v2590
      %v2646 = vpop.f32.mrf.mxu0
      %v2647 = vadd.f32 0.0, %v2646
      %v2648 = vpop.f32.mrf.mxu0
      %v2649 = vadd.f32 0.0, %v2648
      %2650 = vmatmul.bf16.gmra.mxu0 %v2593
      %v2651 = vpop.f32.mrf.mxu0
      %v2652 = vadd.f32 0.0, %v2651
      %v2653 = vpop.f32.mrf.mxu0
      %v2654 = vadd.f32 0.0, %v2653
      %2655 = vmatmul.bf16.gmra.mxu0 %v2596
      %v2656 = vpop.f32.mrf.mxu0
      %v2657 = vadd.f32 0.0, %v2656
      %v2658 = vpop.f32.mrf.mxu0
      %v2659 = vadd.f32 0.0, %v2658
      %2660 = vmatmul.bf16.gmra.mxu0 %v2599
      %v2661 = vpop.f32.mrf.mxu0
      %v2662 = vadd.f32 0.0, %v2661
      %v2663 = vpop.f32.mrf.mxu0
      %v2664 = vadd.f32 0.0, %v2663
      %2665 = vmatmul.bf16.gmra.mxu0 %v2602
      %v2666 = vpop.f32.mrf.mxu0
      %v2667 = vadd.f32 0.0, %v2666
      %v2668 = vpop.f32.mrf.mxu0
      %v2669 = vadd.f32 0.0, %v2668
      %2670 = vmatmul.bf16.gmra.mxu0 %v2605
      %v2671 = vpop.f32.mrf.mxu0
      %v2672 = vadd.f32 0.0, %v2671
      %v2673 = vpop.f32.mrf.mxu0
      %v2674 = vadd.f32 0.0, %v2673
      %2675 = vmatmul.bf16.gmra.mxu0 %v2608
      %v2676 = vpop.f32.mrf.mxu0
      %v2677 = vadd.f32 0.0, %v2676
      %v2678 = vpop.f32.mrf.mxu0
      %v2679 = vadd.f32 0.0, %v2678
      %2680 = vmatmul.bf16.gmra.mxu0 %v2611
      %v2681 = vpop.f32.mrf.mxu0
      %v2682 = vadd.f32 0.0, %v2681
      %v2683 = vpop.f32.mrf.mxu0
      %v2684 = vadd.f32 0.0, %v2683
      %2685 = vmatmul.bf16.gmra.mxu0 %v2614
      %v2686 = vpop.f32.mrf.mxu0
      %v2687 = vadd.f32 0.0, %v2686
      %v2688 = vpop.f32.mrf.mxu0
      %v2689 = vadd.f32 0.0, %v2688
      %2690 = vmatmul.bf16.gmra.mxu0 %v2617
      %v2691 = vpop.f32.mrf.mxu0
      %v2692 = vadd.f32 0.0, %v2691
      %v2693 = vpop.f32.mrf.mxu0
      %v2694 = vadd.f32 0.0, %v2693
      %2695 = vmatmul.bf16.gmra.mxu0 %v2620
      %v2696 = vpop.f32.mrf.mxu0
      %v2697 = vadd.f32 0.0, %v2696
      %v2698 = vpop.f32.mrf.mxu0
      %v2699 = vadd.f32 0.0, %v2698
      %2700 = vmatmul.bf16.gmra.mxu0 %v2623
      %v2701 = vpop.f32.mrf.mxu0
      %v2702 = vadd.f32 0.0, %v2701
      %v2703 = vpop.f32.mrf.mxu0
      %v2704 = vadd.f32 0.0, %v2703
      %2705 = vmatmul.bf16.gmra.mxu0 %v2626
      %v2706 = vpop.f32.mrf.mxu0
      %v2707 = vadd.f32 0.0, %v2706
      %v2708 = vpop.f32.mrf.mxu0
      %v2709 = vadd.f32 0.0, %v2708
      %2710 = vmatmul.bf16.gmra.mxu0 %v2629
      %v2711 = vpop.f32.mrf.mxu0
      %v2712 = vadd.f32 0.0, %v2711
      %v2713 = vpop.f32.mrf.mxu0
      %v2714 = vadd.f32 0.0, %v2713
      %2715 = vmatmul.bf16.gmra.mxu0 %v2632
      %v2716 = vpop.f32.mrf.mxu0
      %v2717 = vadd.f32 0.0, %v2716
      %v2718 = vpop.f32.mrf.mxu0
      %v2719 = vadd.f32 0.0, %v2718
      %2720 = vmatmul.bf16.gmra.mxu0 %v2635
      %v2721 = vpop.f32.mrf.mxu0
      %v2722 = vadd.f32 0.0, %v2721
      %v2723 = vpop.f32.mrf.mxu0
      %v2724 = vadd.f32 0.0, %v2723
      %2725 = vdwg.mxu0
      %2726 = vmatpush.bf16.msra.mxu0 0
      %2727 = vmatpush.bf16.msra.mxu0 0
      %2728 = vmatpush.bf16.msra.mxu0 0
      %2729 = vmatpush.bf16.msra.mxu0 0
      %2730 = vmatpush.bf16.msra.mxu0 0
      %2731 = vmatpush.bf16.msra.mxu0 0
      %2732 = vmatpush.bf16.msra.mxu0 %v656
      %2733 = vmatpush.bf16.msra.mxu0 %v654
      %2734 = vmatmul.bf16.gmra.mxu0 %v2590
      %v2735 = vpop.f32.mrf.mxu0
      %v2736 = vadd.f32 0.0, %v2735
      %v2737 = vpop.f32.mrf.mxu0
      %v2738 = vadd.f32 0.0, %v2737
      %2739 = vmatmul.bf16.gmra.mxu0 %v2593
      %v2740 = vpop.f32.mrf.mxu0
      %v2741 = vadd.f32 0.0, %v2740
      %v2742 = vpop.f32.mrf.mxu0
      %v2743 = vadd.f32 0.0, %v2742
      %2744 = vmatmul.bf16.gmra.mxu0 %v2596
      %v2745 = vpop.f32.mrf.mxu0
      %v2746 = vadd.f32 0.0, %v2745
      %v2747 = vpop.f32.mrf.mxu0
      %v2748 = vadd.f32 0.0, %v2747
      %2749 = vmatmul.bf16.gmra.mxu0 %v2599
      %v2750 = vpop.f32.mrf.mxu0
      %v2751 = vadd.f32 0.0, %v2750
      %v2752 = vpop.f32.mrf.mxu0
      %v2753 = vadd.f32 0.0, %v2752
      %2754 = vmatmul.bf16.gmra.mxu0 %v2602
      %v2755 = vpop.f32.mrf.mxu0
      %v2756 = vadd.f32 0.0, %v2755
      %v2757 = vpop.f32.mrf.mxu0
      %v2758 = vadd.f32 0.0, %v2757
      %2759 = vmatmul.bf16.gmra.mxu0 %v2605
      %v2760 = vpop.f32.mrf.mxu0
      %v2761 = vadd.f32 0.0, %v2760
      %v2762 = vpop.f32.mrf.mxu0
      %v2763 = vadd.f32 0.0, %v2762
      %2764 = vmatmul.bf16.gmra.mxu0 %v2608
      %v2765 = vpop.f32.mrf.mxu0
      %v2766 = vadd.f32 0.0, %v2765
      %v2767 = vpop.f32.mrf.mxu0
      %v2768 = vadd.f32 0.0, %v2767
      %2769 = vmatmul.bf16.gmra.mxu0 %v2611
      %v2770 = vpop.f32.mrf.mxu0
      %v2771 = vadd.f32 0.0, %v2770
      %v2772 = vpop.f32.mrf.mxu0
      %v2773 = vadd.f32 0.0, %v2772
      %2774 = vmatmul.bf16.gmra.mxu0 %v2614
      %v2775 = vpop.f32.mrf.mxu0
      %v2776 = vadd.f32 0.0, %v2775
      %v2777 = vpop.f32.mrf.mxu0
      %v2778 = vadd.f32 0.0, %v2777
      %2779 = vmatmul.bf16.gmra.mxu0 %v2617
      %v2780 = vpop.f32.mrf.mxu0
      %v2781 = vadd.f32 0.0, %v2780
      %v2782 = vpop.f32.mrf.mxu0
      %v2783 = vadd.f32 0.0, %v2782
      %2784 = vmatmul.bf16.gmra.mxu0 %v2620
      %v2785 = vpop.f32.mrf.mxu0
      %v2786 = vadd.f32 0.0, %v2785
      %v2787 = vpop.f32.mrf.mxu0
      %v2788 = vadd.f32 0.0, %v2787
      %2789 = vmatmul.bf16.gmra.mxu0 %v2623
      %v2790 = vpop.f32.mrf.mxu0
      %v2791 = vadd.f32 0.0, %v2790
      %v2792 = vpop.f32.mrf.mxu0
      %v2793 = vadd.f32 0.0, %v2792
      %2794 = vmatmul.bf16.gmra.mxu0 %v2626
      %v2795 = vpop.f32.mrf.mxu0
      %v2796 = vadd.f32 0.0, %v2795
      %v2797 = vpop.f32.mrf.mxu0
      %v2798 = vadd.f32 0.0, %v2797
      %2799 = vmatmul.bf16.gmra.mxu0 %v2629
      %v2800 = vpop.f32.mrf.mxu0
      %v2801 = vadd.f32 0.0, %v2800
      %v2802 = vpop.f32.mrf.mxu0
      %v2803 = vadd.f32 0.0, %v2802
      %2804 = vmatmul.bf16.gmra.mxu0 %v2632
      %v2805 = vpop.f32.mrf.mxu0
      %v2806 = vadd.f32 0.0, %v2805
      %v2807 = vpop.f32.mrf.mxu0
      %v2808 = vadd.f32 0.0, %v2807
      %2809 = vmatmul.bf16.gmra.mxu0 %v2635
      %v2810 = vpop.f32.mrf.mxu0
      %v2811 = vadd.f32 0.0, %v2810
      %v2812 = vpop.f32.mrf.mxu0
      %v2813 = vadd.f32 0.0, %v2812
      %2814 = vdwg.mxu0
      %v2815 = vmax.f32 %v2647, %v2736
      %2816 = vmax.xlane.f32.xlu0 %v2815
      %v2817 = vpop.xlane.xlu0 %2816
      %v2818 = vmax.f32 %v2649, %v2738
      %2819 = vmax.xlane.f32.xlu0 %v2818
      %v2820 = vpop.xlane.xlu0 %2819
      %v2821 = vmax.f32 %v2652, %v2741
      %2822 = vmax.xlane.f32.xlu0 %v2821
      %v2823 = vpop.xlane.xlu0 %2822
      %v2824 = vmax.f32 %v2654, %v2743
      %2825 = vmax.xlane.f32.xlu0 %v2824
      %v2826 = vpop.xlane.xlu0 %2825
      %v2827 = vmax.f32 %v2657, %v2746
      %2828 = vmax.xlane.f32.xlu0 %v2827
      %v2829 = vpop.xlane.xlu0 %2828
      %v2830 = vmax.f32 %v2659, %v2748
      %2831 = vmax.xlane.f32.xlu0 %v2830
      %v2832 = vpop.xlane.xlu0 %2831
      %v2833 = vmax.f32 %v2662, %v2751
      %2834 = vmax.xlane.f32.xlu0 %v2833
      %v2835 = vpop.xlane.xlu0 %2834
      %v2836 = vmax.f32 %v2664, %v2753
      %2837 = vmax.xlane.f32.xlu0 %v2836
      %v2838 = vpop.xlane.xlu0 %2837
      %v2839 = vmax.f32 %v2667, %v2756
      %2840 = vmax.xlane.f32.xlu0 %v2839
      %v2841 = vpop.xlane.xlu0 %2840
      %v2842 = vmax.f32 %v2669, %v2758
      %2843 = vmax.xlane.f32.xlu0 %v2842
      %v2844 = vpop.xlane.xlu0 %2843
      %v2845 = vmax.f32 %v2672, %v2761
      %2846 = vmax.xlane.f32.xlu0 %v2845
      %v2847 = vpop.xlane.xlu0 %2846
      %v2848 = vmax.f32 %v2674, %v2763
      %2849 = vmax.xlane.f32.xlu0 %v2848
      %v2850 = vpop.xlane.xlu0 %2849
      %v2851 = vmax.f32 %v2677, %v2766
      %2852 = vmax.xlane.f32.xlu0 %v2851
      %v2853 = vpop.xlane.xlu0 %2852
      %v2854 = vmax.f32 %v2679, %v2768
      %2855 = vmax.xlane.f32.xlu0 %v2854
      %v2856 = vpop.xlane.xlu0 %2855
      %v2857 = vmax.f32 %v2682, %v2771
      %2858 = vmax.xlane.f32.xlu0 %v2857
      %v2859 = vpop.xlane.xlu0 %2858
      %v2860 = vmax.f32 %v2684, %v2773
      %2861 = vmax.xlane.f32.xlu0 %v2860
      %v2862 = vpop.xlane.xlu0 %2861
      %v2863 = vmax.f32 %v2687, %v2776
      %2864 = vmax.xlane.f32.xlu0 %v2863
      %v2865 = vpop.xlane.xlu0 %2864
      %v2866 = vmax.f32 %v2689, %v2778
      %2867 = vmax.xlane.f32.xlu0 %v2866
      %v2868 = vpop.xlane.xlu0 %2867
      %v2869 = vmax.f32 %v2692, %v2781
      %2870 = vmax.xlane.f32.xlu0 %v2869
      %v2871 = vpop.xlane.xlu0 %2870
      %v2872 = vmax.f32 %v2694, %v2783
      %2873 = vmax.xlane.f32.xlu0 %v2872
      %v2874 = vpop.xlane.xlu0 %2873
      %v2875 = vmax.f32 %v2697, %v2786
      %2876 = vmax.xlane.f32.xlu0 %v2875
      %v2877 = vpop.xlane.xlu0 %2876
      %v2878 = vmax.f32 %v2699, %v2788
      %2879 = vmax.xlane.f32.xlu0 %v2878
      %v2880 = vpop.xlane.xlu0 %2879
      %v2881 = vmax.f32 %v2702, %v2791
      %2882 = vmax.xlane.f32.xlu0 %v2881
      %v2883 = vpop.xlane.xlu0 %2882
      %v2884 = vmax.f32 %v2704, %v2793
      %2885 = vmax.xlane.f32.xlu0 %v2884
      %v2886 = vpop.xlane.xlu0 %2885
      %v2887 = vmax.f32 %v2707, %v2796
      %2888 = vmax.xlane.f32.xlu0 %v2887
      %v2889 = vpop.xlane.xlu0 %2888
      %v2890 = vmax.f32 %v2709, %v2798
      %2891 = vmax.xlane.f32.xlu0 %v2890
      %v2892 = vpop.xlane.xlu0 %2891
      %v2893 = vmax.f32 %v2712, %v2801
      %2894 = vmax.xlane.f32.xlu0 %v2893
      %v2895 = vpop.xlane.xlu0 %2894
      %v2896 = vmax.f32 %v2714, %v2803
      %2897 = vmax.xlane.f32.xlu0 %v2896
      %v2898 = vpop.xlane.xlu0 %2897
      %v2899 = vmax.f32 %v2717, %v2806
      %2900 = vmax.xlane.f32.xlu0 %v2899
      %v2901 = vpop.xlane.xlu0 %2900
      %v2902 = vmax.f32 %v2719, %v2808
      %2903 = vmax.xlane.f32.xlu0 %v2902
      %v2904 = vpop.xlane.xlu0 %2903
      %v2905 = vmax.f32 %v2722, %v2811
      %2906 = vmax.xlane.f32.xlu0 %v2905
      %v2907 = vpop.xlane.xlu0 %2906
      %v2908 = vmax.f32 %v2724, %v2813
      %2909 = vmax.xlane.f32.xlu0 %v2908
      %v2910 = vpop.xlane.xlu0 %2909
      %v2911 = vsub.f32 %v2647, %v2817
      %v2912 = vsub.f32 %v2736, %v2817
      %v2913 = vsub.f32 %v2649, %v2820
      %v2914 = vsub.f32 %v2738, %v2820
      %v2915 = vsub.f32 %v2652, %v2823
      %v2916 = vsub.f32 %v2741, %v2823
      %v2917 = vsub.f32 %v2654, %v2826
      %v2918 = vsub.f32 %v2743, %v2826
      %v2919 = vsub.f32 %v2657, %v2829
      %v2920 = vsub.f32 %v2746, %v2829
      %v2921 = vsub.f32 %v2659, %v2832
      %v2922 = vsub.f32 %v2748, %v2832
      %v2923 = vsub.f32 %v2662, %v2835
      %v2924 = vsub.f32 %v2751, %v2835
      %v2925 = vsub.f32 %v2664, %v2838
      %v2926 = vsub.f32 %v2753, %v2838
      %v2927 = vsub.f32 %v2667, %v2841
      %v2928 = vsub.f32 %v2756, %v2841
      %v2929 = vsub.f32 %v2669, %v2844
      %v2930 = vsub.f32 %v2758, %v2844
      %v2931 = vsub.f32 %v2672, %v2847
      %v2932 = vsub.f32 %v2761, %v2847
      %v2933 = vsub.f32 %v2674, %v2850
      %v2934 = vsub.f32 %v2763, %v2850
      %v2935 = vsub.f32 %v2677, %v2853
      %v2936 = vsub.f32 %v2766, %v2853
      %v2937 = vsub.f32 %v2679, %v2856
      %v2938 = vsub.f32 %v2768, %v2856
      %v2939 = vsub.f32 %v2682, %v2859
      %v2940 = vsub.f32 %v2771, %v2859
      %v2941 = vsub.f32 %v2684, %v2862
      %v2942 = vsub.f32 %v2773, %v2862
      %v2943 = vsub.f32 %v2687, %v2865
      %v2944 = vsub.f32 %v2776, %v2865
      %v2945 = vsub.f32 %v2689, %v2868
      %v2946 = vsub.f32 %v2778, %v2868
      %v2947 = vsub.f32 %v2692, %v2871
      %v2948 = vsub.f32 %v2781, %v2871
      %v2949 = vsub.f32 %v2694, %v2874
      %v2950 = vsub.f32 %v2783, %v2874
      %v2951 = vsub.f32 %v2697, %v2877
      %v2952 = vsub.f32 %v2786, %v2877
      %v2953 = vsub.f32 %v2699, %v2880
      %v2954 = vsub.f32 %v2788, %v2880
      %v2955 = vsub.f32 %v2702, %v2883
      %v2956 = vsub.f32 %v2791, %v2883
      %v2957 = vsub.f32 %v2704, %v2886
      %v2958 = vsub.f32 %v2793, %v2886
      %v2959 = vsub.f32 %v2707, %v2889
      %v2960 = vsub.f32 %v2796, %v2889
      %v2961 = vsub.f32 %v2709, %v2892
      %v2962 = vsub.f32 %v2798, %v2892
      %v2963 = vsub.f32 %v2712, %v2895
      %v2964 = vsub.f32 %v2801, %v2895
      %v2965 = vsub.f32 %v2714, %v2898
      %v2966 = vsub.f32 %v2803, %v2898
      %v2967 = vsub.f32 %v2717, %v2901
      %v2968 = vsub.f32 %v2806, %v2901
      %v2969 = vsub.f32 %v2719, %v2904
      %v2970 = vsub.f32 %v2808, %v2904
      %v2971 = vsub.f32 %v2722, %v2907
      %v2972 = vsub.f32 %v2811, %v2907
      %v2973 = vsub.f32 %v2724, %v2910
      %v2974 = vsub.f32 %v2813, %v2910
      %v2975 = vmul.f32 %v2911, 1.442695
      %v2976 = vpow.pop %v2975
      %v2977 = vmul.f32 %v2912, 1.442695
      %v2978 = vpow.pop %v2977
      %v2979 = vmul.f32 %v2913, 1.442695
      %v2980 = vpow.pop %v2979
      %v2981 = vmul.f32 %v2914, 1.442695
      %v2982 = vpow.pop %v2981
      %v2983 = vmul.f32 %v2915, 1.442695
      %v2984 = vpow.pop %v2983
      %v2985 = vmul.f32 %v2916, 1.442695
      %v2986 = vpow.pop %v2985
      %v2987 = vmul.f32 %v2917, 1.442695
      %v2988 = vpow.pop %v2987
      %v2989 = vmul.f32 %v2918, 1.442695
      %v2990 = vpow.pop %v2989
      %v2991 = vmul.f32 %v2919, 1.442695
      %v2992 = vpow.pop %v2991
      %v2993 = vmul.f32 %v2920, 1.442695
      %v2994 = vpow.pop %v2993
      %v2995 = vmul.f32 %v2921, 1.442695
      %v2996 = vpow.pop %v2995
      %v2997 = vmul.f32 %v2922, 1.442695
      %v2998 = vpow.pop %v2997
      %v2999 = vmul.f32 %v2923, 1.442695
      %v3000 = vpow.pop %v2999
      %v3001 = vmul.f32 %v2924, 1.442695
      %v3002 = vpow.pop %v3001
      %v3003 = vmul.f32 %v2925, 1.442695
      %v3004 = vpow.pop %v3003
      %v3005 = vmul.f32 %v2926, 1.442695
      %v3006 = vpow.pop %v3005
      %v3007 = vmul.f32 %v2927, 1.442695
      %v3008 = vpow.pop %v3007
      %v3009 = vmul.f32 %v2928, 1.442695
      %v3010 = vpow.pop %v3009
      %v3011 = vmul.f32 %v2929, 1.442695
      %v3012 = vpow.pop %v3011
      %v3013 = vmul.f32 %v2930, 1.442695
      %v3014 = vpow.pop %v3013
      %v3015 = vmul.f32 %v2931, 1.442695
      %v3016 = vpow.pop %v3015
      %v3017 = vmul.f32 %v2932, 1.442695
      %v3018 = vpow.pop %v3017
      %v3019 = vmul.f32 %v2933, 1.442695
      %v3020 = vpow.pop %v3019
      %v3021 = vmul.f32 %v2934, 1.442695
      %v3022 = vpow.pop %v3021
      %v3023 = vmul.f32 %v2935, 1.442695
      %v3024 = vpow.pop %v3023
      %v3025 = vmul.f32 %v2936, 1.442695
      %v3026 = vpow.pop %v3025
      %v3027 = vmul.f32 %v2937, 1.442695
      %v3028 = vpow.pop %v3027
      %v3029 = vmul.f32 %v2938, 1.442695
      %v3030 = vpow.pop %v3029
      %v3031 = vmul.f32 %v2939, 1.442695
      %v3032 = vpow.pop %v3031
      %v3033 = vmul.f32 %v2940, 1.442695
      %v3034 = vpow.pop %v3033
      %v3035 = vmul.f32 %v2941, 1.442695
      %v3036 = vpow.pop %v3035
      %v3037 = vmul.f32 %v2942, 1.442695
      %v3038 = vpow.pop %v3037
      %v3039 = vmul.f32 %v2943, 1.442695
      %v3040 = vpow.pop %v3039
      %v3041 = vmul.f32 %v2944, 1.442695
      %v3042 = vpow.pop %v3041
      %v3043 = vmul.f32 %v2945, 1.442695
      %v3044 = vpow.pop %v3043
      %v3045 = vmul.f32 %v2946, 1.442695
      %v3046 = vpow.pop %v3045
      %v3047 = vmul.f32 %v2947, 1.442695
      %v3048 = vpow.pop %v3047
      %v3049 = vmul.f32 %v2948, 1.442695
      %v3050 = vpow.pop %v3049
      %v3051 = vmul.f32 %v2949, 1.442695
      %v3052 = vpow.pop %v3051
      %v3053 = vmul.f32 %v2950, 1.442695
      %v3054 = vpow.pop %v3053
      %v3055 = vmul.f32 %v2951, 1.442695
      %v3056 = vpow.pop %v3055
      %v3057 = vmul.f32 %v2952, 1.442695
      %v3058 = vpow.pop %v3057
      %v3059 = vmul.f32 %v2953, 1.442695
      %v3060 = vpow.pop %v3059
      %v3061 = vmul.f32 %v2954, 1.442695
      %v3062 = vpow.pop %v3061
      %v3063 = vmul.f32 %v2955, 1.442695
      %v3064 = vpow.pop %v3063
      %v3065 = vmul.f32 %v2956, 1.442695
      %v3066 = vpow.pop %v3065
      %v3067 = vmul.f32 %v2957, 1.442695
      %v3068 = vpow.pop %v3067
      %v3069 = vmul.f32 %v2958, 1.442695
      %v3070 = vpow.pop %v3069
      %v3071 = vmul.f32 %v2959, 1.442695
      %v3072 = vpow.pop %v3071
      %v3073 = vmul.f32 %v2960, 1.442695
      %v3074 = vpow.pop %v3073
      %v3075 = vmul.f32 %v2961, 1.442695
      %v3076 = vpow.pop %v3075
      %v3077 = vmul.f32 %v2962, 1.442695
      %v3078 = vpow.pop %v3077
      %v3079 = vmul.f32 %v2963, 1.442695
      %v3080 = vpow.pop %v3079
      %v3081 = vmul.f32 %v2964, 1.442695
      %v3082 = vpow.pop %v3081
      %v3083 = vmul.f32 %v2965, 1.442695
      %v3084 = vpow.pop %v3083
      %v3085 = vmul.f32 %v2966, 1.442695
      %v3086 = vpow.pop %v3085
      %v3087 = vmul.f32 %v2967, 1.442695
      %v3088 = vpow.pop %v3087
      %v3089 = vmul.f32 %v2968, 1.442695
      %v3090 = vpow.pop %v3089
      %v3091 = vmul.f32 %v2969, 1.442695
      %v3092 = vpow.pop %v3091
      %v3093 = vmul.f32 %v2970, 1.442695
      %v3094 = vpow.pop %v3093
      %v3095 = vmul.f32 %v2971, 1.442695
      %v3096 = vpow.pop %v3095
      %v3097 = vmul.f32 %v2972, 1.442695
      %v3098 = vpow.pop %v3097
      %v3099 = vmul.f32 %v2973, 1.442695
      %v3100 = vpow.pop %v3099
      %v3101 = vmul.f32 %v2974, 1.442695
      %v3102 = vpow.pop %v3101
      %v3103 = vadd.f32 %v2976, %v2978
      %3104 = vadd.xlane.f32.xlu0 %v3103
      %v3105 = vpop.xlane.xlu0 %3104
      %v3106 = vadd.f32 %v2980, %v2982
      %3107 = vadd.xlane.f32.xlu0 %v3106
      %v3108 = vpop.xlane.xlu0 %3107
      %v3109 = vadd.f32 %v2984, %v2986
      %3110 = vadd.xlane.f32.xlu0 %v3109
      %v3111 = vpop.xlane.xlu0 %3110
      %v3112 = vadd.f32 %v2988, %v2990
      %3113 = vadd.xlane.f32.xlu0 %v3112
      %v3114 = vpop.xlane.xlu0 %3113
      %v3115 = vadd.f32 %v2992, %v2994
      %3116 = vadd.xlane.f32.xlu0 %v3115
      %v3117 = vpop.xlane.xlu0 %3116
      %v3118 = vadd.f32 %v2996, %v2998
      %3119 = vadd.xlane.f32.xlu0 %v3118
      %v3120 = vpop.xlane.xlu0 %3119
      %v3121 = vadd.f32 %v3000, %v3002
      %3122 = vadd.xlane.f32.xlu0 %v3121
      %v3123 = vpop.xlane.xlu0 %3122
      %v3124 = vadd.f32 %v3004, %v3006
      %3125 = vadd.xlane.f32.xlu0 %v3124
      %v3126 = vpop.xlane.xlu0 %3125
      %v3127 = vadd.f32 %v3008, %v3010
      %3128 = vadd.xlane.f32.xlu0 %v3127
      %v3129 = vpop.xlane.xlu0 %3128
      %v3130 = vadd.f32 %v3012, %v3014
      %3131 = vadd.xlane.f32.xlu0 %v3130
      %v3132 = vpop.xlane.xlu0 %3131
      %v3133 = vadd.f32 %v3016, %v3018
      %3134 = vadd.xlane.f32.xlu0 %v3133
      %v3135 = vpop.xlane.xlu0 %3134
      %v3136 = vadd.f32 %v3020, %v3022
      %3137 = vadd.xlane.f32.xlu0 %v3136
      %v3138 = vpop.xlane.xlu0 %3137
      %v3139 = vadd.f32 %v3024, %v3026
      %3140 = vadd.xlane.f32.xlu0 %v3139
      %v3141 = vpop.xlane.xlu0 %3140
      %v3142 = vadd.f32 %v3028, %v3030
      %3143 = vadd.xlane.f32.xlu0 %v3142
      %v3144 = vpop.xlane.xlu0 %3143
      %v3145 = vadd.f32 %v3032, %v3034
      %3146 = vadd.xlane.f32.xlu0 %v3145
      %v3147 = vpop.xlane.xlu0 %3146
      %v3148 = vadd.f32 %v3036, %v3038
      %3149 = vadd.xlane.f32.xlu0 %v3148
      %v3150 = vpop.xlane.xlu0 %3149
      %v3151 = vadd.f32 %v3040, %v3042
      %3152 = vadd.xlane.f32.xlu0 %v3151
      %v3153 = vpop.xlane.xlu0 %3152
      %v3154 = vadd.f32 %v3044, %v3046
      %3155 = vadd.xlane.f32.xlu0 %v3154
      %v3156 = vpop.xlane.xlu0 %3155
      %v3157 = vadd.f32 %v3048, %v3050
      %3158 = vadd.xlane.f32.xlu0 %v3157
      %v3159 = vpop.xlane.xlu0 %3158
      %v3160 = vadd.f32 %v3052, %v3054
      %3161 = vadd.xlane.f32.xlu0 %v3160
      %v3162 = vpop.xlane.xlu0 %3161
      %v3163 = vadd.f32 %v3056, %v3058
      %3164 = vadd.xlane.f32.xlu0 %v3163
      %v3165 = vpop.xlane.xlu0 %3164
      %v3166 = vadd.f32 %v3060, %v3062
      %3167 = vadd.xlane.f32.xlu0 %v3166
      %v3168 = vpop.xlane.xlu0 %3167
      %v3169 = vadd.f32 %v3064, %v3066
      %3170 = vadd.xlane.f32.xlu0 %v3169
      %v3171 = vpop.xlane.xlu0 %3170
      %v3172 = vadd.f32 %v3068, %v3070
      %3173 = vadd.xlane.f32.xlu0 %v3172
      %v3174 = vpop.xlane.xlu0 %3173
      %v3175 = vadd.f32 %v3072, %v3074
      %3176 = vadd.xlane.f32.xlu0 %v3175
      %v3177 = vpop.xlane.xlu0 %3176
      %v3178 = vadd.f32 %v3076, %v3078
      %3179 = vadd.xlane.f32.xlu0 %v3178
      %v3180 = vpop.xlane.xlu0 %3179
      %v3181 = vadd.f32 %v3080, %v3082
      %3182 = vadd.xlane.f32.xlu0 %v3181
      %v3183 = vpop.xlane.xlu0 %3182
      %v3184 = vadd.f32 %v3084, %v3086
      %3185 = vadd.xlane.f32.xlu0 %v3184
      %v3186 = vpop.xlane.xlu0 %3185
      %v3187 = vadd.f32 %v3088, %v3090
      %3188 = vadd.xlane.f32.xlu0 %v3187
      %v3189 = vpop.xlane.xlu0 %3188
      %v3190 = vadd.f32 %v3092, %v3094
      %3191 = vadd.xlane.f32.xlu0 %v3190
      %v3192 = vpop.xlane.xlu0 %3191
      %v3193 = vadd.f32 %v3096, %v3098
      %3194 = vadd.xlane.f32.xlu0 %v3193
      %v3195 = vpop.xlane.xlu0 %3194
      %v3196 = vadd.f32 %v3100, %v3102
      %3197 = vadd.xlane.f32.xlu0 %v3196
      %v3198 = vpop.xlane.xlu0 %3197
      %v3199 = vrcp.pop %v3105
      %v3200 = vrcp.pop %v3108
      %v3201 = vrcp.pop %v3111
      %v3202 = vrcp.pop %v3114
      %v3203 = vrcp.pop %v3117
      %v3204 = vrcp.pop %v3120
      %v3205 = vrcp.pop %v3123
      %v3206 = vrcp.pop %v3126
      %v3207 = vrcp.pop %v3129
      %v3208 = vrcp.pop %v3132
      %v3209 = vrcp.pop %v3135
      %v3210 = vrcp.pop %v3138
      %v3211 = vrcp.pop %v3141
      %v3212 = vrcp.pop %v3144
      %v3213 = vrcp.pop %v3147
      %v3214 = vrcp.pop %v3150
      %v3215 = vrcp.pop %v3153
      %v3216 = vrcp.pop %v3156
      %v3217 = vrcp.pop %v3159
      %v3218 = vrcp.pop %v3162
      %v3219 = vrcp.pop %v3165
      %v3220 = vrcp.pop %v3168
      %v3221 = vrcp.pop %v3171
      %v3222 = vrcp.pop %v3174
      %v3223 = vrcp.pop %v3177
      %v3224 = vrcp.pop %v3180
      %v3225 = vrcp.pop %v3183
      %v3226 = vrcp.pop %v3186
      %v3227 = vrcp.pop %v3189
      %v3228 = vrcp.pop %v3192
      %v3229 = vrcp.pop %v3195
      %v3230 = vrcp.pop %v3198
      %v3231 = vpack.c.bf16 %v2980, %v2976
      %v3232 = vpack.c.bf16 %v2982, %v2978
      %v3233 = vpack.c.bf16 %v2988, %v2984
      %v3234 = vpack.c.bf16 %v2990, %v2986
      %v3235 = vpack.c.bf16 %v2996, %v2992
      %v3236 = vpack.c.bf16 %v2998, %v2994
      %v3237 = vpack.c.bf16 %v3004, %v3000
      %v3238 = vpack.c.bf16 %v3006, %v3002
      %v3239 = vpack.c.bf16 %v3012, %v3008
      %v3240 = vpack.c.bf16 %v3014, %v3010
      %v3241 = vpack.c.bf16 %v3020, %v3016
      %v3242 = vpack.c.bf16 %v3022, %v3018
      %v3243 = vpack.c.bf16 %v3028, %v3024
      %v3244 = vpack.c.bf16 %v3030, %v3026
      %v3245 = vpack.c.bf16 %v3036, %v3032
      %v3246 = vpack.c.bf16 %v3038, %v3034
      %v3247 = vpack.c.bf16 %v3044, %v3040
      %v3248 = vpack.c.bf16 %v3046, %v3042
      %v3249 = vpack.c.bf16 %v3052, %v3048
      %v3250 = vpack.c.bf16 %v3054, %v3050
      %v3251 = vpack.c.bf16 %v3060, %v3056
      %v3252 = vpack.c.bf16 %v3062, %v3058
      %v3253 = vpack.c.bf16 %v3068, %v3064
      %v3254 = vpack.c.bf16 %v3070, %v3066
      %v3255 = vpack.c.bf16 %v3076, %v3072
      %v3256 = vpack.c.bf16 %v3078, %v3074
      %v3257 = vpack.c.bf16 %v3084, %v3080
      %v3258 = vpack.c.bf16 %v3086, %v3082
      %v3259 = vpack.c.bf16 %v3092, %v3088
      %v3260 = vpack.c.bf16 %v3094, %v3090
      %v3261 = vpack.c.bf16 %v3100, %v3096
      %v3262 = vpack.c.bf16 %v3102, %v3098
      %3263 = vmatpush.bf16.msra.mxu0 %v728
      %3264 = vmatpush.bf16.msra.mxu0 %v727
      %3265 = vmatpush.bf16.msra.mxu0 %v726
      %3266 = vmatpush.bf16.msra.mxu0 %v725
      %3267 = vmatpush.bf16.msra.mxu0 %v724
      %3268 = vmatpush.bf16.msra.mxu0 %v723
      %3269 = vmatpush.bf16.msra.mxu0 %v722
      %3270 = vmatpush.bf16.msra.mxu0 %v721
      %3271 = vmatmul.bf16.gmra.mxu0 %v3231
      %v3272 = vpop.f32.mrf.mxu0
      %v3273 = vadd.f32 0.0, %v3272
      %v3274 = vpop.f32.mrf.mxu0
      %v3275 = vadd.f32 0.0, %v3274
      %3276 = vmatmul.bf16.gmra.mxu0 %v3233
      %v3277 = vpop.f32.mrf.mxu0
      %v3278 = vadd.f32 0.0, %v3277
      %v3279 = vpop.f32.mrf.mxu0
      %v3280 = vadd.f32 0.0, %v3279
      %3281 = vmatmul.bf16.gmra.mxu0 %v3235
      %v3282 = vpop.f32.mrf.mxu0
      %v3283 = vadd.f32 0.0, %v3282
      %v3284 = vpop.f32.mrf.mxu0
      %v3285 = vadd.f32 0.0, %v3284
      %3286 = vmatmul.bf16.gmra.mxu0 %v3237
      %v3287 = vpop.f32.mrf.mxu0
      %v3288 = vadd.f32 0.0, %v3287
      %v3289 = vpop.f32.mrf.mxu0
      %v3290 = vadd.f32 0.0, %v3289
      %3291 = vmatmul.bf16.gmra.mxu0 %v3239
      %v3292 = vpop.f32.mrf.mxu0
      %v3293 = vadd.f32 0.0, %v3292
      %v3294 = vpop.f32.mrf.mxu0
      %v3295 = vadd.f32 0.0, %v3294
      %3296 = vmatmul.bf16.gmra.mxu0 %v3241
      %v3297 = vpop.f32.mrf.mxu0
      %v3298 = vadd.f32 0.0, %v3297
      %v3299 = vpop.f32.mrf.mxu0
      %v3300 = vadd.f32 0.0, %v3299
      %3301 = vmatmul.bf16.gmra.mxu0 %v3243
      %v3302 = vpop.f32.mrf.mxu0
      %v3303 = vadd.f32 0.0, %v3302
      %v3304 = vpop.f32.mrf.mxu0
      %v3305 = vadd.f32 0.0, %v3304
      %3306 = vmatmul.bf16.gmra.mxu0 %v3245
      %v3307 = vpop.f32.mrf.mxu0
      %v3308 = vadd.f32 0.0, %v3307
      %v3309 = vpop.f32.mrf.mxu0
      %v3310 = vadd.f32 0.0, %v3309
      %3311 = vmatmul.bf16.gmra.mxu0 %v3247
      %v3312 = vpop.f32.mrf.mxu0
      %v3313 = vadd.f32 0.0, %v3312
      %v3314 = vpop.f32.mrf.mxu0
      %v3315 = vadd.f32 0.0, %v3314
      %3316 = vmatmul.bf16.gmra.mxu0 %v3249
      %v3317 = vpop.f32.mrf.mxu0
      %v3318 = vadd.f32 0.0, %v3317
      %v3319 = vpop.f32.mrf.mxu0
      %v3320 = vadd.f32 0.0, %v3319
      %3321 = vmatmul.bf16.gmra.mxu0 %v3251
      %v3322 = vpop.f32.mrf.mxu0
      %v3323 = vadd.f32 0.0, %v3322
      %v3324 = vpop.f32.mrf.mxu0
      %v3325 = vadd.f32 0.0, %v3324
      %3326 = vmatmul.bf16.gmra.mxu0 %v3253
      %v3327 = vpop.f32.mrf.mxu0
      %v3328 = vadd.f32 0.0, %v3327
      %v3329 = vpop.f32.mrf.mxu0
      %v3330 = vadd.f32 0.0, %v3329
      %3331 = vmatmul.bf16.gmra.mxu0 %v3255
      %v3332 = vpop.f32.mrf.mxu0
      %v3333 = vadd.f32 0.0, %v3332
      %v3334 = vpop.f32.mrf.mxu0
      %v3335 = vadd.f32 0.0, %v3334
      %3336 = vmatmul.bf16.gmra.mxu0 %v3257
      %v3337 = vpop.f32.mrf.mxu0
      %v3338 = vadd.f32 0.0, %v3337
      %v3339 = vpop.f32.mrf.mxu0
      %v3340 = vadd.f32 0.0, %v3339
      %3341 = vmatmul.bf16.gmra.mxu0 %v3259
      %v3342 = vpop.f32.mrf.mxu0
      %v3343 = vadd.f32 0.0, %v3342
      %v3344 = vpop.f32.mrf.mxu0
      %v3345 = vadd.f32 0.0, %v3344
      %3346 = vmatmul.bf16.gmra.mxu0 %v3261
      %v3347 = vpop.f32.mrf.mxu0
      %v3348 = vadd.f32 0.0, %v3347
      %v3349 = vpop.f32.mrf.mxu0
      %v3350 = vadd.f32 0.0, %v3349
      %3351 = vdwg.mxu0
      %3352 = vmatpush.bf16.msra.mxu0 %v736
      %3353 = vmatpush.bf16.msra.mxu0 %v735
      %3354 = vmatpush.bf16.msra.mxu0 %v734
      %3355 = vmatpush.bf16.msra.mxu0 %v733
      %3356 = vmatpush.bf16.msra.mxu0 %v732
      %3357 = vmatpush.bf16.msra.mxu0 %v731
      %3358 = vmatpush.bf16.msra.mxu0 %v730
      %3359 = vmatpush.bf16.msra.mxu0 %v729
      %3360 = vmatmul.bf16.gmra.mxu0 %v3232
      %v3361 = vpop.f32.mrf.mxu0
      %v3362 = vadd.f32 %v3273, %v3361
      %v3363 = vpop.f32.mrf.mxu0
      %v3364 = vadd.f32 %v3275, %v3363
      %3365 = vmatmul.bf16.gmra.mxu0 %v3234
      %v3366 = vpop.f32.mrf.mxu0
      %v3367 = vadd.f32 %v3278, %v3366
      %v3368 = vpop.f32.mrf.mxu0
      %v3369 = vadd.f32 %v3280, %v3368
      %3370 = vmatmul.bf16.gmra.mxu0 %v3236
      %v3371 = vpop.f32.mrf.mxu0
      %v3372 = vadd.f32 %v3283, %v3371
      %v3373 = vpop.f32.mrf.mxu0
      %v3374 = vadd.f32 %v3285, %v3373
      %3375 = vmatmul.bf16.gmra.mxu0 %v3238
      %v3376 = vpop.f32.mrf.mxu0
      %v3377 = vadd.f32 %v3288, %v3376
      %v3378 = vpop.f32.mrf.mxu0
      %v3379 = vadd.f32 %v3290, %v3378
      %3380 = vmatmul.bf16.gmra.mxu0 %v3240
      %v3381 = vpop.f32.mrf.mxu0
      %v3382 = vadd.f32 %v3293, %v3381
      %v3383 = vpop.f32.mrf.mxu0
      %v3384 = vadd.f32 %v3295, %v3383
      %3385 = vmatmul.bf16.gmra.mxu0 %v3242
      %v3386 = vpop.f32.mrf.mxu0
      %v3387 = vadd.f32 %v3298, %v3386
      %v3388 = vpop.f32.mrf.mxu0
      %v3389 = vadd.f32 %v3300, %v3388
      %3390 = vmatmul.bf16.gmra.mxu0 %v3244
      %v3391 = vpop.f32.mrf.mxu0
      %v3392 = vadd.f32 %v3303, %v3391
      %v3393 = vpop.f32.mrf.mxu0
      %v3394 = vadd.f32 %v3305, %v3393
      %3395 = vmatmul.bf16.gmra.mxu0 %v3246
      %v3396 = vpop.f32.mrf.mxu0
      %v3397 = vadd.f32 %v3308, %v3396
      %v3398 = vpop.f32.mrf.mxu0
      %v3399 = vadd.f32 %v3310, %v3398
      %3400 = vmatmul.bf16.gmra.mxu0 %v3248
      %v3401 = vpop.f32.mrf.mxu0
      %v3402 = vadd.f32 %v3313, %v3401
      %v3403 = vpop.f32.mrf.mxu0
      %v3404 = vadd.f32 %v3315, %v3403
      %3405 = vmatmul.bf16.gmra.mxu0 %v3250
      %v3406 = vpop.f32.mrf.mxu0
      %v3407 = vadd.f32 %v3318, %v3406
      %v3408 = vpop.f32.mrf.mxu0
      %v3409 = vadd.f32 %v3320, %v3408
      %3410 = vmatmul.bf16.gmra.mxu0 %v3252
      %v3411 = vpop.f32.mrf.mxu0
      %v3412 = vadd.f32 %v3323, %v3411
      %v3413 = vpop.f32.mrf.mxu0
      %v3414 = vadd.f32 %v3325, %v3413
      %3415 = vmatmul.bf16.gmra.mxu0 %v3254
      %v3416 = vpop.f32.mrf.mxu0
      %v3417 = vadd.f32 %v3328, %v3416
      %v3418 = vpop.f32.mrf.mxu0
      %v3419 = vadd.f32 %v3330, %v3418
      %3420 = vmatmul.bf16.gmra.mxu0 %v3256
      %v3421 = vpop.f32.mrf.mxu0
      %v3422 = vadd.f32 %v3333, %v3421
      %v3423 = vpop.f32.mrf.mxu0
      %v3424 = vadd.f32 %v3335, %v3423
      %3425 = vmatmul.bf16.gmra.mxu0 %v3258
      %v3426 = vpop.f32.mrf.mxu0
      %v3427 = vadd.f32 %v3338, %v3426
      %v3428 = vpop.f32.mrf.mxu0
      %v3429 = vadd.f32 %v3340, %v3428
      %3430 = vmatmul.bf16.gmra.mxu0 %v3260
      %v3431 = vpop.f32.mrf.mxu0
      %v3432 = vadd.f32 %v3343, %v3431
      %v3433 = vpop.f32.mrf.mxu0
      %v3434 = vadd.f32 %v3345, %v3433
      %3435 = vmatmul.bf16.gmra.mxu0 %v3262
      %v3436 = vpop.f32.mrf.mxu0
      %v3437 = vadd.f32 %v3348, %v3436
      %v3438 = vpop.f32.mrf.mxu0
      %v3439 = vadd.f32 %v3350, %v3438
      %3440 = vdwg.mxu0
      %v3441 = vmul.f32 %v3362, %v3199
      %v3442 = vmul.f32 %v3364, %v3200
      %v3443 = vmul.f32 %v3367, %v3201
      %v3444 = vmul.f32 %v3369, %v3202
      %v3445 = vmul.f32 %v3372, %v3203
      %v3446 = vmul.f32 %v3374, %v3204
      %v3447 = vmul.f32 %v3377, %v3205
      %v3448 = vmul.f32 %v3379, %v3206
      %v3449 = vmul.f32 %v3382, %v3207
      %v3450 = vmul.f32 %v3384, %v3208
      %v3451 = vmul.f32 %v3387, %v3209
      %v3452 = vmul.f32 %v3389, %v3210
      %v3453 = vmul.f32 %v3392, %v3211
      %v3454 = vmul.f32 %v3394, %v3212
      %v3455 = vmul.f32 %v3397, %v3213
      %v3456 = vmul.f32 %v3399, %v3214
      %v3457 = vmul.f32 %v3402, %v3215
      %v3458 = vmul.f32 %v3404, %v3216
      %v3459 = vmul.f32 %v3407, %v3217
      %v3460 = vmul.f32 %v3409, %v3218
      %v3461 = vmul.f32 %v3412, %v3219
      %v3462 = vmul.f32 %v3414, %v3220
      %v3463 = vmul.f32 %v3417, %v3221
      %v3464 = vmul.f32 %v3419, %v3222
      %v3465 = vmul.f32 %v3422, %v3223
      %v3466 = vmul.f32 %v3424, %v3224
      %v3467 = vmul.f32 %v3427, %v3225
      %v3468 = vmul.f32 %v3429, %v3226
      %v3469 = vmul.f32 %v3432, %v3227
      %v3470 = vmul.f32 %v3434, %v3228
      %v3471 = vmul.f32 %v3437, %v3229
      %v3472 = vmul.f32 %v3439, %v3230
      %v3473 = vpack.c.bf16 %v532, %v529
      %v3474 = vpack.c.bf16 %v621, %v618
      %v3475 = vpack.c.bf16 %v538, %v535
      %v3476 = vpack.c.bf16 %v627, %v624
      %3477 = vxpose.binary.xlu0.c.b16.start [1/16] %v3474, %v3473, 128
      %3478 = vxpose.binary.xlu0.c.b16.cont [2/16] %v3476, %v3475, 128
      %3479 = vxpose.binary.xlu0.c.b16.cont [3/16] 0, 0, 128
      %3480 = vxpose.binary.xlu0.c.b16.cont [4/16] 0, 0, 128
      %3481 = vxpose.binary.xlu0.c.b16.cont [5/16] 0, 0, 128
      %3482 = vxpose.binary.xlu0.c.b16.cont [6/16] 0, 0, 128
      %3483 = vxpose.binary.xlu0.c.b16.cont [7/16] 0, 0, 128
      %3484 = vxpose.binary.xlu0.c.b16.end [8/16] 0, 0, 128
      %v3485 = vpop.trf.xlu0
      %v3486 = vpop.trf.xlu0
      %v3487 = vpop.trf.xlu0
      %v3488 = vpop.trf.xlu0
      %v3489 = vpop.trf.xlu0
      %v3490 = vpop.trf.xlu0
      %v3491 = vpop.trf.xlu0
      %v3492 = vpop.trf.xlu0
      %v3493 = vpop.trf.xlu0
      %v3494 = vpop.trf.xlu0
      %v3495 = vpop.trf.xlu0
      %v3496 = vpop.trf.xlu0
      %v3497 = vpop.trf.xlu0
      %v3498 = vpop.trf.xlu0
      %v3499 = vpop.trf.xlu0
      %v3500 = vpop.trf.xlu0
      %v3502 = vsel %vm402, %v3485, 0
      %v3505 = vsel %vm402, %v3487, 0
      %v3508 = vsel %vm402, %v3489, 0
      %v3511 = vsel %vm402, %v3491, 0
      %v3514 = vsel %vm402, %v3493, 0
      %v3517 = vsel %vm402, %v3495, 0
      %v3520 = vsel %vm402, %v3497, 0
      %v3523 = vsel %vm402, %v3499, 0
      %v3526 = vsel %vm402, %v3486, 0
      %v3529 = vsel %vm402, %v3488, 0
      %v3532 = vsel %vm402, %v3490, 0
      %v3535 = vsel %vm402, %v3492, 0
      %v3538 = vsel %vm402, %v3494, 0
      %v3541 = vsel %vm402, %v3496, 0
      %v3544 = vsel %vm402, %v3498, 0
      %v3547 = vsel %vm402, %v3500, 0
      %3549 = vmatpush.bf16.msra.mxu0 0
      %3550 = vmatpush.bf16.msra.mxu0 0
      %3551 = vmatpush.bf16.msra.mxu0 0
      %3552 = vmatpush.bf16.msra.mxu0 0
      %3553 = vmatpush.bf16.msra.mxu0 0
      %3554 = vmatpush.bf16.msra.mxu0 0
      %3555 = vmatpush.bf16.msra.mxu0 %v655
      %3556 = vmatpush.bf16.msra.mxu0 %v653
      %3557 = vmatmul.bf16.gmra.mxu0 %v3502
      %v3558 = vpop.f32.mrf.mxu0
      %v3559 = vadd.f32 0.0, %v3558
      %v3560 = vpop.f32.mrf.mxu0
      %v3561 = vadd.f32 0.0, %v3560
      %3562 = vmatmul.bf16.gmra.mxu0 %v3505
      %v3563 = vpop.f32.mrf.mxu0
      %v3564 = vadd.f32 0.0, %v3563
      %v3565 = vpop.f32.mrf.mxu0
      %v3566 = vadd.f32 0.0, %v3565
      %3567 = vmatmul.bf16.gmra.mxu0 %v3508
      %v3568 = vpop.f32.mrf.mxu0
      %v3569 = vadd.f32 0.0, %v3568
      %v3570 = vpop.f32.mrf.mxu0
      %v3571 = vadd.f32 0.0, %v3570
      %3572 = vmatmul.bf16.gmra.mxu0 %v3511
      %v3573 = vpop.f32.mrf.mxu0
      %v3574 = vadd.f32 0.0, %v3573
      %v3575 = vpop.f32.mrf.mxu0
      %v3576 = vadd.f32 0.0, %v3575
      %3577 = vmatmul.bf16.gmra.mxu0 %v3514
      %v3578 = vpop.f32.mrf.mxu0
      %v3579 = vadd.f32 0.0, %v3578
      %v3580 = vpop.f32.mrf.mxu0
      %v3581 = vadd.f32 0.0, %v3580
      %3582 = vmatmul.bf16.gmra.mxu0 %v3517
      %v3583 = vpop.f32.mrf.mxu0
      %v3584 = vadd.f32 0.0, %v3583
      %v3585 = vpop.f32.mrf.mxu0
      %v3586 = vadd.f32 0.0, %v3585
      %3587 = vmatmul.bf16.gmra.mxu0 %v3520
      %v3588 = vpop.f32.mrf.mxu0
      %v3589 = vadd.f32 0.0, %v3588
      %v3590 = vpop.f32.mrf.mxu0
      %v3591 = vadd.f32 0.0, %v3590
      %3592 = vmatmul.bf16.gmra.mxu0 %v3523
      %v3593 = vpop.f32.mrf.mxu0
      %v3594 = vadd.f32 0.0, %v3593
      %v3595 = vpop.f32.mrf.mxu0
      %v3596 = vadd.f32 0.0, %v3595
      %3597 = vmatmul.bf16.gmra.mxu0 %v3526
      %v3598 = vpop.f32.mrf.mxu0
      %v3599 = vadd.f32 0.0, %v3598
      %v3600 = vpop.f32.mrf.mxu0
      %v3601 = vadd.f32 0.0, %v3600
      %3602 = vmatmul.bf16.gmra.mxu0 %v3529
      %v3603 = vpop.f32.mrf.mxu0
      %v3604 = vadd.f32 0.0, %v3603
      %v3605 = vpop.f32.mrf.mxu0
      %v3606 = vadd.f32 0.0, %v3605
      %3607 = vmatmul.bf16.gmra.mxu0 %v3532
      %v3608 = vpop.f32.mrf.mxu0
      %v3609 = vadd.f32 0.0, %v3608
      %v3610 = vpop.f32.mrf.mxu0
      %v3611 = vadd.f32 0.0, %v3610
      %3612 = vmatmul.bf16.gmra.mxu0 %v3535
      %v3613 = vpop.f32.mrf.mxu0
      %v3614 = vadd.f32 0.0, %v3613
      %v3615 = vpop.f32.mrf.mxu0
      %v3616 = vadd.f32 0.0, %v3615
      %3617 = vmatmul.bf16.gmra.mxu0 %v3538
      %v3618 = vpop.f32.mrf.mxu0
      %v3619 = vadd.f32 0.0, %v3618
      %v3620 = vpop.f32.mrf.mxu0
      %v3621 = vadd.f32 0.0, %v3620
      %3622 = vmatmul.bf16.gmra.mxu0 %v3541
      %v3623 = vpop.f32.mrf.mxu0
      %v3624 = vadd.f32 0.0, %v3623
      %v3625 = vpop.f32.mrf.mxu0
      %v3626 = vadd.f32 0.0, %v3625
      %3627 = vmatmul.bf16.gmra.mxu0 %v3544
      %v3628 = vpop.f32.mrf.mxu0
      %v3629 = vadd.f32 0.0, %v3628
      %v3630 = vpop.f32.mrf.mxu0
      %v3631 = vadd.f32 0.0, %v3630
      %3632 = vmatmul.bf16.gmra.mxu0 %v3547
      %v3633 = vpop.f32.mrf.mxu0
      %v3634 = vadd.f32 0.0, %v3633
      %v3635 = vpop.f32.mrf.mxu0
      %v3636 = vadd.f32 0.0, %v3635
      %3637 = vdwg.mxu0
      %3638 = vmatpush.bf16.msra.mxu0 0
      %3639 = vmatpush.bf16.msra.mxu0 0
      %3640 = vmatpush.bf16.msra.mxu0 0
      %3641 = vmatpush.bf16.msra.mxu0 0
      %3642 = vmatpush.bf16.msra.mxu0 0
      %3643 = vmatpush.bf16.msra.mxu0 0
      %3644 = vmatpush.bf16.msra.mxu0 %v656
      %3645 = vmatpush.bf16.msra.mxu0 %v654
      %3646 = vmatmul.bf16.gmra.mxu0 %v3502
      %v3647 = vpop.f32.mrf.mxu0
      %v3648 = vadd.f32 0.0, %v3647
      %v3649 = vpop.f32.mrf.mxu0
      %v3650 = vadd.f32 0.0, %v3649
      %3651 = vmatmul.bf16.gmra.mxu0 %v3505
      %v3652 = vpop.f32.mrf.mxu0
      %v3653 = vadd.f32 0.0, %v3652
      %v3654 = vpop.f32.mrf.mxu0
      %v3655 = vadd.f32 0.0, %v3654
      %3656 = vmatmul.bf16.gmra.mxu0 %v3508
      %v3657 = vpop.f32.mrf.mxu0
      %v3658 = vadd.f32 0.0, %v3657
      %v3659 = vpop.f32.mrf.mxu0
      %v3660 = vadd.f32 0.0, %v3659
      %3661 = vmatmul.bf16.gmra.mxu0 %v3511
      %v3662 = vpop.f32.mrf.mxu0
      %v3663 = vadd.f32 0.0, %v3662
      %v3664 = vpop.f32.mrf.mxu0
      %v3665 = vadd.f32 0.0, %v3664
      %3666 = vmatmul.bf16.gmra.mxu0 %v3514
      %v3667 = vpop.f32.mrf.mxu0
      %v3668 = vadd.f32 0.0, %v3667
      %v3669 = vpop.f32.mrf.mxu0
      %v3670 = vadd.f32 0.0, %v3669
      %3671 = vmatmul.bf16.gmra.mxu0 %v3517
      %v3672 = vpop.f32.mrf.mxu0
      %v3673 = vadd.f32 0.0, %v3672
      %v3674 = vpop.f32.mrf.mxu0
      %v3675 = vadd.f32 0.0, %v3674
      %3676 = vmatmul.bf16.gmra.mxu0 %v3520
      %v3677 = vpop.f32.mrf.mxu0
      %v3678 = vadd.f32 0.0, %v3677
      %v3679 = vpop.f32.mrf.mxu0
      %v3680 = vadd.f32 0.0, %v3679
      %3681 = vmatmul.bf16.gmra.mxu0 %v3523
      %v3682 = vpop.f32.mrf.mxu0
      %v3683 = vadd.f32 0.0, %v3682
      %v3684 = vpop.f32.mrf.mxu0
      %v3685 = vadd.f32 0.0, %v3684
      %3686 = vmatmul.bf16.gmra.mxu0 %v3526
      %v3687 = vpop.f32.mrf.mxu0
      %v3688 = vadd.f32 0.0, %v3687
      %v3689 = vpop.f32.mrf.mxu0
      %v3690 = vadd.f32 0.0, %v3689
      %3691 = vmatmul.bf16.gmra.mxu0 %v3529
      %v3692 = vpop.f32.mrf.mxu0
      %v3693 = vadd.f32 0.0, %v3692
      %v3694 = vpop.f32.mrf.mxu0
      %v3695 = vadd.f32 0.0, %v3694
      %3696 = vmatmul.bf16.gmra.mxu0 %v3532
      %v3697 = vpop.f32.mrf.mxu0
      %v3698 = vadd.f32 0.0, %v3697
      %v3699 = vpop.f32.mrf.mxu0
      %v3700 = vadd.f32 0.0, %v3699
      %3701 = vmatmul.bf16.gmra.mxu0 %v3535
      %v3702 = vpop.f32.mrf.mxu0
      %v3703 = vadd.f32 0.0, %v3702
      %v3704 = vpop.f32.mrf.mxu0
      %v3705 = vadd.f32 0.0, %v3704
      %3706 = vmatmul.bf16.gmra.mxu0 %v3538
      %v3707 = vpop.f32.mrf.mxu0
      %v3708 = vadd.f32 0.0, %v3707
      %v3709 = vpop.f32.mrf.mxu0
      %v3710 = vadd.f32 0.0, %v3709
      %3711 = vmatmul.bf16.gmra.mxu0 %v3541
      %v3712 = vpop.f32.mrf.mxu0
      %v3713 = vadd.f32 0.0, %v3712
      %v3714 = vpop.f32.mrf.mxu0
      %v3715 = vadd.f32 0.0, %v3714
      %3716 = vmatmul.bf16.gmra.mxu0 %v3544
      %v3717 = vpop.f32.mrf.mxu0
      %v3718 = vadd.f32 0.0, %v3717
      %v3719 = vpop.f32.mrf.mxu0
      %v3720 = vadd.f32 0.0, %v3719
      %3721 = vmatmul.bf16.gmra.mxu0 %v3547
      %v3722 = vpop.f32.mrf.mxu0
      %v3723 = vadd.f32 0.0, %v3722
      %v3724 = vpop.f32.mrf.mxu0
      %v3725 = vadd.f32 0.0, %v3724
      %3726 = vdwg.mxu0
      %v3727 = vmax.f32 %v3559, %v3648
      %3728 = vmax.xlane.f32.xlu0 %v3727
      %v3729 = vpop.xlane.xlu0 %3728
      %v3730 = vmax.f32 %v3561, %v3650
      %3731 = vmax.xlane.f32.xlu0 %v3730
      %v3732 = vpop.xlane.xlu0 %3731
      %v3733 = vmax.f32 %v3564, %v3653
      %3734 = vmax.xlane.f32.xlu0 %v3733
      %v3735 = vpop.xlane.xlu0 %3734
      %v3736 = vmax.f32 %v3566, %v3655
      %3737 = vmax.xlane.f32.xlu0 %v3736
      %v3738 = vpop.xlane.xlu0 %3737
      %v3739 = vmax.f32 %v3569, %v3658
      %3740 = vmax.xlane.f32.xlu0 %v3739
      %v3741 = vpop.xlane.xlu0 %3740
      %v3742 = vmax.f32 %v3571, %v3660
      %3743 = vmax.xlane.f32.xlu0 %v3742
      %v3744 = vpop.xlane.xlu0 %3743
      %v3745 = vmax.f32 %v3574, %v3663
      %3746 = vmax.xlane.f32.xlu0 %v3745
      %v3747 = vpop.xlane.xlu0 %3746
      %v3748 = vmax.f32 %v3576, %v3665
      %3749 = vmax.xlane.f32.xlu0 %v3748
      %v3750 = vpop.xlane.xlu0 %3749
      %v3751 = vmax.f32 %v3579, %v3668
      %3752 = vmax.xlane.f32.xlu0 %v3751
      %v3753 = vpop.xlane.xlu0 %3752
      %v3754 = vmax.f32 %v3581, %v3670
      %3755 = vmax.xlane.f32.xlu0 %v3754
      %v3756 = vpop.xlane.xlu0 %3755
      %v3757 = vmax.f32 %v3584, %v3673
      %3758 = vmax.xlane.f32.xlu0 %v3757
      %v3759 = vpop.xlane.xlu0 %3758
      %v3760 = vmax.f32 %v3586, %v3675
      %3761 = vmax.xlane.f32.xlu0 %v3760
      %v3762 = vpop.xlane.xlu0 %3761
      %v3763 = vmax.f32 %v3589, %v3678
      %3764 = vmax.xlane.f32.xlu0 %v3763
      %v3765 = vpop.xlane.xlu0 %3764
      %v3766 = vmax.f32 %v3591, %v3680
      %3767 = vmax.xlane.f32.xlu0 %v3766
      %v3768 = vpop.xlane.xlu0 %3767
      %v3769 = vmax.f32 %v3594, %v3683
      %3770 = vmax.xlane.f32.xlu0 %v3769
      %v3771 = vpop.xlane.xlu0 %3770
      %v3772 = vmax.f32 %v3596, %v3685
      %3773 = vmax.xlane.f32.xlu0 %v3772
      %v3774 = vpop.xlane.xlu0 %3773
      %v3775 = vmax.f32 %v3599, %v3688
      %3776 = vmax.xlane.f32.xlu0 %v3775
      %v3777 = vpop.xlane.xlu0 %3776
      %v3778 = vmax.f32 %v3601, %v3690
      %3779 = vmax.xlane.f32.xlu0 %v3778
      %v3780 = vpop.xlane.xlu0 %3779
      %v3781 = vmax.f32 %v3604, %v3693
      %3782 = vmax.xlane.f32.xlu0 %v3781
      %v3783 = vpop.xlane.xlu0 %3782
      %v3784 = vmax.f32 %v3606, %v3695
      %3785 = vmax.xlane.f32.xlu0 %v3784
      %v3786 = vpop.xlane.xlu0 %3785
      %v3787 = vmax.f32 %v3609, %v3698
      %3788 = vmax.xlane.f32.xlu0 %v3787
      %v3789 = vpop.xlane.xlu0 %3788
      %v3790 = vmax.f32 %v3611, %v3700
      %3791 = vmax.xlane.f32.xlu0 %v3790
      %v3792 = vpop.xlane.xlu0 %3791
      %v3793 = vmax.f32 %v3614, %v3703
      %3794 = vmax.xlane.f32.xlu0 %v3793
      %v3795 = vpop.xlane.xlu0 %3794
      %v3796 = vmax.f32 %v3616, %v3705
      %3797 = vmax.xlane.f32.xlu0 %v3796
      %v3798 = vpop.xlane.xlu0 %3797
      %v3799 = vmax.f32 %v3619, %v3708
      %3800 = vmax.xlane.f32.xlu0 %v3799
      %v3801 = vpop.xlane.xlu0 %3800
      %v3802 = vmax.f32 %v3621, %v3710
      %3803 = vmax.xlane.f32.xlu0 %v3802
      %v3804 = vpop.xlane.xlu0 %3803
      %v3805 = vmax.f32 %v3624, %v3713
      %3806 = vmax.xlane.f32.xlu0 %v3805
      %v3807 = vpop.xlane.xlu0 %3806
      %v3808 = vmax.f32 %v3626, %v3715
      %3809 = vmax.xlane.f32.xlu0 %v3808
      %v3810 = vpop.xlane.xlu0 %3809
      %v3811 = vmax.f32 %v3629, %v3718
      %3812 = vmax.xlane.f32.xlu0 %v3811
      %v3813 = vpop.xlane.xlu0 %3812
      %v3814 = vmax.f32 %v3631, %v3720
      %3815 = vmax.xlane.f32.xlu0 %v3814
      %v3816 = vpop.xlane.xlu0 %3815
      %v3817 = vmax.f32 %v3634, %v3723
      %3818 = vmax.xlane.f32.xlu0 %v3817
      %v3819 = vpop.xlane.xlu0 %3818
      %v3820 = vmax.f32 %v3636, %v3725
      %3821 = vmax.xlane.f32.xlu0 %v3820
      %v3822 = vpop.xlane.xlu0 %3821
      %v3823 = vsub.f32 %v3559, %v3729
      %v3824 = vsub.f32 %v3648, %v3729
      %v3825 = vsub.f32 %v3561, %v3732
      %v3826 = vsub.f32 %v3650, %v3732
      %v3827 = vsub.f32 %v3564, %v3735
      %v3828 = vsub.f32 %v3653, %v3735
      %v3829 = vsub.f32 %v3566, %v3738
      %v3830 = vsub.f32 %v3655, %v3738
      %v3831 = vsub.f32 %v3569, %v3741
      %v3832 = vsub.f32 %v3658, %v3741
      %v3833 = vsub.f32 %v3571, %v3744
      %v3834 = vsub.f32 %v3660, %v3744
      %v3835 = vsub.f32 %v3574, %v3747
      %v3836 = vsub.f32 %v3663, %v3747
      %v3837 = vsub.f32 %v3576, %v3750
      %v3838 = vsub.f32 %v3665, %v3750
      %v3839 = vsub.f32 %v3579, %v3753
      %v3840 = vsub.f32 %v3668, %v3753
      %v3841 = vsub.f32 %v3581, %v3756
      %v3842 = vsub.f32 %v3670, %v3756
      %v3843 = vsub.f32 %v3584, %v3759
      %v3844 = vsub.f32 %v3673, %v3759
      %v3845 = vsub.f32 %v3586, %v3762
      %v3846 = vsub.f32 %v3675, %v3762
      %v3847 = vsub.f32 %v3589, %v3765
      %v3848 = vsub.f32 %v3678, %v3765
      %v3849 = vsub.f32 %v3591, %v3768
      %v3850 = vsub.f32 %v3680, %v3768
      %v3851 = vsub.f32 %v3594, %v3771
      %v3852 = vsub.f32 %v3683, %v3771
      %v3853 = vsub.f32 %v3596, %v3774
      %v3854 = vsub.f32 %v3685, %v3774
      %v3855 = vsub.f32 %v3599, %v3777
      %v3856 = vsub.f32 %v3688, %v3777
      %v3857 = vsub.f32 %v3601, %v3780
      %v3858 = vsub.f32 %v3690, %v3780
      %v3859 = vsub.f32 %v3604, %v3783
      %v3860 = vsub.f32 %v3693, %v3783
      %v3861 = vsub.f32 %v3606, %v3786
      %v3862 = vsub.f32 %v3695, %v3786
      %v3863 = vsub.f32 %v3609, %v3789
      %v3864 = vsub.f32 %v3698, %v3789
      %v3865 = vsub.f32 %v3611, %v3792
      %v3866 = vsub.f32 %v3700, %v3792
      %v3867 = vsub.f32 %v3614, %v3795
      %v3868 = vsub.f32 %v3703, %v3795
      %v3869 = vsub.f32 %v3616, %v3798
      %v3870 = vsub.f32 %v3705, %v3798
      %v3871 = vsub.f32 %v3619, %v3801
      %v3872 = vsub.f32 %v3708, %v3801
      %v3873 = vsub.f32 %v3621, %v3804
      %v3874 = vsub.f32 %v3710, %v3804
      %v3875 = vsub.f32 %v3624, %v3807
      %v3876 = vsub.f32 %v3713, %v3807
      %v3877 = vsub.f32 %v3626, %v3810
      %v3878 = vsub.f32 %v3715, %v3810
      %v3879 = vsub.f32 %v3629, %v3813
      %v3880 = vsub.f32 %v3718, %v3813
      %v3881 = vsub.f32 %v3631, %v3816
      %v3882 = vsub.f32 %v3720, %v3816
      %v3883 = vsub.f32 %v3634, %v3819
      %v3884 = vsub.f32 %v3723, %v3819
      %v3885 = vsub.f32 %v3636, %v3822
      %v3886 = vsub.f32 %v3725, %v3822
      %v3887 = vmul.f32 %v3823, 1.442695
      %v3888 = vpow.pop %v3887
      %v3889 = vmul.f32 %v3824, 1.442695
      %v3890 = vpow.pop %v3889
      %v3891 = vmul.f32 %v3825, 1.442695
      %v3892 = vpow.pop %v3891
      %v3893 = vmul.f32 %v3826, 1.442695
      %v3894 = vpow.pop %v3893
      %v3895 = vmul.f32 %v3827, 1.442695
      %v3896 = vpow.pop %v3895
      %v3897 = vmul.f32 %v3828, 1.442695
      %v3898 = vpow.pop %v3897
      %v3899 = vmul.f32 %v3829, 1.442695
      %v3900 = vpow.pop %v3899
      %v3901 = vmul.f32 %v3830, 1.442695
      %v3902 = vpow.pop %v3901
      %v3903 = vmul.f32 %v3831, 1.442695
      %v3904 = vpow.pop %v3903
      %v3905 = vmul.f32 %v3832, 1.442695
      %v3906 = vpow.pop %v3905
      %v3907 = vmul.f32 %v3833, 1.442695
      %v3908 = vpow.pop %v3907
      %v3909 = vmul.f32 %v3834, 1.442695
      %v3910 = vpow.pop %v3909
      %v3911 = vmul.f32 %v3835, 1.442695
      %v3912 = vpow.pop %v3911
      %v3913 = vmul.f32 %v3836, 1.442695
      %v3914 = vpow.pop %v3913
      %v3915 = vmul.f32 %v3837, 1.442695
      %v3916 = vpow.pop %v3915
      %v3917 = vmul.f32 %v3838, 1.442695
      %v3918 = vpow.pop %v3917
      %v3919 = vmul.f32 %v3839, 1.442695
      %v3920 = vpow.pop %v3919
      %v3921 = vmul.f32 %v3840, 1.442695
      %v3922 = vpow.pop %v3921
      %v3923 = vmul.f32 %v3841, 1.442695
      %v3924 = vpow.pop %v3923
      %v3925 = vmul.f32 %v3842, 1.442695
      %v3926 = vpow.pop %v3925
      %v3927 = vmul.f32 %v3843, 1.442695
      %v3928 = vpow.pop %v3927
      %v3929 = vmul.f32 %v3844, 1.442695
      %v3930 = vpow.pop %v3929
      %v3931 = vmul.f32 %v3845, 1.442695
      %v3932 = vpow.pop %v3931
      %v3933 = vmul.f32 %v3846, 1.442695
      %v3934 = vpow.pop %v3933
      %v3935 = vmul.f32 %v3847, 1.442695
      %v3936 = vpow.pop %v3935
      %v3937 = vmul.f32 %v3848, 1.442695
      %v3938 = vpow.pop %v3937
      %v3939 = vmul.f32 %v3849, 1.442695
      %v3940 = vpow.pop %v3939
      %v3941 = vmul.f32 %v3850, 1.442695
      %v3942 = vpow.pop %v3941
      %v3943 = vmul.f32 %v3851, 1.442695
      %v3944 = vpow.pop %v3943
      %v3945 = vmul.f32 %v3852, 1.442695
      %v3946 = vpow.pop %v3945
      %v3947 = vmul.f32 %v3853, 1.442695
      %v3948 = vpow.pop %v3947
      %v3949 = vmul.f32 %v3854, 1.442695
      %v3950 = vpow.pop %v3949
      %v3951 = vmul.f32 %v3855, 1.442695
      %v3952 = vpow.pop %v3951
      %v3953 = vmul.f32 %v3856, 1.442695
      %v3954 = vpow.pop %v3953
      %v3955 = vmul.f32 %v3857, 1.442695
      %v3956 = vpow.pop %v3955
      %v3957 = vmul.f32 %v3858, 1.442695
      %v3958 = vpow.pop %v3957
      %v3959 = vmul.f32 %v3859, 1.442695
      %v3960 = vpow.pop %v3959
      %v3961 = vmul.f32 %v3860, 1.442695
      %v3962 = vpow.pop %v3961
      %v3963 = vmul.f32 %v3861, 1.442695
      %v3964 = vpow.pop %v3963
      %v3965 = vmul.f32 %v3862, 1.442695
      %v3966 = vpow.pop %v3965
      %v3967 = vmul.f32 %v3863, 1.442695
      %v3968 = vpow.pop %v3967
      %v3969 = vmul.f32 %v3864, 1.442695
      %v3970 = vpow.pop %v3969
      %v3971 = vmul.f32 %v3865, 1.442695
      %v3972 = vpow.pop %v3971
      %v3973 = vmul.f32 %v3866, 1.442695
      %v3974 = vpow.pop %v3973
      %v3975 = vmul.f32 %v3867, 1.442695
      %v3976 = vpow.pop %v3975
      %v3977 = vmul.f32 %v3868, 1.442695
      %v3978 = vpow.pop %v3977
      %v3979 = vmul.f32 %v3869, 1.442695
      %v3980 = vpow.pop %v3979
      %v3981 = vmul.f32 %v3870, 1.442695
      %v3982 = vpow.pop %v3981
      %v3983 = vmul.f32 %v3871, 1.442695
      %v3984 = vpow.pop %v3983
      %v3985 = vmul.f32 %v3872, 1.442695
      %v3986 = vpow.pop %v3985
      %v3987 = vmul.f32 %v3873, 1.442695
      %v3988 = vpow.pop %v3987
      %v3989 = vmul.f32 %v3874, 1.442695
      %v3990 = vpow.pop %v3989
      %v3991 = vmul.f32 %v3875, 1.442695
      %v3992 = vpow.pop %v3991
      %v3993 = vmul.f32 %v3876, 1.442695
      %v3994 = vpow.pop %v3993
      %v3995 = vmul.f32 %v3877, 1.442695
      %v3996 = vpow.pop %v3995
      %v3997 = vmul.f32 %v3878, 1.442695
      %v3998 = vpow.pop %v3997
      %v3999 = vmul.f32 %v3879, 1.442695
      %v4000 = vpow.pop %v3999
      %v4001 = vmul.f32 %v3880, 1.442695
      %v4002 = vpow.pop %v4001
      %v4003 = vmul.f32 %v3881, 1.442695
      %v4004 = vpow.pop %v4003
      %v4005 = vmul.f32 %v3882, 1.442695
      %v4006 = vpow.pop %v4005
      %v4007 = vmul.f32 %v3883, 1.442695
      %v4008 = vpow.pop %v4007
      %v4009 = vmul.f32 %v3884, 1.442695
      %v4010 = vpow.pop %v4009
      %v4011 = vmul.f32 %v3885, 1.442695
      %v4012 = vpow.pop %v4011
      %v4013 = vmul.f32 %v3886, 1.442695
      %v4014 = vpow.pop %v4013
      %v4015 = vadd.f32 %v3888, %v3890
      %4016 = vadd.xlane.f32.xlu0 %v4015
      %v4017 = vpop.xlane.xlu0 %4016
      %v4018 = vadd.f32 %v3892, %v3894
      %4019 = vadd.xlane.f32.xlu0 %v4018
      %v4020 = vpop.xlane.xlu0 %4019
      %v4021 = vadd.f32 %v3896, %v3898
      %4022 = vadd.xlane.f32.xlu0 %v4021
      %v4023 = vpop.xlane.xlu0 %4022
      %v4024 = vadd.f32 %v3900, %v3902
      %4025 = vadd.xlane.f32.xlu0 %v4024
      %v4026 = vpop.xlane.xlu0 %4025
      %v4027 = vadd.f32 %v3904, %v3906
      %4028 = vadd.xlane.f32.xlu0 %v4027
      %v4029 = vpop.xlane.xlu0 %4028
      %v4030 = vadd.f32 %v3908, %v3910
      %4031 = vadd.xlane.f32.xlu0 %v4030
      %v4032 = vpop.xlane.xlu0 %4031
      %v4033 = vadd.f32 %v3912, %v3914
      %4034 = vadd.xlane.f32.xlu0 %v4033
      %v4035 = vpop.xlane.xlu0 %4034
      %v4036 = vadd.f32 %v3916, %v3918
      %4037 = vadd.xlane.f32.xlu0 %v4036
      %v4038 = vpop.xlane.xlu0 %4037
      %v4039 = vadd.f32 %v3920, %v3922
      %4040 = vadd.xlane.f32.xlu0 %v4039
      %v4041 = vpop.xlane.xlu0 %4040
      %v4042 = vadd.f32 %v3924, %v3926
      %4043 = vadd.xlane.f32.xlu0 %v4042
      %v4044 = vpop.xlane.xlu0 %4043
      %v4045 = vadd.f32 %v3928, %v3930
      %4046 = vadd.xlane.f32.xlu0 %v4045
      %v4047 = vpop.xlane.xlu0 %4046
      %v4048 = vadd.f32 %v3932, %v3934
      %4049 = vadd.xlane.f32.xlu0 %v4048
      %v4050 = vpop.xlane.xlu0 %4049
      %v4051 = vadd.f32 %v3936, %v3938
      %4052 = vadd.xlane.f32.xlu0 %v4051
      %v4053 = vpop.xlane.xlu0 %4052
      %v4054 = vadd.f32 %v3940, %v3942
      %4055 = vadd.xlane.f32.xlu0 %v4054
      %v4056 = vpop.xlane.xlu0 %4055
      %v4057 = vadd.f32 %v3944, %v3946
      %4058 = vadd.xlane.f32.xlu0 %v4057
      %v4059 = vpop.xlane.xlu0 %4058
      %v4060 = vadd.f32 %v3948, %v3950
      %4061 = vadd.xlane.f32.xlu0 %v4060
      %v4062 = vpop.xlane.xlu0 %4061
      %v4063 = vadd.f32 %v3952, %v3954
      %4064 = vadd.xlane.f32.xlu0 %v4063
      %v4065 = vpop.xlane.xlu0 %4064
      %v4066 = vadd.f32 %v3956, %v3958
      %4067 = vadd.xlane.f32.xlu0 %v4066
      %v4068 = vpop.xlane.xlu0 %4067
      %v4069 = vadd.f32 %v3960, %v3962
      %4070 = vadd.xlane.f32.xlu0 %v4069
      %v4071 = vpop.xlane.xlu0 %4070
      %v4072 = vadd.f32 %v3964, %v3966
      %4073 = vadd.xlane.f32.xlu0 %v4072
      %v4074 = vpop.xlane.xlu0 %4073
      %v4075 = vadd.f32 %v3968, %v3970
      %4076 = vadd.xlane.f32.xlu0 %v4075
      %v4077 = vpop.xlane.xlu0 %4076
      %v4078 = vadd.f32 %v3972, %v3974
      %4079 = vadd.xlane.f32.xlu0 %v4078
      %v4080 = vpop.xlane.xlu0 %4079
      %v4081 = vadd.f32 %v3976, %v3978
      %4082 = vadd.xlane.f32.xlu0 %v4081
      %v4083 = vpop.xlane.xlu0 %4082
      %v4084 = vadd.f32 %v3980, %v3982
      %4085 = vadd.xlane.f32.xlu0 %v4084
      %v4086 = vpop.xlane.xlu0 %4085
      %v4087 = vadd.f32 %v3984, %v3986
      %4088 = vadd.xlane.f32.xlu0 %v4087
      %v4089 = vpop.xlane.xlu0 %4088
      %v4090 = vadd.f32 %v3988, %v3990
      %4091 = vadd.xlane.f32.xlu0 %v4090
      %v4092 = vpop.xlane.xlu0 %4091
      %v4093 = vadd.f32 %v3992, %v3994
      %4094 = vadd.xlane.f32.xlu0 %v4093
      %v4095 = vpop.xlane.xlu0 %4094
      %v4096 = vadd.f32 %v3996, %v3998
      %4097 = vadd.xlane.f32.xlu0 %v4096
      %v4098 = vpop.xlane.xlu0 %4097
      %v4099 = vadd.f32 %v4000, %v4002
      %4100 = vadd.xlane.f32.xlu0 %v4099
      %v4101 = vpop.xlane.xlu0 %4100
      %v4102 = vadd.f32 %v4004, %v4006
      %4103 = vadd.xlane.f32.xlu0 %v4102
      %v4104 = vpop.xlane.xlu0 %4103
      %v4105 = vadd.f32 %v4008, %v4010
      %4106 = vadd.xlane.f32.xlu0 %v4105
      %v4107 = vpop.xlane.xlu0 %4106
      %v4108 = vadd.f32 %v4012, %v4014
      %4109 = vadd.xlane.f32.xlu0 %v4108
      %v4110 = vpop.xlane.xlu0 %4109
      %v4111 = vrcp.pop %v4017
      %v4112 = vrcp.pop %v4020
      %v4113 = vrcp.pop %v4023
      %v4114 = vrcp.pop %v4026
      %v4115 = vrcp.pop %v4029
      %v4116 = vrcp.pop %v4032
      %v4117 = vrcp.pop %v4035
      %v4118 = vrcp.pop %v4038
      %v4119 = vrcp.pop %v4041
      %v4120 = vrcp.pop %v4044
      %v4121 = vrcp.pop %v4047
      %v4122 = vrcp.pop %v4050
      %v4123 = vrcp.pop %v4053
      %v4124 = vrcp.pop %v4056
      %v4125 = vrcp.pop %v4059
      %v4126 = vrcp.pop %v4062
      %v4127 = vrcp.pop %v4065
      %v4128 = vrcp.pop %v4068
      %v4129 = vrcp.pop %v4071
      %v4130 = vrcp.pop %v4074
      %v4131 = vrcp.pop %v4077
      %v4132 = vrcp.pop %v4080
      %v4133 = vrcp.pop %v4083
      %v4134 = vrcp.pop %v4086
      %v4135 = vrcp.pop %v4089
      %v4136 = vrcp.pop %v4092
      %v4137 = vrcp.pop %v4095
      %v4138 = vrcp.pop %v4098
      %v4139 = vrcp.pop %v4101
      %v4140 = vrcp.pop %v4104
      %v4141 = vrcp.pop %v4107
      %v4142 = vrcp.pop %v4110
      %v4143 = vpack.c.bf16 %v3892, %v3888
      %v4144 = vpack.c.bf16 %v3894, %v3890
      %v4145 = vpack.c.bf16 %v3900, %v3896
      %v4146 = vpack.c.bf16 %v3902, %v3898
      %v4147 = vpack.c.bf16 %v3908, %v3904
      %v4148 = vpack.c.bf16 %v3910, %v3906
      %v4149 = vpack.c.bf16 %v3916, %v3912
      %v4150 = vpack.c.bf16 %v3918, %v3914
      %v4151 = vpack.c.bf16 %v3924, %v3920
      %v4152 = vpack.c.bf16 %v3926, %v3922
      %v4153 = vpack.c.bf16 %v3932, %v3928
      %v4154 = vpack.c.bf16 %v3934, %v3930
      %v4155 = vpack.c.bf16 %v3940, %v3936
      %v4156 = vpack.c.bf16 %v3942, %v3938
      %v4157 = vpack.c.bf16 %v3948, %v3944
      %v4158 = vpack.c.bf16 %v3950, %v3946
      %v4159 = vpack.c.bf16 %v3956, %v3952
      %v4160 = vpack.c.bf16 %v3958, %v3954
      %v4161 = vpack.c.bf16 %v3964, %v3960
      %v4162 = vpack.c.bf16 %v3966, %v3962
      %v4163 = vpack.c.bf16 %v3972, %v3968
      %v4164 = vpack.c.bf16 %v3974, %v3970
      %v4165 = vpack.c.bf16 %v3980, %v3976
      %v4166 = vpack.c.bf16 %v3982, %v3978
      %v4167 = vpack.c.bf16 %v3988, %v3984
      %v4168 = vpack.c.bf16 %v3990, %v3986
      %v4169 = vpack.c.bf16 %v3996, %v3992
      %v4170 = vpack.c.bf16 %v3998, %v3994
      %v4171 = vpack.c.bf16 %v4004, %v4000
      %v4172 = vpack.c.bf16 %v4006, %v4002
      %v4173 = vpack.c.bf16 %v4012, %v4008
      %v4174 = vpack.c.bf16 %v4014, %v4010
      %4175 = vmatpush.bf16.msra.mxu0 %v728
      %4176 = vmatpush.bf16.msra.mxu0 %v727
      %4177 = vmatpush.bf16.msra.mxu0 %v726
      %4178 = vmatpush.bf16.msra.mxu0 %v725
      %4179 = vmatpush.bf16.msra.mxu0 %v724
      %4180 = vmatpush.bf16.msra.mxu0 %v723
      %4181 = vmatpush.bf16.msra.mxu0 %v722
      %4182 = vmatpush.bf16.msra.mxu0 %v721
      %4183 = vmatmul.bf16.gmra.mxu0 %v4143
      %v4184 = vpop.f32.mrf.mxu0
      %v4185 = vadd.f32 0.0, %v4184
      %v4186 = vpop.f32.mrf.mxu0
      %v4187 = vadd.f32 0.0, %v4186
      %4188 = vmatmul.bf16.gmra.mxu0 %v4145
      %v4189 = vpop.f32.mrf.mxu0
      %v4190 = vadd.f32 0.0, %v4189
      %v4191 = vpop.f32.mrf.mxu0
      %v4192 = vadd.f32 0.0, %v4191
      %4193 = vmatmul.bf16.gmra.mxu0 %v4147
      %v4194 = vpop.f32.mrf.mxu0
      %v4195 = vadd.f32 0.0, %v4194
      %v4196 = vpop.f32.mrf.mxu0
      %v4197 = vadd.f32 0.0, %v4196
      %4198 = vmatmul.bf16.gmra.mxu0 %v4149
      %v4199 = vpop.f32.mrf.mxu0
      %v4200 = vadd.f32 0.0, %v4199
      %v4201 = vpop.f32.mrf.mxu0
      %v4202 = vadd.f32 0.0, %v4201
      %4203 = vmatmul.bf16.gmra.mxu0 %v4151
      %v4204 = vpop.f32.mrf.mxu0
      %v4205 = vadd.f32 0.0, %v4204
      %v4206 = vpop.f32.mrf.mxu0
      %v4207 = vadd.f32 0.0, %v4206
      %4208 = vmatmul.bf16.gmra.mxu0 %v4153
      %v4209 = vpop.f32.mrf.mxu0
      %v4210 = vadd.f32 0.0, %v4209
      %v4211 = vpop.f32.mrf.mxu0
      %v4212 = vadd.f32 0.0, %v4211
      %4213 = vmatmul.bf16.gmra.mxu0 %v4155
      %v4214 = vpop.f32.mrf.mxu0
      %v4215 = vadd.f32 0.0, %v4214
      %v4216 = vpop.f32.mrf.mxu0
      %v4217 = vadd.f32 0.0, %v4216
      %4218 = vmatmul.bf16.gmra.mxu0 %v4157
      %v4219 = vpop.f32.mrf.mxu0
      %v4220 = vadd.f32 0.0, %v4219
      %v4221 = vpop.f32.mrf.mxu0
      %v4222 = vadd.f32 0.0, %v4221
      %4223 = vmatmul.bf16.gmra.mxu0 %v4159
      %v4224 = vpop.f32.mrf.mxu0
      %v4225 = vadd.f32 0.0, %v4224
      %v4226 = vpop.f32.mrf.mxu0
      %v4227 = vadd.f32 0.0, %v4226
      %4228 = vmatmul.bf16.gmra.mxu0 %v4161
      %v4229 = vpop.f32.mrf.mxu0
      %v4230 = vadd.f32 0.0, %v4229
      %v4231 = vpop.f32.mrf.mxu0
      %v4232 = vadd.f32 0.0, %v4231
      %4233 = vmatmul.bf16.gmra.mxu0 %v4163
      %v4234 = vpop.f32.mrf.mxu0
      %v4235 = vadd.f32 0.0, %v4234
      %v4236 = vpop.f32.mrf.mxu0
      %v4237 = vadd.f32 0.0, %v4236
      %4238 = vmatmul.bf16.gmra.mxu0 %v4165
      %v4239 = vpop.f32.mrf.mxu0
      %v4240 = vadd.f32 0.0, %v4239
      %v4241 = vpop.f32.mrf.mxu0
      %v4242 = vadd.f32 0.0, %v4241
      %4243 = vmatmul.bf16.gmra.mxu0 %v4167
      %v4244 = vpop.f32.mrf.mxu0
      %v4245 = vadd.f32 0.0, %v4244
      %v4246 = vpop.f32.mrf.mxu0
      %v4247 = vadd.f32 0.0, %v4246
      %4248 = vmatmul.bf16.gmra.mxu0 %v4169
      %v4249 = vpop.f32.mrf.mxu0
      %v4250 = vadd.f32 0.0, %v4249
      %v4251 = vpop.f32.mrf.mxu0
      %v4252 = vadd.f32 0.0, %v4251
      %4253 = vmatmul.bf16.gmra.mxu0 %v4171
      %v4254 = vpop.f32.mrf.mxu0
      %v4255 = vadd.f32 0.0, %v4254
      %v4256 = vpop.f32.mrf.mxu0
      %v4257 = vadd.f32 0.0, %v4256
      %4258 = vmatmul.bf16.gmra.mxu0 %v4173
      %v4259 = vpop.f32.mrf.mxu0
      %v4260 = vadd.f32 0.0, %v4259
      %v4261 = vpop.f32.mrf.mxu0
      %v4262 = vadd.f32 0.0, %v4261
      %4263 = vdwg.mxu0
      %4264 = vmatpush.bf16.msra.mxu0 %v736
      %4265 = vmatpush.bf16.msra.mxu0 %v735
      %4266 = vmatpush.bf16.msra.mxu0 %v734
      %4267 = vmatpush.bf16.msra.mxu0 %v733
      %4268 = vmatpush.bf16.msra.mxu0 %v732
      %4269 = vmatpush.bf16.msra.mxu0 %v731
      %4270 = vmatpush.bf16.msra.mxu0 %v730
      %4271 = vmatpush.bf16.msra.mxu0 %v729
      %4272 = vmatmul.bf16.gmra.mxu0 %v4144
      %v4273 = vpop.f32.mrf.mxu0
      %v4274 = vadd.f32 %v4185, %v4273
      %v4275 = vpop.f32.mrf.mxu0
      %v4276 = vadd.f32 %v4187, %v4275
      %4277 = vmatmul.bf16.gmra.mxu0 %v4146
      %v4278 = vpop.f32.mrf.mxu0
      %v4279 = vadd.f32 %v4190, %v4278
      %v4280 = vpop.f32.mrf.mxu0
      %v4281 = vadd.f32 %v4192, %v4280
      %4282 = vmatmul.bf16.gmra.mxu0 %v4148
      %v4283 = vpop.f32.mrf.mxu0
      %v4284 = vadd.f32 %v4195, %v4283
      %v4285 = vpop.f32.mrf.mxu0
      %v4286 = vadd.f32 %v4197, %v4285
      %4287 = vmatmul.bf16.gmra.mxu0 %v4150
      %v4288 = vpop.f32.mrf.mxu0
      %v4289 = vadd.f32 %v4200, %v4288
      %v4290 = vpop.f32.mrf.mxu0
      %v4291 = vadd.f32 %v4202, %v4290
      %4292 = vmatmul.bf16.gmra.mxu0 %v4152
      %v4293 = vpop.f32.mrf.mxu0
      %v4294 = vadd.f32 %v4205, %v4293
      %v4295 = vpop.f32.mrf.mxu0
      %v4296 = vadd.f32 %v4207, %v4295
      %4297 = vmatmul.bf16.gmra.mxu0 %v4154
      %v4298 = vpop.f32.mrf.mxu0
      %v4299 = vadd.f32 %v4210, %v4298
      %v4300 = vpop.f32.mrf.mxu0
      %v4301 = vadd.f32 %v4212, %v4300
      %4302 = vmatmul.bf16.gmra.mxu0 %v4156
      %v4303 = vpop.f32.mrf.mxu0
      %v4304 = vadd.f32 %v4215, %v4303
      %v4305 = vpop.f32.mrf.mxu0
      %v4306 = vadd.f32 %v4217, %v4305
      %4307 = vmatmul.bf16.gmra.mxu0 %v4158
      %v4308 = vpop.f32.mrf.mxu0
      %v4309 = vadd.f32 %v4220, %v4308
      %v4310 = vpop.f32.mrf.mxu0
      %v4311 = vadd.f32 %v4222, %v4310
      %4312 = vmatmul.bf16.gmra.mxu0 %v4160
      %v4313 = vpop.f32.mrf.mxu0
      %v4314 = vadd.f32 %v4225, %v4313
      %v4315 = vpop.f32.mrf.mxu0
      %v4316 = vadd.f32 %v4227, %v4315
      %4317 = vmatmul.bf16.gmra.mxu0 %v4162
      %v4318 = vpop.f32.mrf.mxu0
      %v4319 = vadd.f32 %v4230, %v4318
      %v4320 = vpop.f32.mrf.mxu0
      %v4321 = vadd.f32 %v4232, %v4320
      %4322 = vmatmul.bf16.gmra.mxu0 %v4164
      %v4323 = vpop.f32.mrf.mxu0
      %v4324 = vadd.f32 %v4235, %v4323
      %v4325 = vpop.f32.mrf.mxu0
      %v4326 = vadd.f32 %v4237, %v4325
      %4327 = vmatmul.bf16.gmra.mxu0 %v4166
      %v4328 = vpop.f32.mrf.mxu0
      %v4329 = vadd.f32 %v4240, %v4328
      %v4330 = vpop.f32.mrf.mxu0
      %v4331 = vadd.f32 %v4242, %v4330
      %4332 = vmatmul.bf16.gmra.mxu0 %v4168
      %v4333 = vpop.f32.mrf.mxu0
      %v4334 = vadd.f32 %v4245, %v4333
      %v4335 = vpop.f32.mrf.mxu0
      %v4336 = vadd.f32 %v4247, %v4335
      %4337 = vmatmul.bf16.gmra.mxu0 %v4170
      %v4338 = vpop.f32.mrf.mxu0
      %v4339 = vadd.f32 %v4250, %v4338
      %v4340 = vpop.f32.mrf.mxu0
      %v4341 = vadd.f32 %v4252, %v4340
      %4342 = vmatmul.bf16.gmra.mxu0 %v4172
      %v4343 = vpop.f32.mrf.mxu0
      %v4344 = vadd.f32 %v4255, %v4343
      %v4345 = vpop.f32.mrf.mxu0
      %v4346 = vadd.f32 %v4257, %v4345
      %4347 = vmatmul.bf16.gmra.mxu0 %v4174
      %v4348 = vpop.f32.mrf.mxu0
      %v4349 = vadd.f32 %v4260, %v4348
      %v4350 = vpop.f32.mrf.mxu0
      %v4351 = vadd.f32 %v4262, %v4350
      %4352 = vdwg.mxu0
      %v4353 = vmul.f32 %v4274, %v4111
      %v4354 = vmul.f32 %v4276, %v4112
      %v4355 = vmul.f32 %v4279, %v4113
      %v4356 = vmul.f32 %v4281, %v4114
      %v4357 = vmul.f32 %v4284, %v4115
      %v4358 = vmul.f32 %v4286, %v4116
      %v4359 = vmul.f32 %v4289, %v4117
      %v4360 = vmul.f32 %v4291, %v4118
      %v4361 = vmul.f32 %v4294, %v4119
      %v4362 = vmul.f32 %v4296, %v4120
      %v4363 = vmul.f32 %v4299, %v4121
      %v4364 = vmul.f32 %v4301, %v4122
      %v4365 = vmul.f32 %v4304, %v4123
      %v4366 = vmul.f32 %v4306, %v4124
      %v4367 = vmul.f32 %v4309, %v4125
      %v4368 = vmul.f32 %v4311, %v4126
      %v4369 = vmul.f32 %v4314, %v4127
      %v4370 = vmul.f32 %v4316, %v4128
      %v4371 = vmul.f32 %v4319, %v4129
      %v4372 = vmul.f32 %v4321, %v4130
      %v4373 = vmul.f32 %v4324, %v4131
      %v4374 = vmul.f32 %v4326, %v4132
      %v4375 = vmul.f32 %v4329, %v4133
      %v4376 = vmul.f32 %v4331, %v4134
      %v4377 = vmul.f32 %v4334, %v4135
      %v4378 = vmul.f32 %v4336, %v4136
      %v4379 = vmul.f32 %v4339, %v4137
      %v4380 = vmul.f32 %v4341, %v4138
      %v4381 = vmul.f32 %v4344, %v4139
      %v4382 = vmul.f32 %v4346, %v4140
      %v4383 = vmul.f32 %v4349, %v4141
      %v4384 = vmul.f32 %v4351, %v4142
      %4417 = vrot.lane.b32.xlu0 %v2529, 32
      %v4418 = vpop.permute.xlu0 %4417
      %4419 = vrot.lane.b32.xlu0 %v2530, 32
      %v4420 = vpop.permute.xlu0 %4419
      %4421 = vrot.lane.b32.xlu0 %v2531, 32
      %v4422 = vpop.permute.xlu0 %4421
      %4423 = vrot.lane.b32.xlu0 %v2532, 32
      %v4424 = vpop.permute.xlu0 %4423
      %4425 = vrot.lane.b32.xlu0 %v2533, 32
      %v4426 = vpop.permute.xlu0 %4425
      %4427 = vrot.lane.b32.xlu0 %v2534, 32
      %v4428 = vpop.permute.xlu0 %4427
      %4429 = vrot.lane.b32.xlu0 %v2535, 32
      %v4430 = vpop.permute.xlu0 %4429
      %4431 = vrot.lane.b32.xlu0 %v2536, 32
      %v4432 = vpop.permute.xlu0 %4431
      %4433 = vrot.lane.b32.xlu0 %v2537, 32
      %v4434 = vpop.permute.xlu0 %4433
      %4435 = vrot.lane.b32.xlu0 %v2538, 32
      %v4436 = vpop.permute.xlu0 %4435
      %4437 = vrot.lane.b32.xlu0 %v2539, 32
      %v4438 = vpop.permute.xlu0 %4437
      %4439 = vrot.lane.b32.xlu0 %v2540, 32
      %v4440 = vpop.permute.xlu0 %4439
      %4441 = vrot.lane.b32.xlu0 %v2541, 32
      %v4442 = vpop.permute.xlu0 %4441
      %4443 = vrot.lane.b32.xlu0 %v2542, 32
      %v4444 = vpop.permute.xlu0 %4443
      %4445 = vrot.lane.b32.xlu0 %v2543, 32
      %v4446 = vpop.permute.xlu0 %4445
      %4447 = vrot.lane.b32.xlu0 %v2544, 32
      %v4448 = vpop.permute.xlu0 %4447
      %4449 = vrot.lane.b32.xlu0 %v2545, 32
      %v4450 = vpop.permute.xlu0 %4449
      %4451 = vrot.lane.b32.xlu0 %v2546, 32
      %v4452 = vpop.permute.xlu0 %4451
      %4453 = vrot.lane.b32.xlu0 %v2547, 32
      %v4454 = vpop.permute.xlu0 %4453
      %4455 = vrot.lane.b32.xlu0 %v2548, 32
      %v4456 = vpop.permute.xlu0 %4455
      %4457 = vrot.lane.b32.xlu0 %v2549, 32
      %v4458 = vpop.permute.xlu0 %4457
      %4459 = vrot.lane.b32.xlu0 %v2550, 32
      %v4460 = vpop.permute.xlu0 %4459
      %4461 = vrot.lane.b32.xlu0 %v2551, 32
      %v4462 = vpop.permute.xlu0 %4461
      %4463 = vrot.lane.b32.xlu0 %v2552, 32
      %v4464 = vpop.permute.xlu0 %4463
      %4465 = vrot.lane.b32.xlu0 %v2553, 32
      %v4466 = vpop.permute.xlu0 %4465
      %4467 = vrot.lane.b32.xlu0 %v2554, 32
      %v4468 = vpop.permute.xlu0 %4467
      %4469 = vrot.lane.b32.xlu0 %v2555, 32
      %v4470 = vpop.permute.xlu0 %4469
      %4471 = vrot.lane.b32.xlu0 %v2556, 32
      %v4472 = vpop.permute.xlu0 %4471
      %4473 = vrot.lane.b32.xlu0 %v2557, 32
      %v4474 = vpop.permute.xlu0 %4473
      %4475 = vrot.lane.b32.xlu0 %v2558, 32
      %v4476 = vpop.permute.xlu0 %4475
      %4477 = vrot.lane.b32.xlu0 %v2559, 32
      %v4478 = vpop.permute.xlu0 %4477
      %4479 = vrot.lane.b32.xlu0 %v2560, 32
      %v4480 = vpop.permute.xlu0 %4479
      %4545 = vrot.lane.b32.xlu0 %v3441, 64
      %v4546 = vpop.permute.xlu0 %4545
      %4547 = vrot.lane.b32.xlu0 %v3442, 64
      %v4548 = vpop.permute.xlu0 %4547
      %4549 = vrot.lane.b32.xlu0 %v3443, 64
      %v4550 = vpop.permute.xlu0 %4549
      %4551 = vrot.lane.b32.xlu0 %v3444, 64
      %v4552 = vpop.permute.xlu0 %4551
      %4553 = vrot.lane.b32.xlu0 %v3445, 64
      %v4554 = vpop.permute.xlu0 %4553
      %4555 = vrot.lane.b32.xlu0 %v3446, 64
      %v4556 = vpop.permute.xlu0 %4555
      %4557 = vrot.lane.b32.xlu0 %v3447, 64
      %v4558 = vpop.permute.xlu0 %4557
      %4559 = vrot.lane.b32.xlu0 %v3448, 64
      %v4560 = vpop.permute.xlu0 %4559
      %4561 = vrot.lane.b32.xlu0 %v3449, 64
      %v4562 = vpop.permute.xlu0 %4561
      %4563 = vrot.lane.b32.xlu0 %v3450, 64
      %v4564 = vpop.permute.xlu0 %4563
      %4565 = vrot.lane.b32.xlu0 %v3451, 64
      %v4566 = vpop.permute.xlu0 %4565
      %4567 = vrot.lane.b32.xlu0 %v3452, 64
      %v4568 = vpop.permute.xlu0 %4567
      %4569 = vrot.lane.b32.xlu0 %v3453, 64
      %v4570 = vpop.permute.xlu0 %4569
      %4571 = vrot.lane.b32.xlu0 %v3454, 64
      %v4572 = vpop.permute.xlu0 %4571
      %4573 = vrot.lane.b32.xlu0 %v3455, 64
      %v4574 = vpop.permute.xlu0 %4573
      %4575 = vrot.lane.b32.xlu0 %v3456, 64
      %v4576 = vpop.permute.xlu0 %4575
      %4577 = vrot.lane.b32.xlu0 %v3457, 64
      %v4578 = vpop.permute.xlu0 %4577
      %4579 = vrot.lane.b32.xlu0 %v3458, 64
      %v4580 = vpop.permute.xlu0 %4579
      %4581 = vrot.lane.b32.xlu0 %v3459, 64
      %v4582 = vpop.permute.xlu0 %4581
      %4583 = vrot.lane.b32.xlu0 %v3460, 64
      %v4584 = vpop.permute.xlu0 %4583
      %4585 = vrot.lane.b32.xlu0 %v3461, 64
      %v4586 = vpop.permute.xlu0 %4585
      %4587 = vrot.lane.b32.xlu0 %v3462, 64
      %v4588 = vpop.permute.xlu0 %4587
      %4589 = vrot.lane.b32.xlu0 %v3463, 64
      %v4590 = vpop.permute.xlu0 %4589
      %4591 = vrot.lane.b32.xlu0 %v3464, 64
      %v4592 = vpop.permute.xlu0 %4591
      %4593 = vrot.lane.b32.xlu0 %v3465, 64
      %v4594 = vpop.permute.xlu0 %4593
      %4595 = vrot.lane.b32.xlu0 %v3466, 64
      %v4596 = vpop.permute.xlu0 %4595
      %4597 = vrot.lane.b32.xlu0 %v3467, 64
      %v4598 = vpop.permute.xlu0 %4597
      %4599 = vrot.lane.b32.xlu0 %v3468, 64
      %v4600 = vpop.permute.xlu0 %4599
      %4601 = vrot.lane.b32.xlu0 %v3469, 64
      %v4602 = vpop.permute.xlu0 %4601
      %4603 = vrot.lane.b32.xlu0 %v3470, 64
      %v4604 = vpop.permute.xlu0 %4603
      %4605 = vrot.lane.b32.xlu0 %v3471, 64
      %v4606 = vpop.permute.xlu0 %4605
      %4607 = vrot.lane.b32.xlu0 %v3472, 64
      %v4608 = vpop.permute.xlu0 %4607
      %4673 = vrot.lane.b32.xlu0 %v4353, 96
      %v4674 = vpop.permute.xlu0 %4673
      %4675 = vrot.lane.b32.xlu0 %v4354, 96
      %v4676 = vpop.permute.xlu0 %4675
      %4677 = vrot.lane.b32.xlu0 %v4355, 96
      %v4678 = vpop.permute.xlu0 %4677
      %4679 = vrot.lane.b32.xlu0 %v4356, 96
      %v4680 = vpop.permute.xlu0 %4679
      %4681 = vrot.lane.b32.xlu0 %v4357, 96
      %v4682 = vpop.permute.xlu0 %4681
      %4683 = vrot.lane.b32.xlu0 %v4358, 96
      %v4684 = vpop.permute.xlu0 %4683
      %4685 = vrot.lane.b32.xlu0 %v4359, 96
      %v4686 = vpop.permute.xlu0 %4685
      %4687 = vrot.lane.b32.xlu0 %v4360, 96
      %v4688 = vpop.permute.xlu0 %4687
      %4689 = vrot.lane.b32.xlu0 %v4361, 96
      %v4690 = vpop.permute.xlu0 %4689
      %4691 = vrot.lane.b32.xlu0 %v4362, 96
      %v4692 = vpop.permute.xlu0 %4691
      %4693 = vrot.lane.b32.xlu0 %v4363, 96
      %v4694 = vpop.permute.xlu0 %4693
      %4695 = vrot.lane.b32.xlu0 %v4364, 96
      %v4696 = vpop.permute.xlu0 %4695
      %4697 = vrot.lane.b32.xlu0 %v4365, 96
      %v4698 = vpop.permute.xlu0 %4697
      %4699 = vrot.lane.b32.xlu0 %v4366, 96
      %v4700 = vpop.permute.xlu0 %4699
      %4701 = vrot.lane.b32.xlu0 %v4367, 96
      %v4702 = vpop.permute.xlu0 %4701
      %4703 = vrot.lane.b32.xlu0 %v4368, 96
      %v4704 = vpop.permute.xlu0 %4703
      %4705 = vrot.lane.b32.xlu0 %v4369, 96
      %v4706 = vpop.permute.xlu0 %4705
      %4707 = vrot.lane.b32.xlu0 %v4370, 96
      %v4708 = vpop.permute.xlu0 %4707
      %4709 = vrot.lane.b32.xlu0 %v4371, 96
      %v4710 = vpop.permute.xlu0 %4709
      %4711 = vrot.lane.b32.xlu0 %v4372, 96
      %v4712 = vpop.permute.xlu0 %4711
      %4713 = vrot.lane.b32.xlu0 %v4373, 96
      %v4714 = vpop.permute.xlu0 %4713
      %4715 = vrot.lane.b32.xlu0 %v4374, 96
      %v4716 = vpop.permute.xlu0 %4715
      %4717 = vrot.lane.b32.xlu0 %v4375, 96
      %v4718 = vpop.permute.xlu0 %4717
      %4719 = vrot.lane.b32.xlu0 %v4376, 96
      %v4720 = vpop.permute.xlu0 %4719
      %4721 = vrot.lane.b32.xlu0 %v4377, 96
      %v4722 = vpop.permute.xlu0 %4721
      %4723 = vrot.lane.b32.xlu0 %v4378, 96
      %v4724 = vpop.permute.xlu0 %4723
      %4725 = vrot.lane.b32.xlu0 %v4379, 96
      %v4726 = vpop.permute.xlu0 %4725
      %4727 = vrot.lane.b32.xlu0 %v4380, 96
      %v4728 = vpop.permute.xlu0 %4727
      %4729 = vrot.lane.b32.xlu0 %v4381, 96
      %v4730 = vpop.permute.xlu0 %4729
      %4731 = vrot.lane.b32.xlu0 %v4382, 96
      %v4732 = vpop.permute.xlu0 %4731
      %4733 = vrot.lane.b32.xlu0 %v4383, 96
      %v4734 = vpop.permute.xlu0 %4733
      %4735 = vrot.lane.b32.xlu0 %v4384, 96
      %v4736 = vpop.permute.xlu0 %4735
      %v4769 = vsel %vm402, %v1617, %v4418
      %v4770 = vsel %vm402, %v1618, %v4420
      %v4771 = vsel %vm402, %v1619, %v4422
      %v4772 = vsel %vm402, %v1620, %v4424
      %v4773 = vsel %vm402, %v1621, %v4426
      %v4774 = vsel %vm402, %v1622, %v4428
      %v4775 = vsel %vm402, %v1623, %v4430
      %v4776 = vsel %vm402, %v1624, %v4432
      %v4777 = vsel %vm402, %v1625, %v4434
      %v4778 = vsel %vm402, %v1626, %v4436
      %v4779 = vsel %vm402, %v1627, %v4438
      %v4780 = vsel %vm402, %v1628, %v4440
      %v4781 = vsel %vm402, %v1629, %v4442
      %v4782 = vsel %vm402, %v1630, %v4444
      %v4783 = vsel %vm402, %v1631, %v4446
      %v4784 = vsel %vm402, %v1632, %v4448
      %v4785 = vsel %vm402, %v1633, %v4450
      %v4786 = vsel %vm402, %v1634, %v4452
      %v4787 = vsel %vm402, %v1635, %v4454
      %v4788 = vsel %vm402, %v1636, %v4456
      %v4789 = vsel %vm402, %v1637, %v4458
      %v4790 = vsel %vm402, %v1638, %v4460
      %v4791 = vsel %vm402, %v1639, %v4462
      %v4792 = vsel %vm402, %v1640, %v4464
      %v4793 = vsel %vm402, %v1641, %v4466
      %v4794 = vsel %vm402, %v1642, %v4468
      %v4795 = vsel %vm402, %v1643, %v4470
      %v4796 = vsel %vm402, %v1644, %v4472
      %v4797 = vsel %vm402, %v1645, %v4474
      %v4798 = vsel %vm402, %v1646, %v4476
      %v4799 = vsel %vm402, %v1647, %v4478
      %v4800 = vsel %vm402, %v1648, %v4480
      %vm4801 = vcmask 523264
      %v4802 = vsel %vm4801, %v4769, %v4546
      %v4803 = vsel %vm4801, %v4770, %v4548
      %v4804 = vsel %vm4801, %v4771, %v4550
      %v4805 = vsel %vm4801, %v4772, %v4552
      %v4806 = vsel %vm4801, %v4773, %v4554
      %v4807 = vsel %vm4801, %v4774, %v4556
      %v4808 = vsel %vm4801, %v4775, %v4558
      %v4809 = vsel %vm4801, %v4776, %v4560
      %v4810 = vsel %vm4801, %v4777, %v4562
      %v4811 = vsel %vm4801, %v4778, %v4564
      %v4812 = vsel %vm4801, %v4779, %v4566
      %v4813 = vsel %vm4801, %v4780, %v4568
      %v4814 = vsel %vm4801, %v4781, %v4570
      %v4815 = vsel %vm4801, %v4782, %v4572
      %v4816 = vsel %vm4801, %v4783, %v4574
      %v4817 = vsel %vm4801, %v4784, %v4576
      %v4818 = vsel %vm4801, %v4785, %v4578
      %v4819 = vsel %vm4801, %v4786, %v4580
      %v4820 = vsel %vm4801, %v4787, %v4582
      %v4821 = vsel %vm4801, %v4788, %v4584
      %v4822 = vsel %vm4801, %v4789, %v4586
      %v4823 = vsel %vm4801, %v4790, %v4588
      %v4824 = vsel %vm4801, %v4791, %v4590
      %v4825 = vsel %vm4801, %v4792, %v4592
      %v4826 = vsel %vm4801, %v4793, %v4594
      %v4827 = vsel %vm4801, %v4794, %v4596
      %v4828 = vsel %vm4801, %v4795, %v4598
      %v4829 = vsel %vm4801, %v4796, %v4600
      %v4830 = vsel %vm4801, %v4797, %v4602
      %v4831 = vsel %vm4801, %v4798, %v4604
      %v4832 = vsel %vm4801, %v4799, %v4606
      %v4833 = vsel %vm4801, %v4800, %v4608
      %vm4834 = vcmask 785408
      %v4835 = vsel %vm4834, %v4802, %v4674
      %v4836 = vsel %vm4834, %v4803, %v4676
      %v4837 = vsel %vm4834, %v4804, %v4678
      %v4838 = vsel %vm4834, %v4805, %v4680
      %v4839 = vsel %vm4834, %v4806, %v4682
      %v4840 = vsel %vm4834, %v4807, %v4684
      %v4841 = vsel %vm4834, %v4808, %v4686
      %v4842 = vsel %vm4834, %v4809, %v4688
      %v4843 = vsel %vm4834, %v4810, %v4690
      %v4844 = vsel %vm4834, %v4811, %v4692
      %v4845 = vsel %vm4834, %v4812, %v4694
      %v4846 = vsel %vm4834, %v4813, %v4696
      %v4847 = vsel %vm4834, %v4814, %v4698
      %v4848 = vsel %vm4834, %v4815, %v4700
      %v4849 = vsel %vm4834, %v4816, %v4702
      %v4850 = vsel %vm4834, %v4817, %v4704
      %v4851 = vsel %vm4834, %v4818, %v4706
      %v4852 = vsel %vm4834, %v4819, %v4708
      %v4853 = vsel %vm4834, %v4820, %v4710
      %v4854 = vsel %vm4834, %v4821, %v4712
      %v4855 = vsel %vm4834, %v4822, %v4714
      %v4856 = vsel %vm4834, %v4823, %v4716
      %v4857 = vsel %vm4834, %v4824, %v4718
      %v4858 = vsel %vm4834, %v4825, %v4720
      %v4859 = vsel %vm4834, %v4826, %v4722
      %v4860 = vsel %vm4834, %v4827, %v4724
      %v4861 = vsel %vm4834, %v4828, %v4726
      %v4862 = vsel %vm4834, %v4829, %v4728
      %v4863 = vsel %vm4834, %v4830, %v4730
      %v4864 = vsel %vm4834, %v4831, %v4732
      %v4865 = vsel %vm4834, %v4832, %v4734
      %v4866 = vsel %vm4834, %v4833, %v4736
      %v4867 = vld [vmem:[%s3] sm:$0xff]
      %v4868 = vld [vmem:[%s3 + $0x8] sm:$0xff]
      %v4869 = vld [vmem:[%s3 + $0x10] sm:$0xff]
      %v4870 = vld [vmem:[%s3 + $0x18] sm:$0xff]
      %v4871 = vld [vmem:[%s3 + $0x20] sm:$0xff]
      %v4872 = vld [vmem:[%s3 + $0x28] sm:$0xff]
      %v4873 = vld [vmem:[%s3 + $0x30] sm:$0xff]
      %v4874 = vld [vmem:[%s3 + $0x38] sm:$0xff]
      %v4875 = vld [vmem:[%s3 + $0x40] sm:$0xff]
      %v4876 = vld [vmem:[%s3 + $0x48] sm:$0xff]
      %v4877 = vld [vmem:[%s3 + $0x50] sm:$0xff]
      %v4878 = vld [vmem:[%s3 + $0x58] sm:$0xff]
      %v4879 = vld [vmem:[%s3 + $0x60] sm:$0xff]
      %v4880 = vld [vmem:[%s3 + $0x68] sm:$0xff]
      %v4881 = vld [vmem:[%s3 + $0x70] sm:$0xff]
      %v4882 = vld [vmem:[%s3 + $0x78] sm:$0xff]
      %4883 = vmatpush.msra.mxu0 %v4882
      %4884 = vmatpush.msra.mxu0 %v4881
      %4885 = vmatpush.msra.mxu0 %v4880
      %4886 = vmatpush.msra.mxu0 %v4879
      %4887 = vmatpush.msra.mxu0 %v4878
      %4888 = vmatpush.msra.mxu0 %v4877
      %4889 = vmatpush.msra.mxu0 %v4876
      %4890 = vmatpush.msra.mxu0 %v4875
      %4891 = vmatpush.msra.mxu0 %v4874
      %4892 = vmatpush.msra.mxu0 %v4873
      %4893 = vmatpush.msra.mxu0 %v4872
      %4894 = vmatpush.msra.mxu0 %v4871
      %4895 = vmatpush.msra.mxu0 %v4870
      %4896 = vmatpush.msra.mxu0 %v4869
      %4897 = vmatpush.msra.mxu0 %v4868
      %4898 = vmatpush.msra.mxu0 %v4867
      %4899 = vmatmul.f32.gmra.mxu0 %v4835
      %v4900 = vpop.f32.mrf.mxu0
      %v4901 = vadd.f32 0.0, %v4900
      %4902 = vmatmul.f32.gmra.mxu0 %v4836
      %v4903 = vpop.f32.mrf.mxu0
      %v4904 = vadd.f32 0.0, %v4903
      %4905 = vmatmul.f32.gmra.mxu0 %v4837
      %v4906 = vpop.f32.mrf.mxu0
      %v4907 = vadd.f32 0.0, %v4906
      %4908 = vmatmul.f32.gmra.mxu0 %v4838
      %v4909 = vpop.f32.mrf.mxu0
      %v4910 = vadd.f32 0.0, %v4909
      %4911 = vmatmul.f32.gmra.mxu0 %v4839
      %v4912 = vpop.f32.mrf.mxu0
      %v4913 = vadd.f32 0.0, %v4912
      %4914 = vmatmul.f32.gmra.mxu0 %v4840
      %v4915 = vpop.f32.mrf.mxu0
      %v4916 = vadd.f32 0.0, %v4915
      %4917 = vmatmul.f32.gmra.mxu0 %v4841
      %v4918 = vpop.f32.mrf.mxu0
      %v4919 = vadd.f32 0.0, %v4918
      %4920 = vmatmul.f32.gmra.mxu0 %v4842
      %v4921 = vpop.f32.mrf.mxu0
      %v4922 = vadd.f32 0.0, %v4921
      %4923 = vmatmul.f32.gmra.mxu0 %v4843
      %v4924 = vpop.f32.mrf.mxu0
      %v4925 = vadd.f32 0.0, %v4924
      %4926 = vmatmul.f32.gmra.mxu0 %v4844
      %v4927 = vpop.f32.mrf.mxu0
      %v4928 = vadd.f32 0.0, %v4927
      %4929 = vmatmul.f32.gmra.mxu0 %v4845
      %v4930 = vpop.f32.mrf.mxu0
      %v4931 = vadd.f32 0.0, %v4930
      %4932 = vmatmul.f32.gmra.mxu0 %v4846
      %v4933 = vpop.f32.mrf.mxu0
      %v4934 = vadd.f32 0.0, %v4933
      %4935 = vmatmul.f32.gmra.mxu0 %v4847
      %v4936 = vpop.f32.mrf.mxu0
      %v4937 = vadd.f32 0.0, %v4936
      %4938 = vmatmul.f32.gmra.mxu0 %v4848
      %v4939 = vpop.f32.mrf.mxu0
      %v4940 = vadd.f32 0.0, %v4939
      %4941 = vmatmul.f32.gmra.mxu0 %v4849
      %v4942 = vpop.f32.mrf.mxu0
      %v4943 = vadd.f32 0.0, %v4942
      %4944 = vmatmul.f32.gmra.mxu0 %v4850
      %v4945 = vpop.f32.mrf.mxu0
      %v4946 = vadd.f32 0.0, %v4945
      %4947 = vmatmul.f32.gmra.mxu0 %v4851
      %v4948 = vpop.f32.mrf.mxu0
      %v4949 = vadd.f32 0.0, %v4948
      %4950 = vmatmul.f32.gmra.mxu0 %v4852
      %v4951 = vpop.f32.mrf.mxu0
      %v4952 = vadd.f32 0.0, %v4951
      %4953 = vmatmul.f32.gmra.mxu0 %v4853
      %v4954 = vpop.f32.mrf.mxu0
      %v4955 = vadd.f32 0.0, %v4954
      %4956 = vmatmul.f32.gmra.mxu0 %v4854
      %v4957 = vpop.f32.mrf.mxu0
      %v4958 = vadd.f32 0.0, %v4957
      %4959 = vmatmul.f32.gmra.mxu0 %v4855
      %v4960 = vpop.f32.mrf.mxu0
      %v4961 = vadd.f32 0.0, %v4960
      %4962 = vmatmul.f32.gmra.mxu0 %v4856
      %v4963 = vpop.f32.mrf.mxu0
      %v4964 = vadd.f32 0.0, %v4963
      %4965 = vmatmul.f32.gmra.mxu0 %v4857
      %v4966 = vpop.f32.mrf.mxu0
      %v4967 = vadd.f32 0.0, %v4966
      %4968 = vmatmul.f32.gmra.mxu0 %v4858
      %v4969 = vpop.f32.mrf.mxu0
      %v4970 = vadd.f32 0.0, %v4969
      %4971 = vmatmul.f32.gmra.mxu0 %v4859
      %v4972 = vpop.f32.mrf.mxu0
      %v4973 = vadd.f32 0.0, %v4972
      %4974 = vmatmul.f32.gmra.mxu0 %v4860
      %v4975 = vpop.f32.mrf.mxu0
      %v4976 = vadd.f32 0.0, %v4975
      %4977 = vmatmul.f32.gmra.mxu0 %v4861
      %v4978 = vpop.f32.mrf.mxu0
      %v4979 = vadd.f32 0.0, %v4978
      %4980 = vmatmul.f32.gmra.mxu0 %v4862
      %v4981 = vpop.f32.mrf.mxu0
      %v4982 = vadd.f32 0.0, %v4981
      %4983 = vmatmul.f32.gmra.mxu0 %v4863
      %v4984 = vpop.f32.mrf.mxu0
      %v4985 = vadd.f32 0.0, %v4984
      %4986 = vmatmul.f32.gmra.mxu0 %v4864
      %v4987 = vpop.f32.mrf.mxu0
      %v4988 = vadd.f32 0.0, %v4987
      %4989 = vmatmul.f32.gmra.mxu0 %v4865
      %v4990 = vpop.f32.mrf.mxu0
      %v4991 = vadd.f32 0.0, %v4990
      %4992 = vmatmul.f32.gmra.mxu0 %v4866
      %v4993 = vpop.f32.mrf.mxu0
      %v4994 = vadd.f32 0.0, %v4993
      %4995 = vdwg.mxu0
      %4996 = vxpose.xlu0.b32.start [1/16] %v4901, 128
      %4997 = vxpose.xlu0.b32.cont [2/16] %v4904, 128
      %4998 = vxpose.xlu0.b32.cont [3/16] %v4907, 128
      %4999 = vxpose.xlu0.b32.cont [4/16] %v4910, 128
      %5000 = vxpose.xlu0.b32.cont [5/16] %v4913, 128
      %5001 = vxpose.xlu0.b32.cont [6/16] %v4916, 128
      %5002 = vxpose.xlu0.b32.cont [7/16] %v4919, 128
      %5003 = vxpose.xlu0.b32.cont [8/16] %v4922, 128
      %5004 = vxpose.xlu0.b32.cont [9/16] %v4925, 128
      %5005 = vxpose.xlu0.b32.cont [10/16] %v4928, 128
      %5006 = vxpose.xlu0.b32.cont [11/16] %v4931, 128
      %5007 = vxpose.xlu0.b32.cont [12/16] %v4934, 128
      %5008 = vxpose.xlu0.b32.cont [13/16] %v4937, 128
      %5009 = vxpose.xlu0.b32.cont [14/16] %v4940, 128
      %5010 = vxpose.xlu0.b32.cont [15/16] %v4943, 128
      %5011 = vxpose.xlu0.b32.end [16/16] %v4946, 128
      %v5012 = vpop.trf.xlu0
      %v5013 = vpop.trf.xlu0
      %v5014 = vpop.trf.xlu0
      %v5015 = vpop.trf.xlu0
      %v5016 = vpop.trf.xlu0
      %v5017 = vpop.trf.xlu0
      %v5018 = vpop.trf.xlu0
      %v5019 = vpop.trf.xlu0
      %v5020 = vpop.trf.xlu0
      %v5021 = vpop.trf.xlu0
      %v5022 = vpop.trf.xlu0
      %v5023 = vpop.trf.xlu0
      %v5024 = vpop.trf.xlu0
      %v5025 = vpop.trf.xlu0
      %v5026 = vpop.trf.xlu0
      %v5027 = vpop.trf.xlu0
      %5028 = vxpose.xlu0.b32.start [1/16] %v4949, 128
      %5029 = vxpose.xlu0.b32.cont [2/16] %v4952, 128
      %5030 = vxpose.xlu0.b32.cont [3/16] %v4955, 128
      %5031 = vxpose.xlu0.b32.cont [4/16] %v4958, 128
      %5032 = vxpose.xlu0.b32.cont [5/16] %v4961, 128
      %5033 = vxpose.xlu0.b32.cont [6/16] %v4964, 128
      %5034 = vxpose.xlu0.b32.cont [7/16] %v4967, 128
      %5035 = vxpose.xlu0.b32.cont [8/16] %v4970, 128
      %5036 = vxpose.xlu0.b32.cont [9/16] %v4973, 128
      %5037 = vxpose.xlu0.b32.cont [10/16] %v4976, 128
      %5038 = vxpose.xlu0.b32.cont [11/16] %v4979, 128
      %5039 = vxpose.xlu0.b32.cont [12/16] %v4982, 128
      %5040 = vxpose.xlu0.b32.cont [13/16] %v4985, 128
      %5041 = vxpose.xlu0.b32.cont [14/16] %v4988, 128
      %5042 = vxpose.xlu0.b32.cont [15/16] %v4991, 128
      %5043 = vxpose.xlu0.b32.end [16/16] %v4994, 128
      %v5044 = vpop.trf.xlu0
      %v5045 = vpop.trf.xlu0
      %v5046 = vpop.trf.xlu0
      %v5047 = vpop.trf.xlu0
      %v5048 = vpop.trf.xlu0
      %v5049 = vpop.trf.xlu0
      %v5050 = vpop.trf.xlu0
      %v5051 = vpop.trf.xlu0
      %v5052 = vpop.trf.xlu0
      %v5053 = vpop.trf.xlu0
      %v5054 = vpop.trf.xlu0
      %v5055 = vpop.trf.xlu0
      %v5056 = vpop.trf.xlu0
      %v5057 = vpop.trf.xlu0
      %v5058 = vpop.trf.xlu0
      %v5059 = vpop.trf.xlu0
      %v5060 = vadd.f32 %v226, %v5012
      %v5061 = vadd.f32 %v227, %v5044
      %v5062 = vadd.f32 %v228, %v5013
      %v5063 = vadd.f32 %v229, %v5045
      %v5064 = vadd.f32 %v230, %v5014
      %v5065 = vadd.f32 %v231, %v5046
      %v5066 = vadd.f32 %v232, %v5015
      %v5067 = vadd.f32 %v233, %v5047
      %v5068 = vld [vmem:[%s4] sm:$0xff]
      %v5069 = vld [vmem:[%s4 + $0x8] sm:$0xff]
      %v5070 = vld [vmem:[%s4 + $0x10] sm:$0xff]
      %v5071 = vld [vmem:[%s4 + $0x18] sm:$0xff]
      %5073 = vset.pattern.permute.xlu0 0
      %5074 = vperm.xlu0 %5073, %v5068
      %v5075 = vpop.permute.xlu0 %5074
      %5078 = vset.pattern.permute.xlu0 0
      %5079 = vperm.xlu0 %5078, %v5069
      %v5080 = vpop.permute.xlu0 %5079
      %5083 = vset.pattern.permute.xlu0 0
      %5084 = vperm.xlu0 %5083, %v5070
      %v5085 = vpop.permute.xlu0 %5084
      %5088 = vset.pattern.permute.xlu0 0
      %5089 = vperm.xlu0 %5088, %v5071
      %v5090 = vpop.permute.xlu0 %5089
      %v5092 = vadd.f32 %v5060, %v5075
      %v5093 = vadd.f32 %v5061, %v5075
      %v5094 = vadd.f32 %v5062, %v5080
      %v5095 = vadd.f32 %v5063, %v5080
      %v5096 = vadd.f32 %v5064, %v5085
      %v5097 = vadd.f32 %v5065, %v5085
      %v5098 = vadd.f32 %v5066, %v5090
      %v5099 = vadd.f32 %v5067, %v5090
      %5100 = vst [vmem:[%s224] sm:$0xff] %v5092
      %5101 = vst [vmem:[%s224 + $0x8] sm:$0xff] %v5093
      %5102 = vst [vmem:[%s224 + $0x10] sm:$0xff] %v5094
      %5103 = vst [vmem:[%s224 + $0x18] sm:$0xff] %v5095
      %5104 = vst [vmem:[%s224 + $0x20] sm:$0xff] %v5096
      %5105 = vst [vmem:[%s224 + $0x28] sm:$0xff] %v5097
      %5106 = vst [vmem:[%s224 + $0x30] sm:$0xff] %v5098
      %5107 = vst [vmem:[%s224 + $0x38] sm:$0xff] %v5099
      %p5108 = scmp.lt.s32.totalorder %s16, 1
      %s5109 = scalar_select %p5108, %s16, 1
      %s5110 = smul.addr %s5109, 8
      %s5111 = smul.addr %s5110, 8
      %s5112 = scalar_lea.vmem %s5, %s5111
      // Predicated region
      $region41: #{mobile_mqa.1} parent=39 // pred_check
        %p5113 = pneg %p144
      $region42: #{mobile_mqa.1} parent=39 // pred_check_branch
        %5115 = sbr.rel (%p5113) target = $region44
      $region43: #{mobile_mqa.1} parent=39 // pred_region
        _
      $region44: #{mobile_mqa.1} parent=39 // pred_fallthru
        _
    $region40: #{mobile_mqa.1} parent=5 // pred_fallthru
      _
    %p5116 = scmp.le.s32.totalorder 2, %s11
    // Predicated region
    $region45: #{mobile_mqa.1} parent=5 // pred_check
      %p5117 = pneg %p5116
    $region46: #{mobile_mqa.1} parent=5 // pred_check_branch
      %5119 = sbr.rel (%p5117) target = $region48
    $region47: #{mobile_mqa.1} parent=5 // pred_region
      %s5120 = ssub.s32 %s11, 2
      // Predicated region
      $region49: #{mobile_mqa.1} parent=47 // pred_check
        %p5121 = pneg %p150
      $region50: #{mobile_mqa.1} parent=47 // pred_check_branch
        %5123 = sbr.rel (%p5121) target = $region52
      $region51: #{mobile_mqa.1} parent=47 // pred_region
        %p5124 = scmp.lt.s32.totalorder %s17, 1
        %s5125 = scalar_select %p5124, %s17, 1
        %s5126 = smul.addr %s5125, 8
        %s5127 = smul.addr %s5126, 8
        %s5128 = scalar_lea.vmem %s5, %s5127
      $region52: #{mobile_mqa.1} parent=47 // pred_fallthru
        _
    $region48: #{mobile_mqa.1} parent=5 // pred_fallthru
      _
  $region6: #{mobile_mqa.1} parent=0 // loop_footer
    %s15 = sadd.s32 1, %s11
  $region7: #{mobile_mqa.1} parent=0 // loop_footer_branch
    %10 = sbr.rel target = $region3
  $region8: #{mobile_mqa.1} parent=0 // loop_exit
    _

</llo_original>
